<compile_context>
chip_gen: v6e
topology: v6e:2x2x1
jax: 0.10.0
libtpu: 0.0.40
codegen_flags: <defaults>
</compile_context>

<pallas_src>
import functools

import jax
import jax.numpy as jnp
from jax import lax
from jax.experimental import pallas as pl
from jax.experimental.pallas import tpu as pltpu

# MXU operand dtype (accumulation is always f32). Set to jnp.float32 for a
# bit-exact-vs-f32-reference path.
MATMUL_DTYPE = jnp.bfloat16

_LANE = 128


def _round_up(n, m):
    return ((n + m - 1) // m) * m


def _sublane_pack(dtype):
    # second-to-last-dim packing granularity: f32 -> 8, bf16 -> 16
    return 16 if jnp.dtype(dtype) == jnp.dtype(jnp.bfloat16) else 8


# ----------------------------- Pallas kernel ------------------------------ #

def make_fused_gru_fc_kernel(num_layers, T, B, H, matmul_dtype, unroll):
    """Build the fused GRU-stack + fc kernel.

    Ref order (inputs, outputs, scratch):
      x_ref                          (T*B, D_pad)   matmul_dtype
      per layer l: wi (Din,3H), wh (H,3H)  [matmul_dtype]
                   b_rzn (1,3H), b_hn (1,H)          [f32]
      fc_w (H, C_pad) [matmul_dtype], fc_b (1, C_pad) [f32]
      out_ref (B, C_pad)             f32
      seq_ref (T*B, H)               matmul_dtype VMEM scratch (inter-layer seq)
      gi_ref  (T*B, 3H)              f32 VMEM scratch (hoisted input projection)
    H, D_pad, C_pad are multiples of 128; B a multiple of the sublane pack;
    `unroll` divides T.
    """
    assert T % unroll == 0

    def kernel(*refs):
        x_ref = refs[0]
        lrefs = refs[1:1 + 4 * num_layers]
        fcw_ref = refs[1 + 4 * num_layers]
        fcb_ref = refs[2 + 4 * num_layers]
        out_ref = refs[3 + 4 * num_layers]
        seq_ref = refs[4 + 4 * num_layers]
        gi_ref = refs[5 + 4 * num_layers]

        h = jnp.zeros((B, H), jnp.float32)
        for layer in range(num_layers):
            wi_ref = lrefs[4 * layer]            # (Din, 3H) matmul_dtype
            wh_ref = lrefs[4 * layer + 1]        # (H, 3H)   matmul_dtype
            b_rzn_ref = lrefs[4 * layer + 2]     # (1, 3H)   f32 (r/z pre-summed)
            b_hn_ref = lrefs[4 * layer + 3]      # (1, H)    f32
            last_layer = layer == num_layers - 1

            # Input projection for ALL timesteps at once (no recurrent dep):
            # one big (T*B, Din) @ (Din, 3H) MXU matmul. Result goes to a VMEM
            # scratch so it does not live in vregs across the serial loop.
            x_in = x_ref[...] if layer == 0 else seq_ref[...]
            gi_ref[...] = (
                jnp.dot(x_in, wi_ref[...], preferred_element_type=jnp.float32)
                + b_rzn_ref[...])

            # Hoisted broadcast (JAX does not CSE broadcast_in_dim in loops).
            b_hn = jnp.broadcast_to(b_hn_ref[...], (B, H))

            def outer_step(tc, h, wh_ref=wh_ref, b_hn=b_hn,
                           last_layer=last_layer):
                base = pl.multiple_of(tc * (unroll * B), unroll * B)
                for u in range(unroll):           # small static unroll
                    off = pl.multiple_of(base + u * B, B)
                    gi = gi_ref[pl.ds(off, B), :]                   # (B, 3H)
                    gh = jnp.dot(h.astype(matmul_dtype), wh_ref[...],
                                 preferred_element_type=jnp.float32)
                    # sigmoid(x) = 0.5*tanh(0.5*x)+0.5 ; r/z fused in one tanh.
                    rz = 0.5 * jnp.tanh(0.5 * (gi[:, :2 * H] + gh[:, :2 * H])) + 0.5
                    r = rz[:, :H]
                    z = rz[:, H:]
                    n = jnp.tanh(gi[:, 2 * H:] + r * (gh[:, 2 * H:] + b_hn))
                    h = n + z * (h - n)
                    if not last_layer:
                        # Last layer only needs h_T; skip its useless stores.
                        seq_ref[pl.ds(off, B), :] = h.astype(matmul_dtype)
                return h

            h = lax.fori_loop(0, T // unroll, outer_step,
                              jnp.zeros((B, H), jnp.float32))

        # Fused fc head on the final hidden state (lane-dense (B, C_pad) store).
        out_ref[...] = (
            jnp.dot(h.astype(matmul_dtype), fcw_ref[...],
                    preferred_element_type=jnp.float32)
            + fcb_ref[...])

    return kernel


_VMEM = pl.BlockSpec(memory_space=pltpu.MemorySpace.VMEM)


# ------------------------------ Host wrappers ------------------------------ #

def init_params(key, input_size, hidden_size, num_layers, num_classes):
    """Deterministic synthetic parameters (uniform +-1/sqrt(H), like PyTorch)."""
    bound = 1.0 / jnp.sqrt(jnp.float32(hidden_size))
    params = {"gru": [], "fc": None}
    for layer in range(num_layers):
        d_in = input_size if layer == 0 else hidden_size
        key, k1, k2, k3, k4 = jax.random.split(key, 5)
        wi = jax.random.uniform(k1, (d_in, 3 * hidden_size), jnp.float32, -bound, bound)
        wh = jax.random.uniform(k2, (hidden_size, 3 * hidden_size), jnp.float32, -bound, bound)
        bi = jax.random.uniform(k3, (1, 3 * hidden_size), jnp.float32, -bound, bound)
        bh = jax.random.uniform(k4, (1, 3 * hidden_size), jnp.float32, -bound, bound)
        params["gru"].append((wi, wh, bi, bh))
    key, k1, k2 = jax.random.split(key, 3)
    w_fc = jax.random.uniform(k1, (hidden_size, num_classes), jnp.float32, -bound, bound)
    b_fc = jax.random.uniform(k2, (1, num_classes), jnp.float32, -bound, bound)
    params["fc"] = (w_fc, b_fc)
    return params


def prepare_params(params, matmul_dtype=MATMUL_DTYPE):
    """Pad / relayout logical params for the kernel.

    * hidden/class/input dims padded to 128 lanes; each gate starts on a
      128-lane boundary (weights laid out as [r | z | n] blocks of width H_pad).
    * r/z biases pre-summed (b_i + b_h); b_in folded into the combined bias,
      b_hn kept separate (it sits inside the r * (.) term).
    * matmul weights cast to `matmul_dtype` once, here (not per call).
    Zero padding keeps padded hidden lanes exactly 0 through the recurrence.
    """
    gru = params["gru"]
    w_fc, b_fc = params["fc"]
    H = gru[0][1].shape[0]
    C = w_fc.shape[1]
    Hp = _round_up(H, _LANE)
    Cp = _round_up(C, _LANE)

    layers = []
    for li, (wi, wh, bi, bh) in enumerate(gru):
        d_in = wi.shape[0]
        Dp = _round_up(d_in, _LANE) if li == 0 else Hp
        wi_p = jnp.zeros((Dp, 3 * Hp), jnp.float32)
        wh_p = jnp.zeros((Hp, 3 * Hp), jnp.float32)
        b_rzn = jnp.zeros((1, 3 * Hp), jnp.float32)
        for g in range(3):
            wi_p = wi_p.at[:d_in, g * Hp:g * Hp + H].set(wi[:, g * H:(g + 1) * H])
            wh_p = wh_p.at[:H, g * Hp:g * Hp + H].set(wh[:, g * H:(g + 1) * H])
        b_rzn = b_rzn.at[:, 0 * Hp:0 * Hp + H].set(bi[:, 0:H] + bh[:, 0:H])
        b_rzn = b_rzn.at[:, 1 * Hp:1 * Hp + H].set(bi[:, H:2 * H] + bh[:, H:2 * H])
        b_rzn = b_rzn.at[:, 2 * Hp:2 * Hp + H].set(bi[:, 2 * H:3 * H])
        b_hn = jnp.zeros((1, Hp), jnp.float32).at[:, :H].set(bh[:, 2 * H:3 * H])
        layers.append((wi_p.astype(matmul_dtype), wh_p.astype(matmul_dtype),
                       b_rzn, b_hn))

    w_fc_p = jnp.zeros((Hp, Cp), jnp.float32).at[:H, :C].set(w_fc).astype(matmul_dtype)
    b_fc_p = jnp.zeros((1, Cp), jnp.float32).at[:, :C].set(b_fc)
    return {"layers": layers, "fc": (w_fc_p, b_fc_p)}


@functools.partial(jax.jit, static_argnames=("num_classes",))
def rnn_forward(x, kparams, num_classes):
    """x: (B, T, input_size) batch_first, like the PyTorch module."""
    layers = kparams["layers"]
    fc_w, fc_b = kparams["fc"]

    Bsz, T, D = x.shape
    Dp = layers[0][0].shape[0]          # padded input feature dim
    Hp = layers[0][1].shape[0]          # padded hidden dim (multiple of 128)
    Cp = fc_w.shape[1]                  # padded class dim (multiple of 128)
    mm_dtype = fc_w.dtype
    sub = _sublane_pack(mm_dtype)
    Bp = _round_up(max(Bsz, sub), sub)  # 16 sublanes for bf16 seq scratch

    # time-major, pad batch (sublanes) and features (lanes), flatten (T, B) so
    # the per-layer input projection is a single (T*B, Dp) matmul.
    x_tm = jnp.transpose(x, (1, 0, 2)).astype(jnp.float32)
    x_pad = jnp.zeros((T, Bp, Dp), jnp.float32).at[:, :Bsz, :D].set(x_tm)
    x_flat = x_pad.reshape(T * Bp, Dp).astype(mm_dtype)

    flat_in = [x_flat]
    for lp in layers:
        flat_in.extend(lp)
    flat_in.extend([fc_w, fc_b])

    # small time-unroll factor that divides T
    unroll = 1
    for u in (4, 2):
        if T % u == 0:
            unroll = u
            break

    kernel = make_fused_gru_fc_kernel(len(layers), T, Bp, Hp, mm_dtype, unroll)

    # Advisory cost estimate so XLA schedules surrounding ops sensibly.
    flops = 2 * Bp * Hp * Cp
    d_in = Dp
    for _ in layers:
        flops += 2 * T * Bp * (d_in + Hp) * 3 * Hp
        d_in = Hp
    transcendentals = len(layers) * T * Bp * 3 * Hp
    in_bytes = sum(int(a.size) * a.dtype.itemsize for a in flat_in)
    out_bytes = Bp * Cp * 4

    mm_itemsize = jnp.dtype(mm_dtype).itemsize
    scratch_bytes = T * Bp * Hp * mm_itemsize + T * Bp * 3 * Hp * 4
    vmem_limit = int(min(64 * 1024 * 1024,
                         max(16 * 1024 * 1024,
                             2 * (in_bytes + out_bytes + scratch_bytes))))

    out_pad = pl.pallas_call(
        kernel,
        out_shape=jax.ShapeDtypeStruct((Bp, Cp), jnp.float32),
        in_specs=[_VMEM] * len(flat_in),
        out_specs=_VMEM,
        scratch_shapes=[
            pltpu.VMEM((T * Bp, Hp), mm_dtype),        # inter-layer sequence
            pltpu.VMEM((T * Bp, 3 * Hp), jnp.float32),  # hoisted input proj
        ],
        compiler_params=pltpu.CompilerParams(vmem_limit_bytes=vmem_limit),
        cost_estimate=pl.CostEstimate(
            flops=int(flops),
            transcendentals=int(transcendentals),
            bytes_accessed=int(in_bytes + out_bytes),
        ),
    )(*flat_in)

    return out_pad[:Bsz, :num_classes]


# Pure-JAX reference (unpadded). matmul_dtype lets us emulate the kernel's
# bf16-operand / f32-accumulate matmuls for a tight equivalence check.
def rnn_forward_ref(x, gru_params, fc_params, matmul_dtype=jnp.float32):
    h_seq = jnp.transpose(x, (1, 0, 2)).astype(jnp.float32)
    for (wi, wh, bi, bh) in gru_params:
        _, B_, _ = h_seq.shape
        H = wh.shape[0]
        wi_c = wi.astype(matmul_dtype)
        wh_c = wh.astype(matmul_dtype)

        def step(h, x_t, wi_c=wi_c, wh_c=wh_c, bi=bi, bh=bh, H=H):
            gi = jnp.dot(x_t.astype(matmul_dtype), wi_c,
                         preferred_element_type=jnp.float32) + bi
            gh = jnp.dot(h.astype(matmul_dtype), wh_c,
                         preferred_element_type=jnp.float32) + bh
            r = jax.nn.sigmoid(gi[:, :H] + gh[:, :H])
            z = jax.nn.sigmoid(gi[:, H:2 * H] + gh[:, H:2 * H])
            n = jnp.tanh(gi[:, 2 * H:] + r * gh[:, 2 * H:])
            h_new = (1.0 - z) * n + z * h
            return h_new, h_new

        _, ys = lax.scan(step, jnp.zeros((B_, H), jnp.float32), h_seq)
        h_seq = ys
    w_fc, b_fc = fc_params
    return jnp.dot(h_seq[-1].astype(matmul_dtype), w_fc.astype(matmul_dtype),
                   preferred_element_type=jnp.float32) + b_fc


if __name__ == "__main__":
    # Small shapes consistent with the module: batch=2, seq=8, input=16,
    # hidden=32, layers=2, classes=10.
    # TODO(synk): the PyTorch forward's host-side print of device/sizes has no
    #             kernel equivalent and is intentionally omitted.
    B, T, INPUT, HIDDEN, LAYERS, CLASSES = 2, 8, 16, 32, 2, 10

    key = jax.random.PRNGKey(0)
    key, kx = jax.random.split(key)
    x = jax.random.normal(kx, (B, T, INPUT), jnp.float32)

    params = init_params(key, INPUT, HIDDEN, LAYERS, CLASSES)
    kparams = prepare_params(params, matmul_dtype=MATMUL_DTYPE)

    out = rnn_forward(x, kparams, CLASSES)
    out = jax.block_until_ready(out)
    assert out.shape == (B, CLASSES), out.shape

    # 1) Tight check vs a reference using the SAME matmul precision -> proves
    #    the kernel (padding, fused layers, hoisted projection, fori_loop
    #    recurrence) is correct.
    ref_same = rnn_forward_ref(x, params["gru"], params["fc"],
                               matmul_dtype=MATMUL_DTYPE)
    assert jnp.allclose(out, ref_same, atol=5e-3, rtol=5e-3), (
        "mismatch vs same-precision JAX reference")

    # 2) Loose check vs the full-f32 reference (bf16 MXU operands -> ~1e-2 rel).
    ref_f32 = rnn_forward_ref(x, params["gru"], params["fc"],
                              matmul_dtype=jnp.float32)
    tol = 5e-2 if MATMUL_DTYPE == jnp.bfloat16 else 1e-5
    assert jnp.allclose(out, ref_f32, atol=tol, rtol=tol), (
        "mismatch vs f32 JAX reference")

    print("KERNEL_OK")
</pallas_src>

<mosaic_0001>
module attributes {stable_mosaic.version = 11 : i64} {
  func.func @kernel(%arg0: memref<128x128xbf16, #tpu.memory_space<vmem>>, %arg1: memref<128x384xbf16, #tpu.memory_space<vmem>>, %arg2: memref<128x384xbf16, #tpu.memory_space<vmem>>, %arg3: memref<1x384xf32, #tpu.memory_space<vmem>>, %arg4: memref<1x128xf32, #tpu.memory_space<vmem>>, %arg5: memref<128x384xbf16, #tpu.memory_space<vmem>>, %arg6: memref<128x384xbf16, #tpu.memory_space<vmem>>, %arg7: memref<1x384xf32, #tpu.memory_space<vmem>>, %arg8: memref<1x128xf32, #tpu.memory_space<vmem>>, %arg9: memref<128x128xbf16, #tpu.memory_space<vmem>>, %arg10: memref<1x128xf32, #tpu.memory_space<vmem>>, %arg11: memref<16x128xf32, #tpu.memory_space<vmem>>, %arg12: memref<128x128xbf16, #tpu.memory_space<vmem>>, %arg13: memref<128x384xf32, #tpu.memory_space<vmem>>) attributes {dimension_semantics = [], scalar_prefetch = 0 : i64, scratch_operands = 2 : i64, tpu.core_type = #tpu.core_type<tc>} {
    %c0 = arith.constant 0 : index
    %c0_0 = arith.constant 0 : index
    %0 = vector.load %arg0[%c0, %c0_0] : memref<128x128xbf16, #tpu.memory_space<vmem>>, vector<128x128xbf16>
    %c0_1 = arith.constant 0 : index
    %c0_2 = arith.constant 0 : index
    %1 = vector.load %arg1[%c0_1, %c0_2] : memref<128x384xbf16, #tpu.memory_space<vmem>>, vector<128x384xbf16>
    %cst = arith.constant dense<0.000000e+00> : vector<128x384xf32>
    %2 = tpu.matmul %0, %1, %cst {dimension_numbers = #tpu.dot_dimension_numbers<[1], [0], [0], [1], [0, 0, 1, 1], [], []>} : vector<128x128xbf16>, vector<128x384xbf16>, vector<128x384xf32> -> vector<128x384xf32>
    %c0_3 = arith.constant 0 : index
    %c0_4 = arith.constant 0 : index
    %3 = vector.load %arg3[%c0_3, %c0_4] : memref<1x384xf32, #tpu.memory_space<vmem>>, vector<1x384xf32>
    %4 = vector.broadcast %3 : vector<1x384xf32> to vector<128x384xf32>
    %5 = arith.addf %2, %4 : vector<128x384xf32>
    %c0_5 = arith.constant 0 : index
    %c0_6 = arith.constant 0 : index
    %6 = vector.load %arg13[%c0_5, %c0_6] : memref<128x384xf32, #tpu.memory_space<vmem>>, vector<128x384xf32>
    tpu.vector_store %arg13[%c0_5, %c0_6], %5 {strides = array<i32>} : memref<128x384xf32, #tpu.memory_space<vmem>>, vector<128x384xf32>,
    %c0_7 = arith.constant 0 : index
    %c0_8 = arith.constant 0 : index
    %7 = vector.load %arg4[%c0_7, %c0_8] : memref<1x128xf32, #tpu.memory_space<vmem>>, vector<1x128xf32>
    %8 = vector.shape_cast %7 : vector<1x128xf32> to vector<1x128xf32>
    %9 = vector.broadcast %8 : vector<1x128xf32> to vector<16x128xf32>
    %cst_9 = arith.constant 0.000000e+00 : f32
    %10 = vector.broadcast %cst_9 : f32 to vector<16x128xf32>
    %c0_i32 = arith.constant 0 : i32
    %c2_i32 = arith.constant 2 : i32
    %11 = arith.addi %c0_i32, %c2_i32 : i32
    %c1_i32 = arith.constant 1 : i32
    %12 = scf.for %arg14 = %c0_i32 to %11 step %c1_i32 iter_args(%arg15 = %10) -> (vector<16x128xf32>)  : i32 {
      %c64_i32 = arith.constant 64 : i32
      %33 = arith.muli %arg14, %c64_i32 : i32
      %34 = tpu.assume_multiple %33, 64 : i32
      %c0_i32_34 = arith.constant 0 : i32
      %35 = arith.addi %34, %c0_i32_34 : i32
      %36 = tpu.assume_multiple %35, 16 : i32
      %37 = arith.index_cast %36 : i32 to index
      %c0_35 = arith.constant 0 : index
      %38 = vector.load %arg13[%37, %c0_35] : memref<128x384xf32, #tpu.memory_space<vmem>>, vector<16x384xf32>
      %39 = arith.truncf %arg15 : vector<16x128xf32> to vector<16x128xbf16>
      %c0_36 = arith.constant 0 : index
      %c0_37 = arith.constant 0 : index
      %40 = vector.load %arg2[%c0_36, %c0_37] : memref<128x384xbf16, #tpu.memory_space<vmem>>, vector<128x384xbf16>
      %cst_38 = arith.constant dense<0.000000e+00> : vector<16x384xf32>
      %41 = tpu.matmul %39, %40, %cst_38 {dimension_numbers = #tpu.dot_dimension_numbers<[1], [0], [0], [1], [0, 0, 1, 1], [], []>} : vector<16x128xbf16>, vector<128x384xbf16>, vector<16x384xf32> -> vector<16x384xf32>
      %42 = vector.extract_strided_slice %38 {offsets = [0, 0], sizes = [16, 256], strides = [1, 1]} : vector<16x384xf32> to vector<16x256xf32>
      %43 = vector.extract_strided_slice %41 {offsets = [0, 0], sizes = [16, 256], strides = [1, 1]} : vector<16x384xf32> to vector<16x256xf32>
      %44 = arith.addf %42, %43 : vector<16x256xf32>
      %cst_39 = arith.constant 5.000000e-01 : f32
      %45 = vector.broadcast %cst_39 : f32 to vector<16x256xf32>
      %46 = arith.mulf %45, %44 : vector<16x256xf32>
      %47 = math.tanh %46 : vector<16x256xf32>
      %cst_40 = arith.constant 5.000000e-01 : f32
      %48 = vector.broadcast %cst_40 : f32 to vector<16x256xf32>
      %49 = arith.mulf %48, %47 : vector<16x256xf32>
      %cst_41 = arith.constant 5.000000e-01 : f32
      %50 = vector.broadcast %cst_41 : f32 to vector<16x256xf32>
      %51 = arith.addf %49, %50 : vector<16x256xf32>
      %52 = vector.extract_strided_slice %51 {offsets = [0, 0], sizes = [16, 128], strides = [1, 1]} : vector<16x256xf32> to vector<16x128xf32>
      %53 = vector.extract_strided_slice %51 {offsets = [0, 128], sizes = [16, 128], strides = [1, 1]} : vector<16x256xf32> to vector<16x128xf32>
      %54 = vector.extract_strided_slice %38 {offsets = [0, 256], sizes = [16, 128], strides = [1, 1]} : vector<16x384xf32> to vector<16x128xf32>
      %55 = vector.extract_strided_slice %41 {offsets = [0, 256], sizes = [16, 128], strides = [1, 1]} : vector<16x384xf32> to vector<16x128xf32>
      %56 = arith.addf %55, %9 : vector<16x128xf32>
      %57 = arith.mulf %52, %56 : vector<16x128xf32>
      %58 = arith.addf %54, %57 : vector<16x128xf32>
      %59 = math.tanh %58 : vector<16x128xf32>
      %60 = arith.subf %arg15, %59 : vector<16x128xf32>
      %61 = arith.mulf %53, %60 : vector<16x128xf32>
      %62 = arith.addf %59, %61 : vector<16x128xf32>
      %63 = arith.truncf %62 : vector<16x128xf32> to vector<16x128xbf16>
      %64 = arith.index_cast %36 : i32 to index
      %c0_42 = arith.constant 0 : index
      %65 = vector.load %arg12[%64, %c0_42] : memref<128x128xbf16, #tpu.memory_space<vmem>>, vector<16x128xbf16>
      tpu.vector_store %arg12[%64, %c0_42], %63 {strides = array<i32>} : memref<128x128xbf16, #tpu.memory_space<vmem>>, vector<16x128xbf16>,
      %c16_i32 = arith.constant 16 : i32
      %66 = arith.addi %34, %c16_i32 : i32
      %67 = tpu.assume_multiple %66, 16 : i32
      %68 = arith.index_cast %67 : i32 to index
      %c0_43 = arith.constant 0 : index
      %69 = vector.load %arg13[%68, %c0_43] : memref<128x384xf32, #tpu.memory_space<vmem>>, vector<16x384xf32>
      %70 = arith.truncf %62 : vector<16x128xf32> to vector<16x128xbf16>
      %c0_44 = arith.constant 0 : index
      %c0_45 = arith.constant 0 : index
      %71 = vector.load %arg2[%c0_44, %c0_45] : memref<128x384xbf16, #tpu.memory_space<vmem>>, vector<128x384xbf16>
      %cst_46 = arith.constant dense<0.000000e+00> : vector<16x384xf32>
      %72 = tpu.matmul %70, %71, %cst_46 {dimension_numbers = #tpu.dot_dimension_numbers<[1], [0], [0], [1], [0, 0, 1, 1], [], []>} : vector<16x128xbf16>, vector<128x384xbf16>, vector<16x384xf32> -> vector<16x384xf32>
      %73 = vector.extract_strided_slice %69 {offsets = [0, 0], sizes = [16, 256], strides = [1, 1]} : vector<16x384xf32> to vector<16x256xf32>
      %74 = vector.extract_strided_slice %72 {offsets = [0, 0], sizes = [16, 256], strides = [1, 1]} : vector<16x384xf32> to vector<16x256xf32>
      %75 = arith.addf %73, %74 : vector<16x256xf32>
      %cst_47 = arith.constant 5.000000e-01 : f32
      %76 = vector.broadcast %cst_47 : f32 to vector<16x256xf32>
      %77 = arith.mulf %76, %75 : vector<16x256xf32>
      %78 = math.tanh %77 : vector<16x256xf32>
      %cst_48 = arith.constant 5.000000e-01 : f32
      %79 = vector.broadcast %cst_48 : f32 to vector<16x256xf32>
      %80 = arith.mulf %79, %78 : vector<16x256xf32>
      %cst_49 = arith.constant 5.000000e-01 : f32
      %81 = vector.broadcast %cst_49 : f32 to vector<16x256xf32>
      %82 = arith.addf %80, %81 : vector<16x256xf32>
      %83 = vector.extract_strided_slice %82 {offsets = [0, 0], sizes = [16, 128], strides = [1, 1]} : vector<16x256xf32> to vector<16x128xf32>
      %84 = vector.extract_strided_slice %82 {offsets = [0, 128], sizes = [16, 128], strides = [1, 1]} : vector<16x256xf32> to vector<16x128xf32>
      %85 = vector.extract_strided_slice %69 {offsets = [0, 256], sizes = [16, 128], strides = [1, 1]} : vector<16x384xf32> to vector<16x128xf32>
      %86 = vector.extract_strided_slice %72 {offsets = [0, 256], sizes = [16, 128], strides = [1, 1]} : vector<16x384xf32> to vector<16x128xf32>
      %87 = arith.addf %86, %9 : vector<16x128xf32>
      %88 = arith.mulf %83, %87 : vector<16x128xf32>
      %89 = arith.addf %85, %88 : vector<16x128xf32>
      %90 = math.tanh %89 : vector<16x128xf32>
      %91 = arith.subf %62, %90 : vector<16x128xf32>
      %92 = arith.mulf %84, %91 : vector<16x128xf32>
      %93 = arith.addf %90, %92 : vector<16x128xf32>
      %94 = arith.truncf %93 : vector<16x128xf32> to vector<16x128xbf16>
      %95 = arith.index_cast %67 : i32 to index
      %c0_50 = arith.constant 0 : index
      %96 = vector.load %arg12[%95, %c0_50] : memref<128x128xbf16, #tpu.memory_space<vmem>>, vector<16x128xbf16>
      tpu.vector_store %arg12[%95, %c0_50], %94 {strides = array<i32>} : memref<128x128xbf16, #tpu.memory_space<vmem>>, vector<16x128xbf16>,
      %c32_i32 = arith.constant 32 : i32
      %97 = arith.addi %34, %c32_i32 : i32
      %98 = tpu.assume_multiple %97, 16 : i32
      %99 = arith.index_cast %98 : i32 to index
      %c0_51 = arith.constant 0 : index
      %100 = vector.load %arg13[%99, %c0_51] : memref<128x384xf32, #tpu.memory_space<vmem>>, vector<16x384xf32>
      %101 = arith.truncf %93 : vector<16x128xf32> to vector<16x128xbf16>
      %c0_52 = arith.constant 0 : index
      %c0_53 = arith.constant 0 : index
      %102 = vector.load %arg2[%c0_52, %c0_53] : memref<128x384xbf16, #tpu.memory_space<vmem>>, vector<128x384xbf16>
      %cst_54 = arith.constant dense<0.000000e+00> : vector<16x384xf32>
      %103 = tpu.matmul %101, %102, %cst_54 {dimension_numbers = #tpu.dot_dimension_numbers<[1], [0], [0], [1], [0, 0, 1, 1], [], []>} : vector<16x128xbf16>, vector<128x384xbf16>, vector<16x384xf32> -> vector<16x384xf32>
      %104 = vector.extract_strided_slice %100 {offsets = [0, 0], sizes = [16, 256], strides = [1, 1]} : vector<16x384xf32> to vector<16x256xf32>
      %105 = vector.extract_strided_slice %103 {offsets = [0, 0], sizes = [16, 256], strides = [1, 1]} : vector<16x384xf32> to vector<16x256xf32>
      %106 = arith.addf %104, %105 : vector<16x256xf32>
      %cst_55 = arith.constant 5.000000e-01 : f32
      %107 = vector.broadcast %cst_55 : f32 to vector<16x256xf32>
      %108 = arith.mulf %107, %106 : vector<16x256xf32>
      %109 = math.tanh %108 : vector<16x256xf32>
      %cst_56 = arith.constant 5.000000e-01 : f32
      %110 = vector.broadcast %cst_56 : f32 to vector<16x256xf32>
      %111 = arith.mulf %110, %109 : vector<16x256xf32>
      %cst_57 = arith.constant 5.000000e-01 : f32
      %112 = vector.broadcast %cst_57 : f32 to vector<16x256xf32>
      %113 = arith.addf %111, %112 : vector<16x256xf32>
      %114 = vector.extract_strided_slice %113 {offsets = [0, 0], sizes = [16, 128], strides = [1, 1]} : vector<16x256xf32> to vector<16x128xf32>
      %115 = vector.extract_strided_slice %113 {offsets = [0, 128], sizes = [16, 128], strides = [1, 1]} : vector<16x256xf32> to vector<16x128xf32>
      %116 = vector.extract_strided_slice %100 {offsets = [0, 256], sizes = [16, 128], strides = [1, 1]} : vector<16x384xf32> to vector<16x128xf32>
      %117 = vector.extract_strided_slice %103 {offsets = [0, 256], sizes = [16, 128], strides = [1, 1]} : vector<16x384xf32> to vector<16x128xf32>
      %118 = arith.addf %117, %9 : vector<16x128xf32>
      %119 = arith.mulf %114, %118 : vector<16x128xf32>
      %120 = arith.addf %116, %119 : vector<16x128xf32>
      %121 = math.tanh %120 : vector<16x128xf32>
      %122 = arith.subf %93, %121 : vector<16x128xf32>
      %123 = arith.mulf %115, %122 : vector<16x128xf32>
      %124 = arith.addf %121, %123 : vector<16x128xf32>
      %125 = arith.truncf %124 : vector<16x128xf32> to vector<16x128xbf16>
      %126 = arith.index_cast %98 : i32 to index
      %c0_58 = arith.constant 0 : index
      %127 = vector.load %arg12[%126, %c0_58] : memref<128x128xbf16, #tpu.memory_space<vmem>>, vector<16x128xbf16>
      tpu.vector_store %arg12[%126, %c0_58], %125 {strides = array<i32>} : memref<128x128xbf16, #tpu.memory_space<vmem>>, vector<16x128xbf16>,
      %c48_i32 = arith.constant 48 : i32
      %128 = arith.addi %34, %c48_i32 : i32
      %129 = tpu.assume_multiple %128, 16 : i32
      %130 = arith.index_cast %129 : i32 to index
      %c0_59 = arith.constant 0 : index
      %131 = vector.load %arg13[%130, %c0_59] : memref<128x384xf32, #tpu.memory_space<vmem>>, vector<16x384xf32>
      %132 = arith.truncf %124 : vector<16x128xf32> to vector<16x128xbf16>
      %c0_60 = arith.constant 0 : index
      %c0_61 = arith.constant 0 : index
      %133 = vector.load %arg2[%c0_60, %c0_61] : memref<128x384xbf16, #tpu.memory_space<vmem>>, vector<128x384xbf16>
      %cst_62 = arith.constant dense<0.000000e+00> : vector<16x384xf32>
      %134 = tpu.matmul %132, %133, %cst_62 {dimension_numbers = #tpu.dot_dimension_numbers<[1], [0], [0], [1], [0, 0, 1, 1], [], []>} : vector<16x128xbf16>, vector<128x384xbf16>, vector<16x384xf32> -> vector<16x384xf32>
      %135 = vector.extract_strided_slice %131 {offsets = [0, 0], sizes = [16, 256], strides = [1, 1]} : vector<16x384xf32> to vector<16x256xf32>
      %136 = vector.extract_strided_slice %134 {offsets = [0, 0], sizes = [16, 256], strides = [1, 1]} : vector<16x384xf32> to vector<16x256xf32>
      %137 = arith.addf %135, %136 : vector<16x256xf32>
      %cst_63 = arith.constant 5.000000e-01 : f32
      %138 = vector.broadcast %cst_63 : f32 to vector<16x256xf32>
      %139 = arith.mulf %138, %137 : vector<16x256xf32>
      %140 = math.tanh %139 : vector<16x256xf32>
      %cst_64 = arith.constant 5.000000e-01 : f32
      %141 = vector.broadcast %cst_64 : f32 to vector<16x256xf32>
      %142 = arith.mulf %141, %140 : vector<16x256xf32>
      %cst_65 = arith.constant 5.000000e-01 : f32
      %143 = vector.broadcast %cst_65 : f32 to vector<16x256xf32>
      %144 = arith.addf %142, %143 : vector<16x256xf32>
      %145 = vector.extract_strided_slice %144 {offsets = [0, 0], sizes = [16, 128], strides = [1, 1]} : vector<16x256xf32> to vector<16x128xf32>
      %146 = vector.extract_strided_slice %144 {offsets = [0, 128], sizes = [16, 128], strides = [1, 1]} : vector<16x256xf32> to vector<16x128xf32>
      %147 = vector.extract_strided_slice %131 {offsets = [0, 256], sizes = [16, 128], strides = [1, 1]} : vector<16x384xf32> to vector<16x128xf32>
      %148 = vector.extract_strided_slice %134 {offsets = [0, 256], sizes = [16, 128], strides = [1, 1]} : vector<16x384xf32> to vector<16x128xf32>
      %149 = arith.addf %148, %9 : vector<16x128xf32>
      %150 = arith.mulf %145, %149 : vector<16x128xf32>
      %151 = arith.addf %147, %150 : vector<16x128xf32>
      %152 = math.tanh %151 : vector<16x128xf32>
      %153 = arith.subf %124, %152 : vector<16x128xf32>
      %154 = arith.mulf %146, %153 : vector<16x128xf32>
      %155 = arith.addf %152, %154 : vector<16x128xf32>
      %156 = arith.truncf %155 : vector<16x128xf32> to vector<16x128xbf16>
      %157 = arith.index_cast %129 : i32 to index
      %c0_66 = arith.constant 0 : index
      %158 = vector.load %arg12[%157, %c0_66] : memref<128x128xbf16, #tpu.memory_space<vmem>>, vector<16x128xbf16>
      tpu.vector_store %arg12[%157, %c0_66], %156 {strides = array<i32>} : memref<128x128xbf16, #tpu.memory_space<vmem>>, vector<16x128xbf16>,
      scf.yield %155 : vector<16x128xf32>
    }
    %c2_i32_10 = arith.constant 2 : i32
    %c0_11 = arith.constant 0 : index
    %c0_12 = arith.constant 0 : index
    %13 = vector.load %arg12[%c0_11, %c0_12] : memref<128x128xbf16, #tpu.memory_space<vmem>>, vector<128x128xbf16>
    %c0_13 = arith.constant 0 : index
    %c0_14 = arith.constant 0 : index
    %14 = vector.load %arg5[%c0_13, %c0_14] : memref<128x384xbf16, #tpu.memory_space<vmem>>, vector<128x384xbf16>
    %cst_15 = arith.constant dense<0.000000e+00> : vector<128x384xf32>
    %15 = tpu.matmul %13, %14, %cst_15 {dimension_numbers = #tpu.dot_dimension_numbers<[1], [0], [0], [1], [0, 0, 1, 1], [], []>} : vector<128x128xbf16>, vector<128x384xbf16>, vector<128x384xf32> -> vector<128x384xf32>
    %c0_16 = arith.constant 0 : index
    %c0_17 = arith.constant 0 : index
    %16 = vector.load %arg7[%c0_16, %c0_17] : memref<1x384xf32, #tpu.memory_space<vmem>>, vector<1x384xf32>
    %17 = vector.broadcast %16 : vector<1x384xf32> to vector<128x384xf32>
    %18 = arith.addf %15, %17 : vector<128x384xf32>
    %c0_18 = arith.constant 0 : index
    %c0_19 = arith.constant 0 : index
    %19 = vector.load %arg13[%c0_18, %c0_19] : memref<128x384xf32, #tpu.memory_space<vmem>>, vector<128x384xf32>
    tpu.vector_store %arg13[%c0_18, %c0_19], %18 {strides = array<i32>} : memref<128x384xf32, #tpu.memory_space<vmem>>, vector<128x384xf32>,
    %c0_20 = arith.constant 0 : index
    %c0_21 = arith.constant 0 : index
    %20 = vector.load %arg8[%c0_20, %c0_21] : memref<1x128xf32, #tpu.memory_space<vmem>>, vector<1x128xf32>
    %21 = vector.shape_cast %20 : vector<1x128xf32> to vector<1x128xf32>
    %22 = vector.broadcast %21 : vector<1x128xf32> to vector<16x128xf32>
    %cst_22 = arith.constant 0.000000e+00 : f32
    %23 = vector.broadcast %cst_22 : f32 to vector<16x128xf32>
    %c0_i32_23 = arith.constant 0 : i32
    %c2_i32_24 = arith.constant 2 : i32
    %24 = arith.addi %c0_i32_23, %c2_i32_24 : i32
    %c1_i32_25 = arith.constant 1 : i32
    %25 = scf.for %arg14 = %c0_i32_23 to %24 step %c1_i32_25 iter_args(%arg15 = %23) -> (vector<16x128xf32>)  : i32 {
      %c64_i32 = arith.constant 64 : i32
      %33 = arith.muli %arg14, %c64_i32 : i32
      %34 = tpu.assume_multiple %33, 64 : i32
      %c0_i32_34 = arith.constant 0 : i32
      %35 = arith.addi %34, %c0_i32_34 : i32
      %36 = tpu.assume_multiple %35, 16 : i32
      %37 = arith.index_cast %36 : i32 to index
      %c0_35 = arith.constant 0 : index
      %38 = vector.load %arg13[%37, %c0_35] : memref<128x384xf32, #tpu.memory_space<vmem>>, vector<16x384xf32>
      %39 = arith.truncf %arg15 : vector<16x128xf32> to vector<16x128xbf16>
      %c0_36 = arith.constant 0 : index
      %c0_37 = arith.constant 0 : index
      %40 = vector.load %arg6[%c0_36, %c0_37] : memref<128x384xbf16, #tpu.memory_space<vmem>>, vector<128x384xbf16>
      %cst_38 = arith.constant dense<0.000000e+00> : vector<16x384xf32>
      %41 = tpu.matmul %39, %40, %cst_38 {dimension_numbers = #tpu.dot_dimension_numbers<[1], [0], [0], [1], [0, 0, 1, 1], [], []>} : vector<16x128xbf16>, vector<128x384xbf16>, vector<16x384xf32> -> vector<16x384xf32>
      %42 = vector.extract_strided_slice %38 {offsets = [0, 0], sizes = [16, 256], strides = [1, 1]} : vector<16x384xf32> to vector<16x256xf32>
      %43 = vector.extract_strided_slice %41 {offsets = [0, 0], sizes = [16, 256], strides = [1, 1]} : vector<16x384xf32> to vector<16x256xf32>
      %44 = arith.addf %42, %43 : vector<16x256xf32>
      %cst_39 = arith.constant 5.000000e-01 : f32
      %45 = vector.broadcast %cst_39 : f32 to vector<16x256xf32>
      %46 = arith.mulf %45, %44 : vector<16x256xf32>
      %47 = math.tanh %46 : vector<16x256xf32>
      %cst_40 = arith.constant 5.000000e-01 : f32
      %48 = vector.broadcast %cst_40 : f32 to vector<16x256xf32>
      %49 = arith.mulf %48, %47 : vector<16x256xf32>
      %cst_41 = arith.constant 5.000000e-01 : f32
      %50 = vector.broadcast %cst_41 : f32 to vector<16x256xf32>
      %51 = arith.addf %49, %50 : vector<16x256xf32>
      %52 = vector.extract_strided_slice %51 {offsets = [0, 0], sizes = [16, 128], strides = [1, 1]} : vector<16x256xf32> to vector<16x128xf32>
      %53 = vector.extract_strided_slice %51 {offsets = [0, 128], sizes = [16, 128], strides = [1, 1]} : vector<16x256xf32> to vector<16x128xf32>
      %54 = vector.extract_strided_slice %38 {offsets = [0, 256], sizes = [16, 128], strides = [1, 1]} : vector<16x384xf32> to vector<16x128xf32>
      %55 = vector.extract_strided_slice %41 {offsets = [0, 256], sizes = [16, 128], strides = [1, 1]} : vector<16x384xf32> to vector<16x128xf32>
      %56 = arith.addf %55, %22 : vector<16x128xf32>
      %57 = arith.mulf %52, %56 : vector<16x128xf32>
      %58 = arith.addf %54, %57 : vector<16x128xf32>
      %59 = math.tanh %58 : vector<16x128xf32>
      %60 = arith.subf %arg15, %59 : vector<16x128xf32>
      %61 = arith.mulf %53, %60 : vector<16x128xf32>
      %62 = arith.addf %59, %61 : vector<16x128xf32>
      %c16_i32 = arith.constant 16 : i32
      %63 = arith.addi %34, %c16_i32 : i32
      %64 = tpu.assume_multiple %63, 16 : i32
      %65 = arith.index_cast %64 : i32 to index
      %c0_42 = arith.constant 0 : index
      %66 = vector.load %arg13[%65, %c0_42] : memref<128x384xf32, #tpu.memory_space<vmem>>, vector<16x384xf32>
      %67 = arith.truncf %62 : vector<16x128xf32> to vector<16x128xbf16>
      %c0_43 = arith.constant 0 : index
      %c0_44 = arith.constant 0 : index
      %68 = vector.load %arg6[%c0_43, %c0_44] : memref<128x384xbf16, #tpu.memory_space<vmem>>, vector<128x384xbf16>
      %cst_45 = arith.constant dense<0.000000e+00> : vector<16x384xf32>
      %69 = tpu.matmul %67, %68, %cst_45 {dimension_numbers = #tpu.dot_dimension_numbers<[1], [0], [0], [1], [0, 0, 1, 1], [], []>} : vector<16x128xbf16>, vector<128x384xbf16>, vector<16x384xf32> -> vector<16x384xf32>
      %70 = vector.extract_strided_slice %66 {offsets = [0, 0], sizes = [16, 256], strides = [1, 1]} : vector<16x384xf32> to vector<16x256xf32>
      %71 = vector.extract_strided_slice %69 {offsets = [0, 0], sizes = [16, 256], strides = [1, 1]} : vector<16x384xf32> to vector<16x256xf32>
      %72 = arith.addf %70, %71 : vector<16x256xf32>
      %cst_46 = arith.constant 5.000000e-01 : f32
      %73 = vector.broadcast %cst_46 : f32 to vector<16x256xf32>
      %74 = arith.mulf %73, %72 : vector<16x256xf32>
      %75 = math.tanh %74 : vector<16x256xf32>
      %cst_47 = arith.constant 5.000000e-01 : f32
      %76 = vector.broadcast %cst_47 : f32 to vector<16x256xf32>
      %77 = arith.mulf %76, %75 : vector<16x256xf32>
      %cst_48 = arith.constant 5.000000e-01 : f32
      %78 = vector.broadcast %cst_48 : f32 to vector<16x256xf32>
      %79 = arith.addf %77, %78 : vector<16x256xf32>
      %80 = vector.extract_strided_slice %79 {offsets = [0, 0], sizes = [16, 128], strides = [1, 1]} : vector<16x256xf32> to vector<16x128xf32>
      %81 = vector.extract_strided_slice %79 {offsets = [0, 128], sizes = [16, 128], strides = [1, 1]} : vector<16x256xf32> to vector<16x128xf32>
      %82 = vector.extract_strided_slice %66 {offsets = [0, 256], sizes = [16, 128], strides = [1, 1]} : vector<16x384xf32> to vector<16x128xf32>
      %83 = vector.extract_strided_slice %69 {offsets = [0, 256], sizes = [16, 128], strides = [1, 1]} : vector<16x384xf32> to vector<16x128xf32>
      %84 = arith.addf %83, %22 : vector<16x128xf32>
      %85 = arith.mulf %80, %84 : vector<16x128xf32>
      %86 = arith.addf %82, %85 : vector<16x128xf32>
      %87 = math.tanh %86 : vector<16x128xf32>
      %88 = arith.subf %62, %87 : vector<16x128xf32>
      %89 = arith.mulf %81, %88 : vector<16x128xf32>
      %90 = arith.addf %87, %89 : vector<16x128xf32>
      %c32_i32 = arith.constant 32 : i32
      %91 = arith.addi %34, %c32_i32 : i32
      %92 = tpu.assume_multiple %91, 16 : i32
      %93 = arith.index_cast %92 : i32 to index
      %c0_49 = arith.constant 0 : index
      %94 = vector.load %arg13[%93, %c0_49] : memref<128x384xf32, #tpu.memory_space<vmem>>, vector<16x384xf32>
      %95 = arith.truncf %90 : vector<16x128xf32> to vector<16x128xbf16>
      %c0_50 = arith.constant 0 : index
      %c0_51 = arith.constant 0 : index
      %96 = vector.load %arg6[%c0_50, %c0_51] : memref<128x384xbf16, #tpu.memory_space<vmem>>, vector<128x384xbf16>
      %cst_52 = arith.constant dense<0.000000e+00> : vector<16x384xf32>
      %97 = tpu.matmul %95, %96, %cst_52 {dimension_numbers = #tpu.dot_dimension_numbers<[1], [0], [0], [1], [0, 0, 1, 1], [], []>} : vector<16x128xbf16>, vector<128x384xbf16>, vector<16x384xf32> -> vector<16x384xf32>
      %98 = vector.extract_strided_slice %94 {offsets = [0, 0], sizes = [16, 256], strides = [1, 1]} : vector<16x384xf32> to vector<16x256xf32>
      %99 = vector.extract_strided_slice %97 {offsets = [0, 0], sizes = [16, 256], strides = [1, 1]} : vector<16x384xf32> to vector<16x256xf32>
      %100 = arith.addf %98, %99 : vector<16x256xf32>
      %cst_53 = arith.constant 5.000000e-01 : f32
      %101 = vector.broadcast %cst_53 : f32 to vector<16x256xf32>
      %102 = arith.mulf %101, %100 : vector<16x256xf32>
      %103 = math.tanh %102 : vector<16x256xf32>
      %cst_54 = arith.constant 5.000000e-01 : f32
      %104 = vector.broadcast %cst_54 : f32 to vector<16x256xf32>
      %105 = arith.mulf %104, %103 : vector<16x256xf32>
      %cst_55 = arith.constant 5.000000e-01 : f32
      %106 = vector.broadcast %cst_55 : f32 to vector<16x256xf32>
      %107 = arith.addf %105, %106 : vector<16x256xf32>
      %108 = vector.extract_strided_slice %107 {offsets = [0, 0], sizes = [16, 128], strides = [1, 1]} : vector<16x256xf32> to vector<16x128xf32>
      %109 = vector.extract_strided_slice %107 {offsets = [0, 128], sizes = [16, 128], strides = [1, 1]} : vector<16x256xf32> to vector<16x128xf32>
      %110 = vector.extract_strided_slice %94 {offsets = [0, 256], sizes = [16, 128], strides = [1, 1]} : vector<16x384xf32> to vector<16x128xf32>
      %111 = vector.extract_strided_slice %97 {offsets = [0, 256], sizes = [16, 128], strides = [1, 1]} : vector<16x384xf32> to vector<16x128xf32>
      %112 = arith.addf %111, %22 : vector<16x128xf32>
      %113 = arith.mulf %108, %112 : vector<16x128xf32>
      %114 = arith.addf %110, %113 : vector<16x128xf32>
      %115 = math.tanh %114 : vector<16x128xf32>
      %116 = arith.subf %90, %115 : vector<16x128xf32>
      %117 = arith.mulf %109, %116 : vector<16x128xf32>
      %118 = arith.addf %115, %117 : vector<16x128xf32>
      %c48_i32 = arith.constant 48 : i32
      %119 = arith.addi %34, %c48_i32 : i32
      %120 = tpu.assume_multiple %119, 16 : i32
      %121 = arith.index_cast %120 : i32 to index
      %c0_56 = arith.constant 0 : index
      %122 = vector.load %arg13[%121, %c0_56] : memref<128x384xf32, #tpu.memory_space<vmem>>, vector<16x384xf32>
      %123 = arith.truncf %118 : vector<16x128xf32> to vector<16x128xbf16>
      %c0_57 = arith.constant 0 : index
      %c0_58 = arith.constant 0 : index
      %124 = vector.load %arg6[%c0_57, %c0_58] : memref<128x384xbf16, #tpu.memory_space<vmem>>, vector<128x384xbf16>
      %cst_59 = arith.constant dense<0.000000e+00> : vector<16x384xf32>
      %125 = tpu.matmul %123, %124, %cst_59 {dimension_numbers = #tpu.dot_dimension_numbers<[1], [0], [0], [1], [0, 0, 1, 1], [], []>} : vector<16x128xbf16>, vector<128x384xbf16>, vector<16x384xf32> -> vector<16x384xf32>
      %126 = vector.extract_strided_slice %122 {offsets = [0, 0], sizes = [16, 256], strides = [1, 1]} : vector<16x384xf32> to vector<16x256xf32>
      %127 = vector.extract_strided_slice %125 {offsets = [0, 0], sizes = [16, 256], strides = [1, 1]} : vector<16x384xf32> to vector<16x256xf32>
      %128 = arith.addf %126, %127 : vector<16x256xf32>
      %cst_60 = arith.constant 5.000000e-01 : f32
      %129 = vector.broadcast %cst_60 : f32 to vector<16x256xf32>
      %130 = arith.mulf %129, %128 : vector<16x256xf32>
      %131 = math.tanh %130 : vector<16x256xf32>
      %cst_61 = arith.constant 5.000000e-01 : f32
      %132 = vector.broadcast %cst_61 : f32 to vector<16x256xf32>
      %133 = arith.mulf %132, %131 : vector<16x256xf32>
      %cst_62 = arith.constant 5.000000e-01 : f32
      %134 = vector.broadcast %cst_62 : f32 to vector<16x256xf32>
      %135 = arith.addf %133, %134 : vector<16x256xf32>
      %136 = vector.extract_strided_slice %135 {offsets = [0, 0], sizes = [16, 128], strides = [1, 1]} : vector<16x256xf32> to vector<16x128xf32>
      %137 = vector.extract_strided_slice %135 {offsets = [0, 128], sizes = [16, 128], strides = [1, 1]} : vector<16x256xf32> to vector<16x128xf32>
      %138 = vector.extract_strided_slice %122 {offsets = [0, 256], sizes = [16, 128], strides = [1, 1]} : vector<16x384xf32> to vector<16x128xf32>
      %139 = vector.extract_strided_slice %125 {offsets = [0, 256], sizes = [16, 128], strides = [1, 1]} : vector<16x384xf32> to vector<16x128xf32>
      %140 = arith.addf %139, %22 : vector<16x128xf32>
      %141 = arith.mulf %136, %140 : vector<16x128xf32>
      %142 = arith.addf %138, %141 : vector<16x128xf32>
      %143 = math.tanh %142 : vector<16x128xf32>
      %144 = arith.subf %118, %143 : vector<16x128xf32>
      %145 = arith.mulf %137, %144 : vector<16x128xf32>
      %146 = arith.addf %143, %145 : vector<16x128xf32>
      scf.yield %146 : vector<16x128xf32>
    }
    %c2_i32_26 = arith.constant 2 : i32
    %26 = arith.truncf %25 : vector<16x128xf32> to vector<16x128xbf16>
    %c0_27 = arith.constant 0 : index
    %c0_28 = arith.constant 0 : index
    %27 = vector.load %arg9[%c0_27, %c0_28] : memref<128x128xbf16, #tpu.memory_space<vmem>>, vector<128x128xbf16>
    %cst_29 = arith.constant dense<0.000000e+00> : vector<16x128xf32>
    %28 = tpu.matmul %26, %27, %cst_29 {dimension_numbers = #tpu.dot_dimension_numbers<[1], [0], [0], [1], [0, 0, 1, 1], [], []>} : vector<16x128xbf16>, vector<128x128xbf16>, vector<16x128xf32> -> vector<16x128xf32>
    %c0_30 = arith.constant 0 : index
    %c0_31 = arith.constant 0 : index
    %29 = vector.load %arg10[%c0_30, %c0_31] : memref<1x128xf32, #tpu.memory_space<vmem>>, vector<1x128xf32>
    %30 = vector.broadcast %29 : vector<1x128xf32> to vector<16x128xf32>
    %31 = arith.addf %28, %30 : vector<16x128xf32>
    %c0_32 = arith.constant 0 : index
    %c0_33 = arith.constant 0 : index
    %32 = vector.load %arg11[%c0_32, %c0_33] : memref<16x128xf32, #tpu.memory_space<vmem>>, vector<16x128xf32>
    tpu.vector_store %arg11[%c0_32, %c0_33], %31 {strides = array<i32>} : memref<16x128xf32, #tpu.memory_space<vmem>>, vector<16x128xf32>,
    return
  }
}

</mosaic_0001>

<llo_original>
// kernel: rnn_forward.1
$region0: #{rnn_forward.1}
  #allocation0 [shape = 'u32[]', space=smem, size = 0x4, offset = 0x4, fixed_abs, tag = 'smem constant byte address 0x4 - core index']
  #allocation1 [shape = 'u32[144,128]{1,0:T(1,128)}', space=vmem, size = 0x12000, scoped, tag = 'internal scratch']
  #allocation2 [shape = 'bf16[128,128]{1,0:T(8,128)(2,1)}', space=vmem, size = 0x8000, scoped, tag = 'scratch operand']
  #allocation3 [shape = 'f32[128,384]{1,0:T(8,128)}', space=vmem, size = 0x30000, scoped, tag = 'scratch operand']
  %s0 = inlined_call_operand.vmem [shape: bf16[128,128], index: 0, kind: input, shape index: {}]
  %s1 = inlined_call_operand.hbm [shape: bf16[128,384], index: 1, kind: input, shape index: {}]
  %s2 = inlined_call_operand.hbm [shape: bf16[128,384], index: 2, kind: input, shape index: {}]
  %s3 = inlined_call_operand.vmem [shape: f32[1,384], index: 3, kind: input, shape index: {}]
  %s4 = inlined_call_operand.vmem [shape: f32[1,128], index: 4, kind: input, shape index: {}]
  %s5 = inlined_call_operand.hbm [shape: bf16[128,384], index: 5, kind: input, shape index: {}]
  %s6 = inlined_call_operand.hbm [shape: bf16[128,384], index: 6, kind: input, shape index: {}]
  %s7 = inlined_call_operand.vmem [shape: f32[1,384], index: 7, kind: input, shape index: {}]
  %s8 = inlined_call_operand.vmem [shape: f32[1,128], index: 8, kind: input, shape index: {}]
  %s9 = inlined_call_operand.vmem [shape: bf16[128,128], index: 9, kind: input, shape index: {}]
  %s10 = inlined_call_operand.vmem [shape: f32[1,128], index: 10, kind: input, shape index: {}]
  %s11 = inlined_call_operand.vmem [shape: f32[16,128], index: 11, kind: output, shape index: {}]
  %s12 = sld [smem:[#allocation0]]
  $region84: #{rnn_forward.1} parent=0
    _
  %s14 = ssub.s32 1, %s12
  %s15 = scalar_select 0, %s14, %s12
  $region1: #{rnn_forward.1} parent=0
    #allocation4 [shape = 'u8[98304]{0}', space=vmem, size = 0x18000, scoped, tag = 'input window, operand 1, single buffered']
    #allocation5 [shape = 's32[1]{0}', space=sflag, size = 0x4, scoped, tag = 'scoped memory for rnn_forward.1']
    #allocation6 [shape = 'u8[98304]{0}', space=vmem, size = 0x18000, scoped, tag = 'input window, operand 2, single buffered']
    #allocation7 [shape = 's32[1]{0}', space=sflag, size = 0x4, scoped, tag = 'scoped memory for rnn_forward.1']
    #allocation8 [shape = 'u8[98304]{0}', space=vmem, size = 0x18000, scoped, tag = 'input window, operand 5, single buffered']
    #allocation9 [shape = 'u8[98304]{0}', space=vmem, size = 0x18000, scoped, tag = 'input window, operand 6, single buffered']
    #allocation10 [shape = 's32[1]{0}', space=sflag, size = 0x4, scoped, tag = 'scoped memory for rnn_forward.1']
    %16 = vsyncpa [#allocation5], 0
    %17 = vsyncpa [#allocation7], 0
    %18 = vsyncpa [#allocation10], 0
    // Predicated region
    $region2: #{rnn_forward.1} parent=1 // pred_check
      _
    $region3: #{rnn_forward.1} parent=1 // pred_check_branch
      %20 = sbr.rel (0) target = $region5
    $region4: #{rnn_forward.1} parent=1 // pred_region
      _
    $region5: #{rnn_forward.1} parent=1 // pred_fallthru
      _
    // Predicated region
    $region6: #{rnn_forward.1} parent=1 // pred_check
      _
    $region7: #{rnn_forward.1} parent=1 // pred_check_branch
      %22 = sbr.rel (0) target = $region9
    $region8: #{rnn_forward.1} parent=1 // pred_region
      %s24 = ssub.s32 3072, 3072
      %25 = vsyncadd [#allocation5], %s24
      %s26 = sshll.u32 [#allocation4], 4
      %s27 = int_to_ptr.vmem [resolvable:$true] %s26
      %32 = dma.hbm_to_vmem [thread:$0]  %s1, 3072, %s27, [#allocation5], 192, 192, 12
    $region9: #{rnn_forward.1} parent=1 // pred_fallthru
      _
    // Predicated region
    $region10: #{rnn_forward.1} parent=1 // pred_check
      _
    $region11: #{rnn_forward.1} parent=1 // pred_check_branch
      %34 = sbr.rel (0) target = $region13
    $region12: #{rnn_forward.1} parent=1 // pred_region
      %s36 = ssub.s32 3072, 3072
      %37 = vsyncadd [#allocation7], %s36
      %s38 = sshll.u32 [#allocation6], 4
      %s39 = int_to_ptr.vmem [resolvable:$true] %s38
      %44 = dma.hbm_to_vmem [thread:$0]  %s2, 3072, %s39, [#allocation7], 192, 192, 12
    $region13: #{rnn_forward.1} parent=1 // pred_fallthru
      _
    // Predicated region
    $region14: #{rnn_forward.1} parent=1 // pred_check
      _
    $region15: #{rnn_forward.1} parent=1 // pred_check_branch
      %46 = sbr.rel (0) target = $region17
    $region16: #{rnn_forward.1} parent=1 // pred_region
      _
    $region17: #{rnn_forward.1} parent=1 // pred_fallthru
      _
    // Predicated region
    $region18: #{rnn_forward.1} parent=1 // pred_check
      _
    $region19: #{rnn_forward.1} parent=1 // pred_check_branch
      %48 = sbr.rel (0) target = $region21
    $region20: #{rnn_forward.1} parent=1 // pred_region
      _
    $region21: #{rnn_forward.1} parent=1 // pred_fallthru
      _
    // Predicated region
    $region22: #{rnn_forward.1} parent=1 // pred_check
      _
    $region23: #{rnn_forward.1} parent=1 // pred_check_branch
      %50 = sbr.rel (0) target = $region25
    $region24: #{rnn_forward.1} parent=1 // pred_region
      %s52 = ssub.s32 3072, 3072
      %53 = vsyncadd [#allocation7], %s52
      %s54 = sshll.u32 [#allocation8], 4
      %s55 = int_to_ptr.vmem [resolvable:$true] %s54
      %60 = dma.hbm_to_vmem [thread:$0]  %s5, 3072, %s55, [#allocation7], 192, 192, 12
    $region25: #{rnn_forward.1} parent=1 // pred_fallthru
      _
    // Predicated region
    $region26: #{rnn_forward.1} parent=1 // pred_check
      _
    $region27: #{rnn_forward.1} parent=1 // pred_check_branch
      %62 = sbr.rel (0) target = $region29
    $region28: #{rnn_forward.1} parent=1 // pred_region
      %s64 = ssub.s32 3072, 3072
      %65 = vsyncadd [#allocation10], %s64
      %s66 = sshll.u32 [#allocation9], 4
      %s67 = int_to_ptr.vmem [resolvable:$true] %s66
      %72 = dma.hbm_to_vmem [thread:$0]  %s6, 3072, %s67, [#allocation10], 192, 192, 12
    $region29: #{rnn_forward.1} parent=1 // pred_fallthru
      _
    // Predicated region
    $region30: #{rnn_forward.1} parent=1 // pred_check
      _
    $region31: #{rnn_forward.1} parent=1 // pred_check_branch
      %74 = sbr.rel (0) target = $region33
    $region32: #{rnn_forward.1} parent=1 // pred_region
      _
    $region33: #{rnn_forward.1} parent=1 // pred_fallthru
      _
    // Predicated region
    $region34: #{rnn_forward.1} parent=1 // pred_check
      _
    $region35: #{rnn_forward.1} parent=1 // pred_check_branch
      %76 = sbr.rel (0) target = $region37
    $region36: #{rnn_forward.1} parent=1 // pred_region
      _
    $region37: #{rnn_forward.1} parent=1 // pred_fallthru
      _
    // Predicated region
    $region38: #{rnn_forward.1} parent=1 // pred_check
      _
    $region39: #{rnn_forward.1} parent=1 // pred_check_branch
      %78 = sbr.rel (0) target = $region41
    $region40: #{rnn_forward.1} parent=1 // pred_region
      _
    $region41: #{rnn_forward.1} parent=1 // pred_fallthru
      _
    // Predicated region
    $region42: #{rnn_forward.1} parent=1 // pred_check
      _
    $region43: #{rnn_forward.1} parent=1 // pred_check_branch
      %80 = sbr.rel (0) target = $region45
    $region44: #{rnn_forward.1} parent=1 // pred_region
      _
    $region45: #{rnn_forward.1} parent=1 // pred_fallthru
      _
    // Predicated region
    $region46: #{rnn_forward.1} parent=1 // pred_check
      _
    $region47: #{rnn_forward.1} parent=1 // pred_check_branch
      %82 = sbr.rel (0) target = $region49
    $region48: #{rnn_forward.1} parent=1 // pred_region
      %83 = dma.done [#allocation5], 3072
    $region49: #{rnn_forward.1} parent=1 // pred_fallthru
      _
    // Predicated region
    $region50: #{rnn_forward.1} parent=1 // pred_check
      _
    $region51: #{rnn_forward.1} parent=1 // pred_check_branch
      %85 = sbr.rel (0) target = $region53
    $region52: #{rnn_forward.1} parent=1 // pred_region
      %86 = dma.done [#allocation7], 3072
    $region53: #{rnn_forward.1} parent=1 // pred_fallthru
      _
    // Predicated region
    $region54: #{rnn_forward.1} parent=1 // pred_check
      _
    $region55: #{rnn_forward.1} parent=1 // pred_check_branch
      %88 = sbr.rel (0) target = $region57
    $region56: #{rnn_forward.1} parent=1 // pred_region
      %89 = dma.done [#allocation7], 3072
    $region57: #{rnn_forward.1} parent=1 // pred_fallthru
      _
    // Predicated region
    $region58: #{rnn_forward.1} parent=1 // pred_check
      _
    $region59: #{rnn_forward.1} parent=1 // pred_check_branch
      %91 = sbr.rel (0) target = $region61
    $region60: #{rnn_forward.1} parent=1 // pred_region
      %92 = dma.done [#allocation10], 3072
    $region61: #{rnn_forward.1} parent=1 // pred_fallthru
      _
    %v94 = vld [vmem:[%s0] sm:$0xf]
    %v95 = vld [vmem:[%s0 + $0x4] sm:$0xf]
    %v96 = vld [vmem:[%s0 + $0x8] sm:$0xf]
    %v97 = vld [vmem:[%s0 + $0xc] sm:$0xf]
    %v98 = vld [vmem:[%s0 + $0x10] sm:$0xf]
    %v99 = vld [vmem:[%s0 + $0x14] sm:$0xf]
    %v100 = vld [vmem:[%s0 + $0x18] sm:$0xf]
    %v101 = vld [vmem:[%s0 + $0x1c] sm:$0xf]
    %v102 = vld [vmem:[%s0 + $0x20] sm:$0xf]
    %v103 = vld [vmem:[%s0 + $0x24] sm:$0xf]
    %v104 = vld [vmem:[%s0 + $0x28] sm:$0xf]
    %v105 = vld [vmem:[%s0 + $0x2c] sm:$0xf]
    %v106 = vld [vmem:[%s0 + $0x30] sm:$0xf]
    %v107 = vld [vmem:[%s0 + $0x34] sm:$0xf]
    %v108 = vld [vmem:[%s0 + $0x38] sm:$0xf]
    %v109 = vld [vmem:[%s0 + $0x3c] sm:$0xf]
    %v110 = vld [vmem:[#allocation4] sm:$0xff]
    %v111 = vld [vmem:[#allocation4 + $0x8] sm:$0xf]
    %v112 = vld [vmem:[#allocation4 + $0xc] sm:$0xff]
    %v113 = vld [vmem:[#allocation4 + $0x14] sm:$0xf]
    %v114 = vld [vmem:[#allocation4 + $0x18] sm:$0xff]
    %v115 = vld [vmem:[#allocation4 + $0x20] sm:$0xf]
    %v116 = vld [vmem:[#allocation4 + $0x24] sm:$0xff]
    %v117 = vld [vmem:[#allocation4 + $0x2c] sm:$0xf]
    %v118 = vld [vmem:[#allocation4 + $0x30] sm:$0xff]
    %v119 = vld [vmem:[#allocation4 + $0x38] sm:$0xf]
    %v120 = vld [vmem:[#allocation4 + $0x3c] sm:$0xff]
    %v121 = vld [vmem:[#allocation4 + $0x44] sm:$0xf]
    %v122 = vld [vmem:[#allocation4 + $0x48] sm:$0xff]
    %v123 = vld [vmem:[#allocation4 + $0x50] sm:$0xf]
    %v124 = vld [vmem:[#allocation4 + $0x54] sm:$0xff]
    %v125 = vld [vmem:[#allocation4 + $0x5c] sm:$0xf]
    %v126 = vld [vmem:[#allocation4 + $0x60] sm:$0xff]
    %v127 = vld [vmem:[#allocation4 + $0x68] sm:$0xf]
    %v128 = vld [vmem:[#allocation4 + $0x6c] sm:$0xff]
    %v129 = vld [vmem:[#allocation4 + $0x74] sm:$0xf]
    %v130 = vld [vmem:[#allocation4 + $0x78] sm:$0xff]
    %v131 = vld [vmem:[#allocation4 + $0x80] sm:$0xf]
    %v132 = vld [vmem:[#allocation4 + $0x84] sm:$0xff]
    %v133 = vld [vmem:[#allocation4 + $0x8c] sm:$0xf]
    %v134 = vld [vmem:[#allocation4 + $0x90] sm:$0xff]
    %v135 = vld [vmem:[#allocation4 + $0x98] sm:$0xf]
    %v136 = vld [vmem:[#allocation4 + $0x9c] sm:$0xff]
    %v137 = vld [vmem:[#allocation4 + $0xa4] sm:$0xf]
    %v138 = vld [vmem:[#allocation4 + $0xa8] sm:$0xff]
    %v139 = vld [vmem:[#allocation4 + $0xb0] sm:$0xf]
    %v140 = vld [vmem:[#allocation4 + $0xb4] sm:$0xff]
    %v141 = vld [vmem:[#allocation4 + $0xbc] sm:$0xf]
    %v142 = vld [vmem:[%s3] sm:$0x7]
    %v144 = vlaneseq
    %v145 = vshrl.u32 %v144, 7
    %v146 = vsub.s32 0, %v145
    %v147 = vrot.slane %v142, %v146
    %v148 = vlaneseq
    %v149 = vshrl.u32 %v148, 7
    %v150 = vsub.s32 1, %v149
    %v151 = vrot.slane %v142, %v150
    %v152 = vlaneseq
    %v153 = vshrl.u32 %v152, 7
    %v154 = vsub.s32 2, %v153
    %v155 = vrot.slane %v142, %v154
    %v175 = vunpack.c.l.b16 %v94
    %v176 = vunpack.c.l.b16 %v95
    %v177 = vunpack.c.l.b16 %v96
    %v178 = vunpack.c.l.b16 %v97
    %v179 = vunpack.c.l.b16 %v98
    %v180 = vunpack.c.l.b16 %v99
    %v181 = vunpack.c.l.b16 %v100
    %v182 = vunpack.c.l.b16 %v101
    %v183 = vunpack.c.l.b16 %v102
    %v184 = vunpack.c.l.b16 %v103
    %v185 = vunpack.c.l.b16 %v104
    %v186 = vunpack.c.l.b16 %v105
    %v187 = vunpack.c.l.b16 %v106
    %v188 = vunpack.c.l.b16 %v107
    %v189 = vunpack.c.l.b16 %v108
    %v190 = vunpack.c.l.b16 %v109
    %v191 = vpack.c.b16 %v176, %v175
    %v192 = vpack.c.b16 %v178, %v177
    %v193 = vpack.c.b16 %v180, %v179
    %v194 = vpack.c.b16 %v182, %v181
    %v195 = vpack.c.b16 %v184, %v183
    %v196 = vpack.c.b16 %v186, %v185
    %v197 = vpack.c.b16 %v188, %v187
    %v198 = vpack.c.b16 %v190, %v189
    %v239 = vunpack.c.l.b16 %v110
    %v240 = vunpack.c.h.b16 %v110
    %v241 = vunpack.c.l.b16 %v111
    %v242 = vunpack.c.l.b16 %v112
    %v243 = vunpack.c.h.b16 %v112
    %v244 = vunpack.c.l.b16 %v113
    %v245 = vunpack.c.l.b16 %v114
    %v246 = vunpack.c.h.b16 %v114
    %v247 = vunpack.c.l.b16 %v115
    %v248 = vunpack.c.l.b16 %v116
    %v249 = vunpack.c.h.b16 %v116
    %v250 = vunpack.c.l.b16 %v117
    %v251 = vunpack.c.l.b16 %v118
    %v252 = vunpack.c.h.b16 %v118
    %v253 = vunpack.c.l.b16 %v119
    %v254 = vunpack.c.l.b16 %v120
    %v255 = vunpack.c.h.b16 %v120
    %v256 = vunpack.c.l.b16 %v121
    %v257 = vunpack.c.l.b16 %v122
    %v258 = vunpack.c.h.b16 %v122
    %v259 = vunpack.c.l.b16 %v123
    %v260 = vunpack.c.l.b16 %v124
    %v261 = vunpack.c.h.b16 %v124
    %v262 = vunpack.c.l.b16 %v125
    %v263 = vunpack.c.l.b16 %v126
    %v264 = vunpack.c.h.b16 %v126
    %v265 = vunpack.c.l.b16 %v127
    %v266 = vunpack.c.l.b16 %v128
    %v267 = vunpack.c.h.b16 %v128
    %v268 = vunpack.c.l.b16 %v129
    %v269 = vunpack.c.l.b16 %v130
    %v270 = vunpack.c.h.b16 %v130
    %v271 = vunpack.c.l.b16 %v131
    %v272 = vunpack.c.l.b16 %v132
    %v273 = vunpack.c.h.b16 %v132
    %v274 = vunpack.c.l.b16 %v133
    %v275 = vunpack.c.l.b16 %v134
    %v276 = vunpack.c.h.b16 %v134
    %v277 = vunpack.c.l.b16 %v135
    %v278 = vunpack.c.l.b16 %v136
    %v279 = vunpack.c.h.b16 %v136
    %v280 = vunpack.c.l.b16 %v137
    %v281 = vunpack.c.l.b16 %v138
    %v282 = vunpack.c.h.b16 %v138
    %v283 = vunpack.c.l.b16 %v139
    %v284 = vunpack.c.l.b16 %v140
    %v285 = vunpack.c.h.b16 %v140
    %v286 = vunpack.c.l.b16 %v141
    %v287 = vpack.c.b16 %v242, %v239
    %v288 = vpack.c.b16 %v243, %v240
    %v289 = vpack.c.b16 %v244, %v241
    %v290 = vpack.c.b16 %v248, %v245
    %v291 = vpack.c.b16 %v249, %v246
    %v292 = vpack.c.b16 %v250, %v247
    %v293 = vpack.c.b16 %v254, %v251
    %v294 = vpack.c.b16 %v255, %v252
    %v295 = vpack.c.b16 %v256, %v253
    %v296 = vpack.c.b16 %v260, %v257
    %v297 = vpack.c.b16 %v261, %v258
    %v298 = vpack.c.b16 %v262, %v259
    %v299 = vpack.c.b16 %v266, %v263
    %v300 = vpack.c.b16 %v267, %v264
    %v301 = vpack.c.b16 %v268, %v265
    %v302 = vpack.c.b16 %v272, %v269
    %v303 = vpack.c.b16 %v273, %v270
    %v304 = vpack.c.b16 %v274, %v271
    %v305 = vpack.c.b16 %v278, %v275
    %v306 = vpack.c.b16 %v279, %v276
    %v307 = vpack.c.b16 %v280, %v277
    %v308 = vpack.c.b16 %v284, %v281
    %v309 = vpack.c.b16 %v285, %v282
    %v310 = vpack.c.b16 %v286, %v283
    %335 = vmatprep.subr.bf16.mxu0 %v309
    %336 = vmatpush1.bf16.msra.mxu0 %v308
    %337 = vmatprep.subr.bf16.mxu0 %v306
    %338 = vmatpush1.bf16.msra.mxu0 %v305
    %339 = vmatprep.subr.bf16.mxu0 %v303
    %340 = vmatpush1.bf16.msra.mxu0 %v302
    %341 = vmatprep.subr.bf16.mxu0 %v300
    %342 = vmatpush1.bf16.msra.mxu0 %v299
    %343 = vmatprep.subr.bf16.mxu0 %v297
    %344 = vmatpush1.bf16.msra.mxu0 %v296
    %345 = vmatprep.subr.bf16.mxu0 %v294
    %346 = vmatpush1.bf16.msra.mxu0 %v293
    %347 = vmatprep.subr.bf16.mxu0 %v291
    %348 = vmatpush1.bf16.msra.mxu0 %v290
    %349 = vmatprep.subr.bf16.mxu0 %v288
    %350 = vmatpush1.bf16.msra.mxu0 %v287
    %351 = vmatprep.subr.bf16.mxu0 0
    %352 = vmatpush2.bf16.msra.mxu0 0
    %353 = vmatprep.subr.bf16.mxu0 0
    %354 = vmatpush2.bf16.msra.mxu0 0
    %355 = vmatprep.subr.bf16.mxu0 0
    %356 = vmatpush2.bf16.msra.mxu0 0
    %357 = vmatprep.subr.bf16.mxu0 0
    %358 = vmatpush2.bf16.msra.mxu0 0
    %359 = vmatprep.subr.bf16.mxu0 0
    %360 = vmatpush2.bf16.msra.mxu0 0
    %361 = vmatprep.subr.bf16.mxu0 0
    %362 = vmatpush2.bf16.msra.mxu0 0
    %363 = vmatprep.subr.bf16.mxu0 0
    %364 = vmatpush2.bf16.msra.mxu0 0
    %365 = vmatprep.subr.bf16.mxu0 0
    %366 = vmatpush2.bf16.msra.mxu0 0
    %367 = vmatprep.mubr.bf16.mxu0 0
    %368 = vmatmul.mubr.bf16.gmra.mxu0 %v191
    %v369 = vpop.f32.mrf.mxu0
    %v370 = vadd.f32 %v147, %v369
    %v371 = vpop.f32.mrf.mxu0
    %v372 = vadd.f32 %v151, %v371
    %v373 = vpop.f32.mrf.mxu0
    %v374 = vadd.f32 %v147, %v373
    %v375 = vpop.f32.mrf.mxu0
    %v376 = vadd.f32 %v151, %v375
    %377 = vmatprep.mubr.bf16.mxu0 0
    %378 = vmatmul.mubr.bf16.gmra.mxu0 %v192
    %v379 = vpop.f32.mrf.mxu0
    %v380 = vadd.f32 %v147, %v379
    %v381 = vpop.f32.mrf.mxu0
    %v382 = vadd.f32 %v151, %v381
    %v383 = vpop.f32.mrf.mxu0
    %v384 = vadd.f32 %v147, %v383
    %v385 = vpop.f32.mrf.mxu0
    %v386 = vadd.f32 %v151, %v385
    %387 = vmatprep.mubr.bf16.mxu0 0
    %388 = vmatmul.mubr.bf16.gmra.mxu0 %v193
    %v389 = vpop.f32.mrf.mxu0
    %v390 = vadd.f32 %v147, %v389
    %v391 = vpop.f32.mrf.mxu0
    %v392 = vadd.f32 %v151, %v391
    %v393 = vpop.f32.mrf.mxu0
    %v394 = vadd.f32 %v147, %v393
    %v395 = vpop.f32.mrf.mxu0
    %v396 = vadd.f32 %v151, %v395
    %397 = vmatprep.mubr.bf16.mxu0 0
    %398 = vmatmul.mubr.bf16.gmra.mxu0 %v194
    %v399 = vpop.f32.mrf.mxu0
    %v400 = vadd.f32 %v147, %v399
    %v401 = vpop.f32.mrf.mxu0
    %v402 = vadd.f32 %v151, %v401
    %v403 = vpop.f32.mrf.mxu0
    %v404 = vadd.f32 %v147, %v403
    %v405 = vpop.f32.mrf.mxu0
    %v406 = vadd.f32 %v151, %v405
    %407 = vmatprep.mubr.bf16.mxu0 0
    %408 = vmatmul.mubr.bf16.gmra.mxu0 %v195
    %v409 = vpop.f32.mrf.mxu0
    %v410 = vadd.f32 %v147, %v409
    %v411 = vpop.f32.mrf.mxu0
    %v412 = vadd.f32 %v151, %v411
    %v413 = vpop.f32.mrf.mxu0
    %v414 = vadd.f32 %v147, %v413
    %v415 = vpop.f32.mrf.mxu0
    %v416 = vadd.f32 %v151, %v415
    %417 = vmatprep.mubr.bf16.mxu0 0
    %418 = vmatmul.mubr.bf16.gmra.mxu0 %v196
    %v419 = vpop.f32.mrf.mxu0
    %v420 = vadd.f32 %v147, %v419
    %v421 = vpop.f32.mrf.mxu0
    %v422 = vadd.f32 %v151, %v421
    %v423 = vpop.f32.mrf.mxu0
    %v424 = vadd.f32 %v147, %v423
    %v425 = vpop.f32.mrf.mxu0
    %v426 = vadd.f32 %v151, %v425
    %427 = vmatprep.mubr.bf16.mxu0 0
    %428 = vmatmul.mubr.bf16.gmra.mxu0 %v197
    %v429 = vpop.f32.mrf.mxu0
    %v430 = vadd.f32 %v147, %v429
    %v431 = vpop.f32.mrf.mxu0
    %v432 = vadd.f32 %v151, %v431
    %v433 = vpop.f32.mrf.mxu0
    %v434 = vadd.f32 %v147, %v433
    %v435 = vpop.f32.mrf.mxu0
    %v436 = vadd.f32 %v151, %v435
    %437 = vmatprep.mubr.bf16.mxu0 0
    %438 = vmatmul.mubr.bf16.gmra.mxu0 %v198
    %v439 = vpop.f32.mrf.mxu0
    %v440 = vadd.f32 %v147, %v439
    %v441 = vpop.f32.mrf.mxu0
    %v442 = vadd.f32 %v151, %v441
    %v443 = vpop.f32.mrf.mxu0
    %v444 = vadd.f32 %v147, %v443
    %v445 = vpop.f32.mrf.mxu0
    %v446 = vadd.f32 %v151, %v445
    %447 = vdwg.mxu0
    %448 = vmatprep.subr.bf16.mxu0 0
    %449 = vmatpush1.bf16.msra.mxu0 %v310
    %450 = vmatprep.subr.bf16.mxu0 0
    %451 = vmatpush1.bf16.msra.mxu0 %v307
    %452 = vmatprep.subr.bf16.mxu0 0
    %453 = vmatpush1.bf16.msra.mxu0 %v304
    %454 = vmatprep.subr.bf16.mxu0 0
    %455 = vmatpush1.bf16.msra.mxu0 %v301
    %456 = vmatprep.subr.bf16.mxu0 0
    %457 = vmatpush1.bf16.msra.mxu0 %v298
    %458 = vmatprep.subr.bf16.mxu0 0
    %459 = vmatpush1.bf16.msra.mxu0 %v295
    %460 = vmatprep.subr.bf16.mxu0 0
    %461 = vmatpush1.bf16.msra.mxu0 %v292
    %462 = vmatprep.subr.bf16.mxu0 0
    %463 = vmatpush1.bf16.msra.mxu0 %v289
    %464 = vmatprep.subr.bf16.mxu0 0
    %465 = vmatpush2.bf16.msra.mxu0 0
    %466 = vmatprep.subr.bf16.mxu0 0
    %467 = vmatpush2.bf16.msra.mxu0 0
    %468 = vmatprep.subr.bf16.mxu0 0
    %469 = vmatpush2.bf16.msra.mxu0 0
    %470 = vmatprep.subr.bf16.mxu0 0
    %471 = vmatpush2.bf16.msra.mxu0 0
    %472 = vmatprep.subr.bf16.mxu0 0
    %473 = vmatpush2.bf16.msra.mxu0 0
    %474 = vmatprep.subr.bf16.mxu0 0
    %475 = vmatpush2.bf16.msra.mxu0 0
    %476 = vmatprep.subr.bf16.mxu0 0
    %477 = vmatpush2.bf16.msra.mxu0 0
    %478 = vmatprep.subr.bf16.mxu0 0
    %479 = vmatpush2.bf16.msra.mxu0 0
    %480 = vmatprep.mubr.bf16.mxu0 0
    %481 = vmatmul.mubr.bf16.gmra.mxu0 %v191
    %v482 = vpop.f32.mrf.mxu0
    %v483 = vadd.f32 %v155, %v482
    %v484 = vpop.f32.mrf.mxu0
    %v485 = vpop.f32.mrf.mxu0
    %v486 = vadd.f32 %v155, %v485
    %v487 = vpop.f32.mrf.mxu0
    %488 = vmatprep.mubr.bf16.mxu0 0
    %489 = vmatmul.mubr.bf16.gmra.mxu0 %v192
    %v490 = vpop.f32.mrf.mxu0
    %v491 = vadd.f32 %v155, %v490
    %v492 = vpop.f32.mrf.mxu0
    %v493 = vpop.f32.mrf.mxu0
    %v494 = vadd.f32 %v155, %v493
    %v495 = vpop.f32.mrf.mxu0
    %496 = vmatprep.mubr.bf16.mxu0 0
    %497 = vmatmul.mubr.bf16.gmra.mxu0 %v193
    %v498 = vpop.f32.mrf.mxu0
    %v499 = vadd.f32 %v155, %v498
    %v500 = vpop.f32.mrf.mxu0
    %v501 = vpop.f32.mrf.mxu0
    %v502 = vadd.f32 %v155, %v501
    %v503 = vpop.f32.mrf.mxu0
    %504 = vmatprep.mubr.bf16.mxu0 0
    %505 = vmatmul.mubr.bf16.gmra.mxu0 %v194
    %v506 = vpop.f32.mrf.mxu0
    %v507 = vadd.f32 %v155, %v506
    %v508 = vpop.f32.mrf.mxu0
    %v509 = vpop.f32.mrf.mxu0
    %v510 = vadd.f32 %v155, %v509
    %v511 = vpop.f32.mrf.mxu0
    %512 = vmatprep.mubr.bf16.mxu0 0
    %513 = vmatmul.mubr.bf16.gmra.mxu0 %v195
    %v514 = vpop.f32.mrf.mxu0
    %v515 = vadd.f32 %v155, %v514
    %v516 = vpop.f32.mrf.mxu0
    %v517 = vpop.f32.mrf.mxu0
    %v518 = vadd.f32 %v155, %v517
    %v519 = vpop.f32.mrf.mxu0
    %520 = vmatprep.mubr.bf16.mxu0 0
    %521 = vmatmul.mubr.bf16.gmra.mxu0 %v196
    %v522 = vpop.f32.mrf.mxu0
    %v523 = vadd.f32 %v155, %v522
    %v524 = vpop.f32.mrf.mxu0
    %v525 = vpop.f32.mrf.mxu0
    %v526 = vadd.f32 %v155, %v525
    %v527 = vpop.f32.mrf.mxu0
    %528 = vmatprep.mubr.bf16.mxu0 0
    %529 = vmatmul.mubr.bf16.gmra.mxu0 %v197
    %v530 = vpop.f32.mrf.mxu0
    %v531 = vadd.f32 %v155, %v530
    %v532 = vpop.f32.mrf.mxu0
    %v533 = vpop.f32.mrf.mxu0
    %v534 = vadd.f32 %v155, %v533
    %v535 = vpop.f32.mrf.mxu0
    %536 = vmatprep.mubr.bf16.mxu0 0
    %537 = vmatmul.mubr.bf16.gmra.mxu0 %v198
    %v538 = vpop.f32.mrf.mxu0
    %v539 = vadd.f32 %v155, %v538
    %v540 = vpop.f32.mrf.mxu0
    %v541 = vpop.f32.mrf.mxu0
    %v542 = vadd.f32 %v155, %v541
    %v543 = vpop.f32.mrf.mxu0
    %544 = vdwg.mxu0
    %545 = vst [vmem:[#allocation3] sm:$0xff] %v370
    %546 = vst [vmem:[#allocation3 + $0x8] sm:$0xff] %v372
    %547 = vst [vmem:[#allocation3 + $0x10] sm:$0xff] %v483
    %548 = vst [vmem:[#allocation3 + $0x18] sm:$0xff] %v374
    %549 = vst [vmem:[#allocation3 + $0x20] sm:$0xff] %v376
    %550 = vst [vmem:[#allocation3 + $0x28] sm:$0xff] %v486
    %551 = vst [vmem:[#allocation3 + $0x30] sm:$0xff] %v380
    %552 = vst [vmem:[#allocation3 + $0x38] sm:$0xff] %v382
    %553 = vst [vmem:[#allocation3 + $0x40] sm:$0xff] %v491
    %554 = vst [vmem:[#allocation3 + $0x48] sm:$0xff] %v384
    %555 = vst [vmem:[#allocation3 + $0x50] sm:$0xff] %v386
    %556 = vst [vmem:[#allocation3 + $0x58] sm:$0xff] %v494
    %557 = vst [vmem:[#allocation3 + $0x60] sm:$0xff] %v390
    %558 = vst [vmem:[#allocation3 + $0x68] sm:$0xff] %v392
    %559 = vst [vmem:[#allocation3 + $0x70] sm:$0xff] %v499
    %560 = vst [vmem:[#allocation3 + $0x78] sm:$0xff] %v394
    %561 = vst [vmem:[#allocation3 + $0x80] sm:$0xff] %v396
    %562 = vst [vmem:[#allocation3 + $0x88] sm:$0xff] %v502
    %563 = vst [vmem:[#allocation3 + $0x90] sm:$0xff] %v400
    %564 = vst [vmem:[#allocation3 + $0x98] sm:$0xff] %v402
    %565 = vst [vmem:[#allocation3 + $0xa0] sm:$0xff] %v507
    %566 = vst [vmem:[#allocation3 + $0xa8] sm:$0xff] %v404
    %567 = vst [vmem:[#allocation3 + $0xb0] sm:$0xff] %v406
    %568 = vst [vmem:[#allocation3 + $0xb8] sm:$0xff] %v510
    %569 = vst [vmem:[#allocation3 + $0xc0] sm:$0xff] %v410
    %570 = vst [vmem:[#allocation3 + $0xc8] sm:$0xff] %v412
    %571 = vst [vmem:[#allocation3 + $0xd0] sm:$0xff] %v515
    %572 = vst [vmem:[#allocation3 + $0xd8] sm:$0xff] %v414
    %573 = vst [vmem:[#allocation3 + $0xe0] sm:$0xff] %v416
    %574 = vst [vmem:[#allocation3 + $0xe8] sm:$0xff] %v518
    %575 = vst [vmem:[#allocation3 + $0xf0] sm:$0xff] %v420
    %576 = vst [vmem:[#allocation3 + $0xf8] sm:$0xff] %v422
    %577 = vst [vmem:[#allocation3 + $0x100] sm:$0xff] %v523
    %578 = vst [vmem:[#allocation3 + $0x108] sm:$0xff] %v424
    %579 = vst [vmem:[#allocation3 + $0x110] sm:$0xff] %v426
    %580 = vst [vmem:[#allocation3 + $0x118] sm:$0xff] %v526
    %581 = vst [vmem:[#allocation3 + $0x120] sm:$0xff] %v430
    %582 = vst [vmem:[#allocation3 + $0x128] sm:$0xff] %v432
    %583 = vst [vmem:[#allocation3 + $0x130] sm:$0xff] %v531
    %584 = vst [vmem:[#allocation3 + $0x138] sm:$0xff] %v434
    %585 = vst [vmem:[#allocation3 + $0x140] sm:$0xff] %v436
    %586 = vst [vmem:[#allocation3 + $0x148] sm:$0xff] %v534
    %587 = vst [vmem:[#allocation3 + $0x150] sm:$0xff] %v440
    %588 = vst [vmem:[#allocation3 + $0x158] sm:$0xff] %v442
    %589 = vst [vmem:[#allocation3 + $0x160] sm:$0xff] %v539
    %590 = vst [vmem:[#allocation3 + $0x168] sm:$0xff] %v444
    %591 = vst [vmem:[#allocation3 + $0x170] sm:$0xff] %v446
    %592 = vst [vmem:[#allocation3 + $0x178] sm:$0xff] %v542
    %v593 = vld [vmem:[%s4] sm:$0x1]
    %v595 = vlaneseq
    %v596 = vshrl.u32 %v595, 7
    %v597 = vsub.s32 0, %v596
    %v598 = vrot.slane %v593, %v597
    loop: start=0, step=1, limit=2
    $region62: #{rnn_forward.1} parent=1 // loop_pre_header
      _
    $region63: #{rnn_forward.1} parent=1 // loop_header
      %s601 = sphi 0, %s605
      %p602 = scmp.ge.s32.totalorder %s601, 2
      %v606 = vphi 0.0, %v1803
      %v607 = vphi 0.0, %v1804
    $region64: #{rnn_forward.1} parent=1 // loop_header_branch
      %604 = sbr.rel (%p602) target = $region68
    $region65: #{rnn_forward.1} parent=1 // loop_body
      %s608 = smul.u32 %s601, 64
      %s609 = sshra.s32 %s608, 3
      %s610 = sand.u32 %s608, 7
      %s611 = smul.u32 %s609, 3
      %s612 = smul.addr %s611, 8
      %s613 = scalar_lea.vmem [#allocation3], %s612
      %v614 = vld [vmem:[%s613] sm:$0xff]
      %v615 = vld [vmem:[%s613 + $0x8] sm:$0xff]
      %v616 = vld [vmem:[%s613 + $0x10] sm:$0xff]
      %v617 = vld [vmem:[%s613 + $0x18] sm:$0xff]
      %v618 = vld [vmem:[%s613 + $0x20] sm:$0xff]
      %v619 = vld [vmem:[%s613 + $0x28] sm:$0xff]
      %v620 = vpack.c.bf16 %v607, %v606
      %v621 = vld [vmem:[#allocation6] sm:$0xff]
      %v622 = vld [vmem:[#allocation6 + $0x8] sm:$0xf]
      %v623 = vld [vmem:[#allocation6 + $0xc] sm:$0xff]
      %v624 = vld [vmem:[#allocation6 + $0x14] sm:$0xf]
      %v625 = vld [vmem:[#allocation6 + $0x18] sm:$0xff]
      %v626 = vld [vmem:[#allocation6 + $0x20] sm:$0xf]
      %v627 = vld [vmem:[#allocation6 + $0x24] sm:$0xff]
      %v628 = vld [vmem:[#allocation6 + $0x2c] sm:$0xf]
      %v629 = vld [vmem:[#allocation6 + $0x30] sm:$0xff]
      %v630 = vld [vmem:[#allocation6 + $0x38] sm:$0xf]
      %v631 = vld [vmem:[#allocation6 + $0x3c] sm:$0xff]
      %v632 = vld [vmem:[#allocation6 + $0x44] sm:$0xf]
      %v633 = vld [vmem:[#allocation6 + $0x48] sm:$0xff]
      %v634 = vld [vmem:[#allocation6 + $0x50] sm:$0xf]
      %v635 = vld [vmem:[#allocation6 + $0x54] sm:$0xff]
      %v636 = vld [vmem:[#allocation6 + $0x5c] sm:$0xf]
      %v637 = vld [vmem:[#allocation6 + $0x60] sm:$0xff]
      %v638 = vld [vmem:[#allocation6 + $0x68] sm:$0xf]
      %v639 = vld [vmem:[#allocation6 + $0x6c] sm:$0xff]
      %v640 = vld [vmem:[#allocation6 + $0x74] sm:$0xf]
      %v641 = vld [vmem:[#allocation6 + $0x78] sm:$0xff]
      %v642 = vld [vmem:[#allocation6 + $0x80] sm:$0xf]
      %v643 = vld [vmem:[#allocation6 + $0x84] sm:$0xff]
      %v644 = vld [vmem:[#allocation6 + $0x8c] sm:$0xf]
      %v645 = vld [vmem:[#allocation6 + $0x90] sm:$0xff]
      %v646 = vld [vmem:[#allocation6 + $0x98] sm:$0xf]
      %v647 = vld [vmem:[#allocation6 + $0x9c] sm:$0xff]
      %v648 = vld [vmem:[#allocation6 + $0xa4] sm:$0xf]
      %v649 = vld [vmem:[#allocation6 + $0xa8] sm:$0xff]
      %v650 = vld [vmem:[#allocation6 + $0xb0] sm:$0xf]
      %v651 = vld [vmem:[#allocation6 + $0xb4] sm:$0xff]
      %v652 = vld [vmem:[#allocation6 + $0xbc] sm:$0xf]
      %v685 = vunpack.c.l.b16 %v621
      %v686 = vunpack.c.h.b16 %v621
      %v687 = vunpack.c.l.b16 %v622
      %v688 = vunpack.c.l.b16 %v623
      %v689 = vunpack.c.h.b16 %v623
      %v690 = vunpack.c.l.b16 %v624
      %v691 = vunpack.c.l.b16 %v625
      %v692 = vunpack.c.h.b16 %v625
      %v693 = vunpack.c.l.b16 %v626
      %v694 = vunpack.c.l.b16 %v627
      %v695 = vunpack.c.h.b16 %v627
      %v696 = vunpack.c.l.b16 %v628
      %v697 = vunpack.c.l.b16 %v629
      %v698 = vunpack.c.h.b16 %v629
      %v699 = vunpack.c.l.b16 %v630
      %v700 = vunpack.c.l.b16 %v631
      %v701 = vunpack.c.h.b16 %v631
      %v702 = vunpack.c.l.b16 %v632
      %v703 = vunpack.c.l.b16 %v633
      %v704 = vunpack.c.h.b16 %v633
      %v705 = vunpack.c.l.b16 %v634
      %v706 = vunpack.c.l.b16 %v635
      %v707 = vunpack.c.h.b16 %v635
      %v708 = vunpack.c.l.b16 %v636
      %v709 = vunpack.c.l.b16 %v637
      %v710 = vunpack.c.h.b16 %v637
      %v711 = vunpack.c.l.b16 %v638
      %v712 = vunpack.c.l.b16 %v639
      %v713 = vunpack.c.h.b16 %v639
      %v714 = vunpack.c.l.b16 %v640
      %v715 = vunpack.c.l.b16 %v641
      %v716 = vunpack.c.h.b16 %v641
      %v717 = vunpack.c.l.b16 %v642
      %v718 = vunpack.c.l.b16 %v643
      %v719 = vunpack.c.h.b16 %v643
      %v720 = vunpack.c.l.b16 %v644
      %v721 = vunpack.c.l.b16 %v645
      %v722 = vunpack.c.h.b16 %v645
      %v723 = vunpack.c.l.b16 %v646
      %v724 = vunpack.c.l.b16 %v647
      %v725 = vunpack.c.h.b16 %v647
      %v726 = vunpack.c.l.b16 %v648
      %v727 = vunpack.c.l.b16 %v649
      %v728 = vunpack.c.h.b16 %v649
      %v729 = vunpack.c.l.b16 %v650
      %v730 = vunpack.c.l.b16 %v651
      %v731 = vunpack.c.h.b16 %v651
      %v732 = vunpack.c.l.b16 %v652
      %v733 = vpack.c.b16 %v688, %v685
      %v734 = vpack.c.b16 %v689, %v686
      %v735 = vpack.c.b16 %v690, %v687
      %v736 = vpack.c.b16 %v694, %v691
      %v737 = vpack.c.b16 %v695, %v692
      %v738 = vpack.c.b16 %v696, %v693
      %v739 = vpack.c.b16 %v700, %v697
      %v740 = vpack.c.b16 %v701, %v698
      %v741 = vpack.c.b16 %v702, %v699
      %v742 = vpack.c.b16 %v706, %v703
      %v743 = vpack.c.b16 %v707, %v704
      %v744 = vpack.c.b16 %v708, %v705
      %v745 = vpack.c.b16 %v712, %v709
      %v746 = vpack.c.b16 %v713, %v710
      %v747 = vpack.c.b16 %v714, %v711
      %v748 = vpack.c.b16 %v718, %v715
      %v749 = vpack.c.b16 %v719, %v716
      %v750 = vpack.c.b16 %v720, %v717
      %v751 = vpack.c.b16 %v724, %v721
      %v752 = vpack.c.b16 %v725, %v722
      %v753 = vpack.c.b16 %v726, %v723
      %v754 = vpack.c.b16 %v730, %v727
      %v755 = vpack.c.b16 %v731, %v728
      %v756 = vpack.c.b16 %v732, %v729
      %781 = vmatprep.subr.bf16.mxu0 %v755
      %782 = vmatpush1.bf16.msra.mxu0 %v754
      %783 = vmatprep.subr.bf16.mxu0 %v752
      %784 = vmatpush1.bf16.msra.mxu0 %v751
      %785 = vmatprep.subr.bf16.mxu0 %v749
      %786 = vmatpush1.bf16.msra.mxu0 %v748
      %787 = vmatprep.subr.bf16.mxu0 %v746
      %788 = vmatpush1.bf16.msra.mxu0 %v745
      %789 = vmatprep.subr.bf16.mxu0 %v743
      %790 = vmatpush1.bf16.msra.mxu0 %v742
      %791 = vmatprep.subr.bf16.mxu0 %v740
      %792 = vmatpush1.bf16.msra.mxu0 %v739
      %793 = vmatprep.subr.bf16.mxu0 %v737
      %794 = vmatpush1.bf16.msra.mxu0 %v736
      %795 = vmatprep.subr.bf16.mxu0 %v734
      %796 = vmatpush1.bf16.msra.mxu0 %v733
      %797 = vmatprep.subr.bf16.mxu0 0
      %798 = vmatpush2.bf16.msra.mxu0 0
      %799 = vmatprep.subr.bf16.mxu0 0
      %800 = vmatpush2.bf16.msra.mxu0 0
      %801 = vmatprep.subr.bf16.mxu0 0
      %802 = vmatpush2.bf16.msra.mxu0 0
      %803 = vmatprep.subr.bf16.mxu0 0
      %804 = vmatpush2.bf16.msra.mxu0 0
      %805 = vmatprep.subr.bf16.mxu0 0
      %806 = vmatpush2.bf16.msra.mxu0 0
      %807 = vmatprep.subr.bf16.mxu0 0
      %808 = vmatpush2.bf16.msra.mxu0 0
      %809 = vmatprep.subr.bf16.mxu0 0
      %810 = vmatpush2.bf16.msra.mxu0 0
      %811 = vmatprep.subr.bf16.mxu0 0
      %812 = vmatpush2.bf16.msra.mxu0 0
      %813 = vmatprep.mubr.bf16.mxu0 0
      %814 = vmatmul.mubr.bf16.gmra.mxu0 %v620
      %v815 = vpop.f32.mrf.mxu0
      %v816 = vadd.f32 0.0, %v815
      %v817 = vpop.f32.mrf.mxu0
      %v818 = vadd.f32 0.0, %v817
      %v819 = vpop.f32.mrf.mxu0
      %v820 = vadd.f32 0.0, %v819
      %v821 = vpop.f32.mrf.mxu0
      %v822 = vadd.f32 0.0, %v821
      %823 = vdwg.mxu0
      %824 = vmatprep.subr.bf16.mxu0 0
      %825 = vmatpush1.bf16.msra.mxu0 %v756
      %826 = vmatprep.subr.bf16.mxu0 0
      %827 = vmatpush1.bf16.msra.mxu0 %v753
      %828 = vmatprep.subr.bf16.mxu0 0
      %829 = vmatpush1.bf16.msra.mxu0 %v750
      %830 = vmatprep.subr.bf16.mxu0 0
      %831 = vmatpush1.bf16.msra.mxu0 %v747
      %832 = vmatprep.subr.bf16.mxu0 0
      %833 = vmatpush1.bf16.msra.mxu0 %v744
      %834 = vmatprep.subr.bf16.mxu0 0
      %835 = vmatpush1.bf16.msra.mxu0 %v741
      %836 = vmatprep.subr.bf16.mxu0 0
      %837 = vmatpush1.bf16.msra.mxu0 %v738
      %838 = vmatprep.subr.bf16.mxu0 0
      %839 = vmatpush1.bf16.msra.mxu0 %v735
      %840 = vmatprep.subr.bf16.mxu0 0
      %841 = vmatpush2.bf16.msra.mxu0 0
      %842 = vmatprep.subr.bf16.mxu0 0
      %843 = vmatpush2.bf16.msra.mxu0 0
      %844 = vmatprep.subr.bf16.mxu0 0
      %845 = vmatpush2.bf16.msra.mxu0 0
      %846 = vmatprep.subr.bf16.mxu0 0
      %847 = vmatpush2.bf16.msra.mxu0 0
      %848 = vmatprep.subr.bf16.mxu0 0
      %849 = vmatpush2.bf16.msra.mxu0 0
      %850 = vmatprep.subr.bf16.mxu0 0
      %851 = vmatpush2.bf16.msra.mxu0 0
      %852 = vmatprep.subr.bf16.mxu0 0
      %853 = vmatpush2.bf16.msra.mxu0 0
      %854 = vmatprep.subr.bf16.mxu0 0
      %855 = vmatpush2.bf16.msra.mxu0 0
      %856 = vmatprep.mubr.bf16.mxu0 0
      %857 = vmatmul.mubr.bf16.gmra.mxu0 %v620
      %v858 = vpop.f32.mrf.mxu0
      %v859 = vadd.f32 0.0, %v858
      %v860 = vpop.f32.mrf.mxu0
      %v861 = vpop.f32.mrf.mxu0
      %v862 = vadd.f32 0.0, %v861
      %v863 = vpop.f32.mrf.mxu0
      %864 = vdwg.mxu0
      %v865 = vadd.f32 %v614, %v816
      %v866 = vadd.f32 %v615, %v818
      %v867 = vadd.f32 %v617, %v820
      %v868 = vadd.f32 %v618, %v822
      %v869 = vmul.f32 %v865, 0.5
      %v870 = vmul.f32 %v866, 0.5
      %v871 = vmul.f32 %v867, 0.5
      %v872 = vmul.f32 %v868, 0.5
      %v873 = vtanh.pop %v869
      %v874 = vtanh.pop %v870
      %v875 = vtanh.pop %v871
      %v876 = vtanh.pop %v872
      %v877 = vmul.f32 %v873, 0.5
      %v878 = vmul.f32 %v874, 0.5
      %v879 = vmul.f32 %v875, 0.5
      %v880 = vmul.f32 %v876, 0.5
      %v881 = vadd.f32 %v877, 0.5
      %v882 = vadd.f32 %v878, 0.5
      %v883 = vadd.f32 %v879, 0.5
      %v884 = vadd.f32 %v880, 0.5
      %v885 = vadd.f32 %v859, %v598
      %v886 = vadd.f32 %v862, %v598
      %v887 = vmul.f32 %v881, %v885
      %v888 = vmul.f32 %v883, %v886
      %v889 = vadd.f32 %v616, %v887
      %v890 = vadd.f32 %v619, %v888
      %v891 = vtanh.pop %v889
      %v892 = vtanh.pop %v890
      %v893 = vsub.f32 %v606, %v891
      %v894 = vsub.f32 %v607, %v892
      %v895 = vmul.f32 %v882, %v893
      %v896 = vmul.f32 %v884, %v894
      %v897 = vadd.f32 %v891, %v895
      %v898 = vadd.f32 %v892, %v896
      %v899 = vpack.c.bf16 %v898, %v897
      %v901 = vunpack.c.l.b16 %v899
      %v902 = vunpack.c.h.b16 %v899
      %v903 = vpack.c.b16 %v901, %v901
      %v904 = vpack.c.b16 %v902, %v902
      %s907 = smul.addr %s609, 4
      %s908 = scalar_lea.vmem [#allocation2], %s907
      %909 = vst [vmem:[%s908] sm:$0xf] %v903
      %910 = vst [vmem:[%s908 + $0x4] sm:$0xf] %v904
      %s911 = sadd.s32 %s608, 16
      %s912 = sshra.s32 %s911, 3
      %s913 = sand.u32 %s911, 7
      %s914 = smul.u32 %s912, 3
      %s915 = smul.addr %s914, 8
      %s916 = scalar_lea.vmem [#allocation3], %s915
      %v917 = vld [vmem:[%s916] sm:$0xff]
      %v918 = vld [vmem:[%s916 + $0x8] sm:$0xff]
      %v919 = vld [vmem:[%s916 + $0x10] sm:$0xff]
      %v920 = vld [vmem:[%s916 + $0x18] sm:$0xff]
      %v921 = vld [vmem:[%s916 + $0x20] sm:$0xff]
      %v922 = vld [vmem:[%s916 + $0x28] sm:$0xff]
      %v923 = vld [vmem:[#allocation6] sm:$0xff]
      %v924 = vld [vmem:[#allocation6 + $0x8] sm:$0xf]
      %v925 = vld [vmem:[#allocation6 + $0xc] sm:$0xff]
      %v926 = vld [vmem:[#allocation6 + $0x14] sm:$0xf]
      %v927 = vld [vmem:[#allocation6 + $0x18] sm:$0xff]
      %v928 = vld [vmem:[#allocation6 + $0x20] sm:$0xf]
      %v929 = vld [vmem:[#allocation6 + $0x24] sm:$0xff]
      %v930 = vld [vmem:[#allocation6 + $0x2c] sm:$0xf]
      %v931 = vld [vmem:[#allocation6 + $0x30] sm:$0xff]
      %v932 = vld [vmem:[#allocation6 + $0x38] sm:$0xf]
      %v933 = vld [vmem:[#allocation6 + $0x3c] sm:$0xff]
      %v934 = vld [vmem:[#allocation6 + $0x44] sm:$0xf]
      %v935 = vld [vmem:[#allocation6 + $0x48] sm:$0xff]
      %v936 = vld [vmem:[#allocation6 + $0x50] sm:$0xf]
      %v937 = vld [vmem:[#allocation6 + $0x54] sm:$0xff]
      %v938 = vld [vmem:[#allocation6 + $0x5c] sm:$0xf]
      %v939 = vld [vmem:[#allocation6 + $0x60] sm:$0xff]
      %v940 = vld [vmem:[#allocation6 + $0x68] sm:$0xf]
      %v941 = vld [vmem:[#allocation6 + $0x6c] sm:$0xff]
      %v942 = vld [vmem:[#allocation6 + $0x74] sm:$0xf]
      %v943 = vld [vmem:[#allocation6 + $0x78] sm:$0xff]
      %v944 = vld [vmem:[#allocation6 + $0x80] sm:$0xf]
      %v945 = vld [vmem:[#allocation6 + $0x84] sm:$0xff]
      %v946 = vld [vmem:[#allocation6 + $0x8c] sm:$0xf]
      %v947 = vld [vmem:[#allocation6 + $0x90] sm:$0xff]
      %v948 = vld [vmem:[#allocation6 + $0x98] sm:$0xf]
      %v949 = vld [vmem:[#allocation6 + $0x9c] sm:$0xff]
      %v950 = vld [vmem:[#allocation6 + $0xa4] sm:$0xf]
      %v951 = vld [vmem:[#allocation6 + $0xa8] sm:$0xff]
      %v952 = vld [vmem:[#allocation6 + $0xb0] sm:$0xf]
      %v953 = vld [vmem:[#allocation6 + $0xb4] sm:$0xff]
      %v954 = vld [vmem:[#allocation6 + $0xbc] sm:$0xf]
      %v987 = vunpack.c.l.b16 %v923
      %v988 = vunpack.c.h.b16 %v923
      %v989 = vunpack.c.l.b16 %v924
      %v990 = vunpack.c.l.b16 %v925
      %v991 = vunpack.c.h.b16 %v925
      %v992 = vunpack.c.l.b16 %v926
      %v993 = vunpack.c.l.b16 %v927
      %v994 = vunpack.c.h.b16 %v927
      %v995 = vunpack.c.l.b16 %v928
      %v996 = vunpack.c.l.b16 %v929
      %v997 = vunpack.c.h.b16 %v929
      %v998 = vunpack.c.l.b16 %v930
      %v999 = vunpack.c.l.b16 %v931
      %v1000 = vunpack.c.h.b16 %v931
      %v1001 = vunpack.c.l.b16 %v932
      %v1002 = vunpack.c.l.b16 %v933
      %v1003 = vunpack.c.h.b16 %v933
      %v1004 = vunpack.c.l.b16 %v934
      %v1005 = vunpack.c.l.b16 %v935
      %v1006 = vunpack.c.h.b16 %v935
      %v1007 = vunpack.c.l.b16 %v936
      %v1008 = vunpack.c.l.b16 %v937
      %v1009 = vunpack.c.h.b16 %v937
      %v1010 = vunpack.c.l.b16 %v938
      %v1011 = vunpack.c.l.b16 %v939
      %v1012 = vunpack.c.h.b16 %v939
      %v1013 = vunpack.c.l.b16 %v940
      %v1014 = vunpack.c.l.b16 %v941
      %v1015 = vunpack.c.h.b16 %v941
      %v1016 = vunpack.c.l.b16 %v942
      %v1017 = vunpack.c.l.b16 %v943
      %v1018 = vunpack.c.h.b16 %v943
      %v1019 = vunpack.c.l.b16 %v944
      %v1020 = vunpack.c.l.b16 %v945
      %v1021 = vunpack.c.h.b16 %v945
      %v1022 = vunpack.c.l.b16 %v946
      %v1023 = vunpack.c.l.b16 %v947
      %v1024 = vunpack.c.h.b16 %v947
      %v1025 = vunpack.c.l.b16 %v948
      %v1026 = vunpack.c.l.b16 %v949
      %v1027 = vunpack.c.h.b16 %v949
      %v1028 = vunpack.c.l.b16 %v950
      %v1029 = vunpack.c.l.b16 %v951
      %v1030 = vunpack.c.h.b16 %v951
      %v1031 = vunpack.c.l.b16 %v952
      %v1032 = vunpack.c.l.b16 %v953
      %v1033 = vunpack.c.h.b16 %v953
      %v1034 = vunpack.c.l.b16 %v954
      %v1035 = vpack.c.b16 %v990, %v987
      %v1036 = vpack.c.b16 %v991, %v988
      %v1037 = vpack.c.b16 %v992, %v989
      %v1038 = vpack.c.b16 %v996, %v993
      %v1039 = vpack.c.b16 %v997, %v994
      %v1040 = vpack.c.b16 %v998, %v995
      %v1041 = vpack.c.b16 %v1002, %v999
      %v1042 = vpack.c.b16 %v1003, %v1000
      %v1043 = vpack.c.b16 %v1004, %v1001
      %v1044 = vpack.c.b16 %v1008, %v1005
      %v1045 = vpack.c.b16 %v1009, %v1006
      %v1046 = vpack.c.b16 %v1010, %v1007
      %v1047 = vpack.c.b16 %v1014, %v1011
      %v1048 = vpack.c.b16 %v1015, %v1012
      %v1049 = vpack.c.b16 %v1016, %v1013
      %v1050 = vpack.c.b16 %v1020, %v1017
      %v1051 = vpack.c.b16 %v1021, %v1018
      %v1052 = vpack.c.b16 %v1022, %v1019
      %v1053 = vpack.c.b16 %v1026, %v1023
      %v1054 = vpack.c.b16 %v1027, %v1024
      %v1055 = vpack.c.b16 %v1028, %v1025
      %v1056 = vpack.c.b16 %v1032, %v1029
      %v1057 = vpack.c.b16 %v1033, %v1030
      %v1058 = vpack.c.b16 %v1034, %v1031
      %1083 = vmatprep.subr.bf16.mxu0 %v1057
      %1084 = vmatpush1.bf16.msra.mxu0 %v1056
      %1085 = vmatprep.subr.bf16.mxu0 %v1054
      %1086 = vmatpush1.bf16.msra.mxu0 %v1053
      %1087 = vmatprep.subr.bf16.mxu0 %v1051
      %1088 = vmatpush1.bf16.msra.mxu0 %v1050
      %1089 = vmatprep.subr.bf16.mxu0 %v1048
      %1090 = vmatpush1.bf16.msra.mxu0 %v1047
      %1091 = vmatprep.subr.bf16.mxu0 %v1045
      %1092 = vmatpush1.bf16.msra.mxu0 %v1044
      %1093 = vmatprep.subr.bf16.mxu0 %v1042
      %1094 = vmatpush1.bf16.msra.mxu0 %v1041
      %1095 = vmatprep.subr.bf16.mxu0 %v1039
      %1096 = vmatpush1.bf16.msra.mxu0 %v1038
      %1097 = vmatprep.subr.bf16.mxu0 %v1036
      %1098 = vmatpush1.bf16.msra.mxu0 %v1035
      %1099 = vmatprep.subr.bf16.mxu0 0
      %1100 = vmatpush2.bf16.msra.mxu0 0
      %1101 = vmatprep.subr.bf16.mxu0 0
      %1102 = vmatpush2.bf16.msra.mxu0 0
      %1103 = vmatprep.subr.bf16.mxu0 0
      %1104 = vmatpush2.bf16.msra.mxu0 0
      %1105 = vmatprep.subr.bf16.mxu0 0
      %1106 = vmatpush2.bf16.msra.mxu0 0
      %1107 = vmatprep.subr.bf16.mxu0 0
      %1108 = vmatpush2.bf16.msra.mxu0 0
      %1109 = vmatprep.subr.bf16.mxu0 0
      %1110 = vmatpush2.bf16.msra.mxu0 0
      %1111 = vmatprep.subr.bf16.mxu0 0
      %1112 = vmatpush2.bf16.msra.mxu0 0
      %1113 = vmatprep.subr.bf16.mxu0 0
      %1114 = vmatpush2.bf16.msra.mxu0 0
      %1115 = vmatprep.mubr.bf16.mxu0 0
      %1116 = vmatmul.mubr.bf16.gmra.mxu0 %v899
      %v1117 = vpop.f32.mrf.mxu0
      %v1118 = vadd.f32 0.0, %v1117
      %v1119 = vpop.f32.mrf.mxu0
      %v1120 = vadd.f32 0.0, %v1119
      %v1121 = vpop.f32.mrf.mxu0
      %v1122 = vadd.f32 0.0, %v1121
      %v1123 = vpop.f32.mrf.mxu0
      %v1124 = vadd.f32 0.0, %v1123
      %1125 = vdwg.mxu0
      %1126 = vmatprep.subr.bf16.mxu0 0
      %1127 = vmatpush1.bf16.msra.mxu0 %v1058
      %1128 = vmatprep.subr.bf16.mxu0 0
      %1129 = vmatpush1.bf16.msra.mxu0 %v1055
      %1130 = vmatprep.subr.bf16.mxu0 0
      %1131 = vmatpush1.bf16.msra.mxu0 %v1052
      %1132 = vmatprep.subr.bf16.mxu0 0
      %1133 = vmatpush1.bf16.msra.mxu0 %v1049
      %1134 = vmatprep.subr.bf16.mxu0 0
      %1135 = vmatpush1.bf16.msra.mxu0 %v1046
      %1136 = vmatprep.subr.bf16.mxu0 0
      %1137 = vmatpush1.bf16.msra.mxu0 %v1043
      %1138 = vmatprep.subr.bf16.mxu0 0
      %1139 = vmatpush1.bf16.msra.mxu0 %v1040
      %1140 = vmatprep.subr.bf16.mxu0 0
      %1141 = vmatpush1.bf16.msra.mxu0 %v1037
      %1142 = vmatprep.subr.bf16.mxu0 0
      %1143 = vmatpush2.bf16.msra.mxu0 0
      %1144 = vmatprep.subr.bf16.mxu0 0
      %1145 = vmatpush2.bf16.msra.mxu0 0
      %1146 = vmatprep.subr.bf16.mxu0 0
      %1147 = vmatpush2.bf16.msra.mxu0 0
      %1148 = vmatprep.subr.bf16.mxu0 0
      %1149 = vmatpush2.bf16.msra.mxu0 0
      %1150 = vmatprep.subr.bf16.mxu0 0
      %1151 = vmatpush2.bf16.msra.mxu0 0
      %1152 = vmatprep.subr.bf16.mxu0 0
      %1153 = vmatpush2.bf16.msra.mxu0 0
      %1154 = vmatprep.subr.bf16.mxu0 0
      %1155 = vmatpush2.bf16.msra.mxu0 0
      %1156 = vmatprep.subr.bf16.mxu0 0
      %1157 = vmatpush2.bf16.msra.mxu0 0
      %1158 = vmatprep.mubr.bf16.mxu0 0
      %1159 = vmatmul.mubr.bf16.gmra.mxu0 %v899
      %v1160 = vpop.f32.mrf.mxu0
      %v1161 = vadd.f32 0.0, %v1160
      %v1162 = vpop.f32.mrf.mxu0
      %v1163 = vpop.f32.mrf.mxu0
      %v1164 = vadd.f32 0.0, %v1163
      %v1165 = vpop.f32.mrf.mxu0
      %1166 = vdwg.mxu0
      %v1167 = vadd.f32 %v917, %v1118
      %v1168 = vadd.f32 %v918, %v1120
      %v1169 = vadd.f32 %v920, %v1122
      %v1170 = vadd.f32 %v921, %v1124
      %v1171 = vmul.f32 %v1167, 0.5
      %v1172 = vmul.f32 %v1168, 0.5
      %v1173 = vmul.f32 %v1169, 0.5
      %v1174 = vmul.f32 %v1170, 0.5
      %v1175 = vtanh.pop %v1171
      %v1176 = vtanh.pop %v1172
      %v1177 = vtanh.pop %v1173
      %v1178 = vtanh.pop %v1174
      %v1179 = vmul.f32 %v1175, 0.5
      %v1180 = vmul.f32 %v1176, 0.5
      %v1181 = vmul.f32 %v1177, 0.5
      %v1182 = vmul.f32 %v1178, 0.5
      %v1183 = vadd.f32 %v1179, 0.5
      %v1184 = vadd.f32 %v1180, 0.5
      %v1185 = vadd.f32 %v1181, 0.5
      %v1186 = vadd.f32 %v1182, 0.5
      %v1187 = vadd.f32 %v1161, %v598
      %v1188 = vadd.f32 %v1164, %v598
      %v1189 = vmul.f32 %v1183, %v1187
      %v1190 = vmul.f32 %v1185, %v1188
      %v1191 = vadd.f32 %v919, %v1189
      %v1192 = vadd.f32 %v922, %v1190
      %v1193 = vtanh.pop %v1191
      %v1194 = vtanh.pop %v1192
      %v1195 = vsub.f32 %v897, %v1193
      %v1196 = vsub.f32 %v898, %v1194
      %v1197 = vmul.f32 %v1184, %v1195
      %v1198 = vmul.f32 %v1186, %v1196
      %v1199 = vadd.f32 %v1193, %v1197
      %v1200 = vadd.f32 %v1194, %v1198
      %v1201 = vpack.c.bf16 %v1200, %v1199
      %v1203 = vunpack.c.l.b16 %v1201
      %v1204 = vunpack.c.h.b16 %v1201
      %v1205 = vpack.c.b16 %v1203, %v1203
      %v1206 = vpack.c.b16 %v1204, %v1204
      %s1209 = smul.addr %s912, 4
      %s1210 = scalar_lea.vmem [#allocation2], %s1209
      %1211 = vst [vmem:[%s1210] sm:$0xf] %v1205
      %1212 = vst [vmem:[%s1210 + $0x4] sm:$0xf] %v1206
      %s1213 = sadd.s32 %s608, 32
      %s1214 = sshra.s32 %s1213, 3
      %s1215 = sand.u32 %s1213, 7
      %s1216 = smul.u32 %s1214, 3
      %s1217 = smul.addr %s1216, 8
      %s1218 = scalar_lea.vmem [#allocation3], %s1217
      %v1219 = vld [vmem:[%s1218] sm:$0xff]
      %v1220 = vld [vmem:[%s1218 + $0x8] sm:$0xff]
      %v1221 = vld [vmem:[%s1218 + $0x10] sm:$0xff]
      %v1222 = vld [vmem:[%s1218 + $0x18] sm:$0xff]
      %v1223 = vld [vmem:[%s1218 + $0x20] sm:$0xff]
      %v1224 = vld [vmem:[%s1218 + $0x28] sm:$0xff]
      %v1225 = vld [vmem:[#allocation6] sm:$0xff]
      %v1226 = vld [vmem:[#allocation6 + $0x8] sm:$0xf]
      %v1227 = vld [vmem:[#allocation6 + $0xc] sm:$0xff]
      %v1228 = vld [vmem:[#allocation6 + $0x14] sm:$0xf]
      %v1229 = vld [vmem:[#allocation6 + $0x18] sm:$0xff]
      %v1230 = vld [vmem:[#allocation6 + $0x20] sm:$0xf]
      %v1231 = vld [vmem:[#allocation6 + $0x24] sm:$0xff]
      %v1232 = vld [vmem:[#allocation6 + $0x2c] sm:$0xf]
      %v1233 = vld [vmem:[#allocation6 + $0x30] sm:$0xff]
      %v1234 = vld [vmem:[#allocation6 + $0x38] sm:$0xf]
      %v1235 = vld [vmem:[#allocation6 + $0x3c] sm:$0xff]
      %v1236 = vld [vmem:[#allocation6 + $0x44] sm:$0xf]
      %v1237 = vld [vmem:[#allocation6 + $0x48] sm:$0xff]
      %v1238 = vld [vmem:[#allocation6 + $0x50] sm:$0xf]
      %v1239 = vld [vmem:[#allocation6 + $0x54] sm:$0xff]
      %v1240 = vld [vmem:[#allocation6 + $0x5c] sm:$0xf]
      %v1241 = vld [vmem:[#allocation6 + $0x60] sm:$0xff]
      %v1242 = vld [vmem:[#allocation6 + $0x68] sm:$0xf]
      %v1243 = vld [vmem:[#allocation6 + $0x6c] sm:$0xff]
      %v1244 = vld [vmem:[#allocation6 + $0x74] sm:$0xf]
      %v1245 = vld [vmem:[#allocation6 + $0x78] sm:$0xff]
      %v1246 = vld [vmem:[#allocation6 + $0x80] sm:$0xf]
      %v1247 = vld [vmem:[#allocation6 + $0x84] sm:$0xff]
      %v1248 = vld [vmem:[#allocation6 + $0x8c] sm:$0xf]
      %v1249 = vld [vmem:[#allocation6 + $0x90] sm:$0xff]
      %v1250 = vld [vmem:[#allocation6 + $0x98] sm:$0xf]
      %v1251 = vld [vmem:[#allocation6 + $0x9c] sm:$0xff]
      %v1252 = vld [vmem:[#allocation6 + $0xa4] sm:$0xf]
      %v1253 = vld [vmem:[#allocation6 + $0xa8] sm:$0xff]
      %v1254 = vld [vmem:[#allocation6 + $0xb0] sm:$0xf]
      %v1255 = vld [vmem:[#allocation6 + $0xb4] sm:$0xff]
      %v1256 = vld [vmem:[#allocation6 + $0xbc] sm:$0xf]
      %v1289 = vunpack.c.l.b16 %v1225
      %v1290 = vunpack.c.h.b16 %v1225
      %v1291 = vunpack.c.l.b16 %v1226
      %v1292 = vunpack.c.l.b16 %v1227
      %v1293 = vunpack.c.h.b16 %v1227
      %v1294 = vunpack.c.l.b16 %v1228
      %v1295 = vunpack.c.l.b16 %v1229
      %v1296 = vunpack.c.h.b16 %v1229
      %v1297 = vunpack.c.l.b16 %v1230
      %v1298 = vunpack.c.l.b16 %v1231
      %v1299 = vunpack.c.h.b16 %v1231
      %v1300 = vunpack.c.l.b16 %v1232
      %v1301 = vunpack.c.l.b16 %v1233
      %v1302 = vunpack.c.h.b16 %v1233
      %v1303 = vunpack.c.l.b16 %v1234
      %v1304 = vunpack.c.l.b16 %v1235
      %v1305 = vunpack.c.h.b16 %v1235
      %v1306 = vunpack.c.l.b16 %v1236
      %v1307 = vunpack.c.l.b16 %v1237
      %v1308 = vunpack.c.h.b16 %v1237
      %v1309 = vunpack.c.l.b16 %v1238
      %v1310 = vunpack.c.l.b16 %v1239
      %v1311 = vunpack.c.h.b16 %v1239
      %v1312 = vunpack.c.l.b16 %v1240
      %v1313 = vunpack.c.l.b16 %v1241
      %v1314 = vunpack.c.h.b16 %v1241
      %v1315 = vunpack.c.l.b16 %v1242
      %v1316 = vunpack.c.l.b16 %v1243
      %v1317 = vunpack.c.h.b16 %v1243
      %v1318 = vunpack.c.l.b16 %v1244
      %v1319 = vunpack.c.l.b16 %v1245
      %v1320 = vunpack.c.h.b16 %v1245
      %v1321 = vunpack.c.l.b16 %v1246
      %v1322 = vunpack.c.l.b16 %v1247
      %v1323 = vunpack.c.h.b16 %v1247
      %v1324 = vunpack.c.l.b16 %v1248
      %v1325 = vunpack.c.l.b16 %v1249
      %v1326 = vunpack.c.h.b16 %v1249
      %v1327 = vunpack.c.l.b16 %v1250
      %v1328 = vunpack.c.l.b16 %v1251
      %v1329 = vunpack.c.h.b16 %v1251
      %v1330 = vunpack.c.l.b16 %v1252
      %v1331 = vunpack.c.l.b16 %v1253
      %v1332 = vunpack.c.h.b16 %v1253
      %v1333 = vunpack.c.l.b16 %v1254
      %v1334 = vunpack.c.l.b16 %v1255
      %v1335 = vunpack.c.h.b16 %v1255
      %v1336 = vunpack.c.l.b16 %v1256
      %v1337 = vpack.c.b16 %v1292, %v1289
      %v1338 = vpack.c.b16 %v1293, %v1290
      %v1339 = vpack.c.b16 %v1294, %v1291
      %v1340 = vpack.c.b16 %v1298, %v1295
      %v1341 = vpack.c.b16 %v1299, %v1296
      %v1342 = vpack.c.b16 %v1300, %v1297
      %v1343 = vpack.c.b16 %v1304, %v1301
      %v1344 = vpack.c.b16 %v1305, %v1302
      %v1345 = vpack.c.b16 %v1306, %v1303
      %v1346 = vpack.c.b16 %v1310, %v1307
      %v1347 = vpack.c.b16 %v1311, %v1308
      %v1348 = vpack.c.b16 %v1312, %v1309
      %v1349 = vpack.c.b16 %v1316, %v1313
      %v1350 = vpack.c.b16 %v1317, %v1314
      %v1351 = vpack.c.b16 %v1318, %v1315
      %v1352 = vpack.c.b16 %v1322, %v1319
      %v1353 = vpack.c.b16 %v1323, %v1320
      %v1354 = vpack.c.b16 %v1324, %v1321
      %v1355 = vpack.c.b16 %v1328, %v1325
      %v1356 = vpack.c.b16 %v1329, %v1326
      %v1357 = vpack.c.b16 %v1330, %v1327
      %v1358 = vpack.c.b16 %v1334, %v1331
      %v1359 = vpack.c.b16 %v1335, %v1332
      %v1360 = vpack.c.b16 %v1336, %v1333
      %1385 = vmatprep.subr.bf16.mxu0 %v1359
      %1386 = vmatpush1.bf16.msra.mxu0 %v1358
      %1387 = vmatprep.subr.bf16.mxu0 %v1356
      %1388 = vmatpush1.bf16.msra.mxu0 %v1355
      %1389 = vmatprep.subr.bf16.mxu0 %v1353
      %1390 = vmatpush1.bf16.msra.mxu0 %v1352
      %1391 = vmatprep.subr.bf16.mxu0 %v1350
      %1392 = vmatpush1.bf16.msra.mxu0 %v1349
      %1393 = vmatprep.subr.bf16.mxu0 %v1347
      %1394 = vmatpush1.bf16.msra.mxu0 %v1346
      %1395 = vmatprep.subr.bf16.mxu0 %v1344
      %1396 = vmatpush1.bf16.msra.mxu0 %v1343
      %1397 = vmatprep.subr.bf16.mxu0 %v1341
      %1398 = vmatpush1.bf16.msra.mxu0 %v1340
      %1399 = vmatprep.subr.bf16.mxu0 %v1338
      %1400 = vmatpush1.bf16.msra.mxu0 %v1337
      %1401 = vmatprep.subr.bf16.mxu0 0
      %1402 = vmatpush2.bf16.msra.mxu0 0
      %1403 = vmatprep.subr.bf16.mxu0 0
      %1404 = vmatpush2.bf16.msra.mxu0 0
      %1405 = vmatprep.subr.bf16.mxu0 0
      %1406 = vmatpush2.bf16.msra.mxu0 0
      %1407 = vmatprep.subr.bf16.mxu0 0
      %1408 = vmatpush2.bf16.msra.mxu0 0
      %1409 = vmatprep.subr.bf16.mxu0 0
      %1410 = vmatpush2.bf16.msra.mxu0 0
      %1411 = vmatprep.subr.bf16.mxu0 0
      %1412 = vmatpush2.bf16.msra.mxu0 0
      %1413 = vmatprep.subr.bf16.mxu0 0
      %1414 = vmatpush2.bf16.msra.mxu0 0
      %1415 = vmatprep.subr.bf16.mxu0 0
      %1416 = vmatpush2.bf16.msra.mxu0 0
      %1417 = vmatprep.mubr.bf16.mxu0 0
      %1418 = vmatmul.mubr.bf16.gmra.mxu0 %v1201
      %v1419 = vpop.f32.mrf.mxu0
      %v1420 = vadd.f32 0.0, %v1419
      %v1421 = vpop.f32.mrf.mxu0
      %v1422 = vadd.f32 0.0, %v1421
      %v1423 = vpop.f32.mrf.mxu0
      %v1424 = vadd.f32 0.0, %v1423
      %v1425 = vpop.f32.mrf.mxu0
      %v1426 = vadd.f32 0.0, %v1425
      %1427 = vdwg.mxu0
      %1428 = vmatprep.subr.bf16.mxu0 0
      %1429 = vmatpush1.bf16.msra.mxu0 %v1360
      %1430 = vmatprep.subr.bf16.mxu0 0
      %1431 = vmatpush1.bf16.msra.mxu0 %v1357
      %1432 = vmatprep.subr.bf16.mxu0 0
      %1433 = vmatpush1.bf16.msra.mxu0 %v1354
      %1434 = vmatprep.subr.bf16.mxu0 0
      %1435 = vmatpush1.bf16.msra.mxu0 %v1351
      %1436 = vmatprep.subr.bf16.mxu0 0
      %1437 = vmatpush1.bf16.msra.mxu0 %v1348
      %1438 = vmatprep.subr.bf16.mxu0 0
      %1439 = vmatpush1.bf16.msra.mxu0 %v1345
      %1440 = vmatprep.subr.bf16.mxu0 0
      %1441 = vmatpush1.bf16.msra.mxu0 %v1342
      %1442 = vmatprep.subr.bf16.mxu0 0
      %1443 = vmatpush1.bf16.msra.mxu0 %v1339
      %1444 = vmatprep.subr.bf16.mxu0 0
      %1445 = vmatpush2.bf16.msra.mxu0 0
      %1446 = vmatprep.subr.bf16.mxu0 0
      %1447 = vmatpush2.bf16.msra.mxu0 0
      %1448 = vmatprep.subr.bf16.mxu0 0
      %1449 = vmatpush2.bf16.msra.mxu0 0
      %1450 = vmatprep.subr.bf16.mxu0 0
      %1451 = vmatpush2.bf16.msra.mxu0 0
      %1452 = vmatprep.subr.bf16.mxu0 0
      %1453 = vmatpush2.bf16.msra.mxu0 0
      %1454 = vmatprep.subr.bf16.mxu0 0
      %1455 = vmatpush2.bf16.msra.mxu0 0
      %1456 = vmatprep.subr.bf16.mxu0 0
      %1457 = vmatpush2.bf16.msra.mxu0 0
      %1458 = vmatprep.subr.bf16.mxu0 0
      %1459 = vmatpush2.bf16.msra.mxu0 0
      %1460 = vmatprep.mubr.bf16.mxu0 0
      %1461 = vmatmul.mubr.bf16.gmra.mxu0 %v1201
      %v1462 = vpop.f32.mrf.mxu0
      %v1463 = vadd.f32 0.0, %v1462
      %v1464 = vpop.f32.mrf.mxu0
      %v1465 = vpop.f32.mrf.mxu0
      %v1466 = vadd.f32 0.0, %v1465
      %v1467 = vpop.f32.mrf.mxu0
      %1468 = vdwg.mxu0
      %v1469 = vadd.f32 %v1219, %v1420
      %v1470 = vadd.f32 %v1220, %v1422
      %v1471 = vadd.f32 %v1222, %v1424
      %v1472 = vadd.f32 %v1223, %v1426
      %v1473 = vmul.f32 %v1469, 0.5
      %v1474 = vmul.f32 %v1470, 0.5
      %v1475 = vmul.f32 %v1471, 0.5
      %v1476 = vmul.f32 %v1472, 0.5
      %v1477 = vtanh.pop %v1473
      %v1478 = vtanh.pop %v1474
      %v1479 = vtanh.pop %v1475
      %v1480 = vtanh.pop %v1476
      %v1481 = vmul.f32 %v1477, 0.5
      %v1482 = vmul.f32 %v1478, 0.5
      %v1483 = vmul.f32 %v1479, 0.5
      %v1484 = vmul.f32 %v1480, 0.5
      %v1485 = vadd.f32 %v1481, 0.5
      %v1486 = vadd.f32 %v1482, 0.5
      %v1487 = vadd.f32 %v1483, 0.5
      %v1488 = vadd.f32 %v1484, 0.5
      %v1489 = vadd.f32 %v1463, %v598
      %v1490 = vadd.f32 %v1466, %v598
      %v1491 = vmul.f32 %v1485, %v1489
      %v1492 = vmul.f32 %v1487, %v1490
      %v1493 = vadd.f32 %v1221, %v1491
      %v1494 = vadd.f32 %v1224, %v1492
      %v1495 = vtanh.pop %v1493
      %v1496 = vtanh.pop %v1494
      %v1497 = vsub.f32 %v1199, %v1495
      %v1498 = vsub.f32 %v1200, %v1496
      %v1499 = vmul.f32 %v1486, %v1497
      %v1500 = vmul.f32 %v1488, %v1498
      %v1501 = vadd.f32 %v1495, %v1499
      %v1502 = vadd.f32 %v1496, %v1500
      %v1503 = vpack.c.bf16 %v1502, %v1501
      %v1505 = vunpack.c.l.b16 %v1503
      %v1506 = vunpack.c.h.b16 %v1503
      %v1507 = vpack.c.b16 %v1505, %v1505
      %v1508 = vpack.c.b16 %v1506, %v1506
      %s1511 = smul.addr %s1214, 4
      %s1512 = scalar_lea.vmem [#allocation2], %s1511
      %1513 = vst [vmem:[%s1512] sm:$0xf] %v1507
      %1514 = vst [vmem:[%s1512 + $0x4] sm:$0xf] %v1508
      %s1515 = sadd.s32 %s608, 48
      %s1516 = sshra.s32 %s1515, 3
      %s1517 = sand.u32 %s1515, 7
      %s1518 = smul.u32 %s1516, 3
      %s1519 = smul.addr %s1518, 8
      %s1520 = scalar_lea.vmem [#allocation3], %s1519
      %v1521 = vld [vmem:[%s1520] sm:$0xff]
      %v1522 = vld [vmem:[%s1520 + $0x8] sm:$0xff]
      %v1523 = vld [vmem:[%s1520 + $0x10] sm:$0xff]
      %v1524 = vld [vmem:[%s1520 + $0x18] sm:$0xff]
      %v1525 = vld [vmem:[%s1520 + $0x20] sm:$0xff]
      %v1526 = vld [vmem:[%s1520 + $0x28] sm:$0xff]
      %v1527 = vld [vmem:[#allocation6] sm:$0xff]
      %v1528 = vld [vmem:[#allocation6 + $0x8] sm:$0xf]
      %v1529 = vld [vmem:[#allocation6 + $0xc] sm:$0xff]
      %v1530 = vld [vmem:[#allocation6 + $0x14] sm:$0xf]
      %v1531 = vld [vmem:[#allocation6 + $0x18] sm:$0xff]
      %v1532 = vld [vmem:[#allocation6 + $0x20] sm:$0xf]
      %v1533 = vld [vmem:[#allocation6 + $0x24] sm:$0xff]
      %v1534 = vld [vmem:[#allocation6 + $0x2c] sm:$0xf]
      %v1535 = vld [vmem:[#allocation6 + $0x30] sm:$0xff]
      %v1536 = vld [vmem:[#allocation6 + $0x38] sm:$0xf]
      %v1537 = vld [vmem:[#allocation6 + $0x3c] sm:$0xff]
      %v1538 = vld [vmem:[#allocation6 + $0x44] sm:$0xf]
      %v1539 = vld [vmem:[#allocation6 + $0x48] sm:$0xff]
      %v1540 = vld [vmem:[#allocation6 + $0x50] sm:$0xf]
      %v1541 = vld [vmem:[#allocation6 + $0x54] sm:$0xff]
      %v1542 = vld [vmem:[#allocation6 + $0x5c] sm:$0xf]
      %v1543 = vld [vmem:[#allocation6 + $0x60] sm:$0xff]
      %v1544 = vld [vmem:[#allocation6 + $0x68] sm:$0xf]
      %v1545 = vld [vmem:[#allocation6 + $0x6c] sm:$0xff]
      %v1546 = vld [vmem:[#allocation6 + $0x74] sm:$0xf]
      %v1547 = vld [vmem:[#allocation6 + $0x78] sm:$0xff]
      %v1548 = vld [vmem:[#allocation6 + $0x80] sm:$0xf]
      %v1549 = vld [vmem:[#allocation6 + $0x84] sm:$0xff]
      %v1550 = vld [vmem:[#allocation6 + $0x8c] sm:$0xf]
      %v1551 = vld [vmem:[#allocation6 + $0x90] sm:$0xff]
      %v1552 = vld [vmem:[#allocation6 + $0x98] sm:$0xf]
      %v1553 = vld [vmem:[#allocation6 + $0x9c] sm:$0xff]
      %v1554 = vld [vmem:[#allocation6 + $0xa4] sm:$0xf]
      %v1555 = vld [vmem:[#allocation6 + $0xa8] sm:$0xff]
      %v1556 = vld [vmem:[#allocation6 + $0xb0] sm:$0xf]
      %v1557 = vld [vmem:[#allocation6 + $0xb4] sm:$0xff]
      %v1558 = vld [vmem:[#allocation6 + $0xbc] sm:$0xf]
      %v1591 = vunpack.c.l.b16 %v1527
      %v1592 = vunpack.c.h.b16 %v1527
      %v1593 = vunpack.c.l.b16 %v1528
      %v1594 = vunpack.c.l.b16 %v1529
      %v1595 = vunpack.c.h.b16 %v1529
      %v1596 = vunpack.c.l.b16 %v1530
      %v1597 = vunpack.c.l.b16 %v1531
      %v1598 = vunpack.c.h.b16 %v1531
      %v1599 = vunpack.c.l.b16 %v1532
      %v1600 = vunpack.c.l.b16 %v1533
      %v1601 = vunpack.c.h.b16 %v1533
      %v1602 = vunpack.c.l.b16 %v1534
      %v1603 = vunpack.c.l.b16 %v1535
      %v1604 = vunpack.c.h.b16 %v1535
      %v1605 = vunpack.c.l.b16 %v1536
      %v1606 = vunpack.c.l.b16 %v1537
      %v1607 = vunpack.c.h.b16 %v1537
      %v1608 = vunpack.c.l.b16 %v1538
      %v1609 = vunpack.c.l.b16 %v1539
      %v1610 = vunpack.c.h.b16 %v1539
      %v1611 = vunpack.c.l.b16 %v1540
      %v1612 = vunpack.c.l.b16 %v1541
      %v1613 = vunpack.c.h.b16 %v1541
      %v1614 = vunpack.c.l.b16 %v1542
      %v1615 = vunpack.c.l.b16 %v1543
      %v1616 = vunpack.c.h.b16 %v1543
      %v1617 = vunpack.c.l.b16 %v1544
      %v1618 = vunpack.c.l.b16 %v1545
      %v1619 = vunpack.c.h.b16 %v1545
      %v1620 = vunpack.c.l.b16 %v1546
      %v1621 = vunpack.c.l.b16 %v1547
      %v1622 = vunpack.c.h.b16 %v1547
      %v1623 = vunpack.c.l.b16 %v1548
      %v1624 = vunpack.c.l.b16 %v1549
      %v1625 = vunpack.c.h.b16 %v1549
      %v1626 = vunpack.c.l.b16 %v1550
      %v1627 = vunpack.c.l.b16 %v1551
      %v1628 = vunpack.c.h.b16 %v1551
      %v1629 = vunpack.c.l.b16 %v1552
      %v1630 = vunpack.c.l.b16 %v1553
      %v1631 = vunpack.c.h.b16 %v1553
      %v1632 = vunpack.c.l.b16 %v1554
      %v1633 = vunpack.c.l.b16 %v1555
      %v1634 = vunpack.c.h.b16 %v1555
      %v1635 = vunpack.c.l.b16 %v1556
      %v1636 = vunpack.c.l.b16 %v1557
      %v1637 = vunpack.c.h.b16 %v1557
      %v1638 = vunpack.c.l.b16 %v1558
      %v1639 = vpack.c.b16 %v1594, %v1591
      %v1640 = vpack.c.b16 %v1595, %v1592
      %v1641 = vpack.c.b16 %v1596, %v1593
      %v1642 = vpack.c.b16 %v1600, %v1597
      %v1643 = vpack.c.b16 %v1601, %v1598
      %v1644 = vpack.c.b16 %v1602, %v1599
      %v1645 = vpack.c.b16 %v1606, %v1603
      %v1646 = vpack.c.b16 %v1607, %v1604
      %v1647 = vpack.c.b16 %v1608, %v1605
      %v1648 = vpack.c.b16 %v1612, %v1609
      %v1649 = vpack.c.b16 %v1613, %v1610
      %v1650 = vpack.c.b16 %v1614, %v1611
      %v1651 = vpack.c.b16 %v1618, %v1615
      %v1652 = vpack.c.b16 %v1619, %v1616
      %v1653 = vpack.c.b16 %v1620, %v1617
      %v1654 = vpack.c.b16 %v1624, %v1621
      %v1655 = vpack.c.b16 %v1625, %v1622
      %v1656 = vpack.c.b16 %v1626, %v1623
      %v1657 = vpack.c.b16 %v1630, %v1627
      %v1658 = vpack.c.b16 %v1631, %v1628
      %v1659 = vpack.c.b16 %v1632, %v1629
      %v1660 = vpack.c.b16 %v1636, %v1633
      %v1661 = vpack.c.b16 %v1637, %v1634
      %v1662 = vpack.c.b16 %v1638, %v1635
      %1687 = vmatprep.subr.bf16.mxu0 %v1661
      %1688 = vmatpush1.bf16.msra.mxu0 %v1660
      %1689 = vmatprep.subr.bf16.mxu0 %v1658
      %1690 = vmatpush1.bf16.msra.mxu0 %v1657
      %1691 = vmatprep.subr.bf16.mxu0 %v1655
      %1692 = vmatpush1.bf16.msra.mxu0 %v1654
      %1693 = vmatprep.subr.bf16.mxu0 %v1652
      %1694 = vmatpush1.bf16.msra.mxu0 %v1651
      %1695 = vmatprep.subr.bf16.mxu0 %v1649
      %1696 = vmatpush1.bf16.msra.mxu0 %v1648
      %1697 = vmatprep.subr.bf16.mxu0 %v1646
      %1698 = vmatpush1.bf16.msra.mxu0 %v1645
      %1699 = vmatprep.subr.bf16.mxu0 %v1643
      %1700 = vmatpush1.bf16.msra.mxu0 %v1642
      %1701 = vmatprep.subr.bf16.mxu0 %v1640
      %1702 = vmatpush1.bf16.msra.mxu0 %v1639
      %1703 = vmatprep.subr.bf16.mxu0 0
      %1704 = vmatpush2.bf16.msra.mxu0 0
      %1705 = vmatprep.subr.bf16.mxu0 0
      %1706 = vmatpush2.bf16.msra.mxu0 0
      %1707 = vmatprep.subr.bf16.mxu0 0
      %1708 = vmatpush2.bf16.msra.mxu0 0
      %1709 = vmatprep.subr.bf16.mxu0 0
      %1710 = vmatpush2.bf16.msra.mxu0 0
      %1711 = vmatprep.subr.bf16.mxu0 0
      %1712 = vmatpush2.bf16.msra.mxu0 0
      %1713 = vmatprep.subr.bf16.mxu0 0
      %1714 = vmatpush2.bf16.msra.mxu0 0
      %1715 = vmatprep.subr.bf16.mxu0 0
      %1716 = vmatpush2.bf16.msra.mxu0 0
      %1717 = vmatprep.subr.bf16.mxu0 0
      %1718 = vmatpush2.bf16.msra.mxu0 0
      %1719 = vmatprep.mubr.bf16.mxu0 0
      %1720 = vmatmul.mubr.bf16.gmra.mxu0 %v1503
      %v1721 = vpop.f32.mrf.mxu0
      %v1722 = vadd.f32 0.0, %v1721
      %v1723 = vpop.f32.mrf.mxu0
      %v1724 = vadd.f32 0.0, %v1723
      %v1725 = vpop.f32.mrf.mxu0
      %v1726 = vadd.f32 0.0, %v1725
      %v1727 = vpop.f32.mrf.mxu0
      %v1728 = vadd.f32 0.0, %v1727
      %1729 = vdwg.mxu0
      %1730 = vmatprep.subr.bf16.mxu0 0
      %1731 = vmatpush1.bf16.msra.mxu0 %v1662
      %1732 = vmatprep.subr.bf16.mxu0 0
      %1733 = vmatpush1.bf16.msra.mxu0 %v1659
      %1734 = vmatprep.subr.bf16.mxu0 0
      %1735 = vmatpush1.bf16.msra.mxu0 %v1656
      %1736 = vmatprep.subr.bf16.mxu0 0
      %1737 = vmatpush1.bf16.msra.mxu0 %v1653
      %1738 = vmatprep.subr.bf16.mxu0 0
      %1739 = vmatpush1.bf16.msra.mxu0 %v1650
      %1740 = vmatprep.subr.bf16.mxu0 0
      %1741 = vmatpush1.bf16.msra.mxu0 %v1647
      %1742 = vmatprep.subr.bf16.mxu0 0
      %1743 = vmatpush1.bf16.msra.mxu0 %v1644
      %1744 = vmatprep.subr.bf16.mxu0 0
      %1745 = vmatpush1.bf16.msra.mxu0 %v1641
      %1746 = vmatprep.subr.bf16.mxu0 0
      %1747 = vmatpush2.bf16.msra.mxu0 0
      %1748 = vmatprep.subr.bf16.mxu0 0
      %1749 = vmatpush2.bf16.msra.mxu0 0
      %1750 = vmatprep.subr.bf16.mxu0 0
      %1751 = vmatpush2.bf16.msra.mxu0 0
      %1752 = vmatprep.subr.bf16.mxu0 0
      %1753 = vmatpush2.bf16.msra.mxu0 0
      %1754 = vmatprep.subr.bf16.mxu0 0
      %1755 = vmatpush2.bf16.msra.mxu0 0
      %1756 = vmatprep.subr.bf16.mxu0 0
      %1757 = vmatpush2.bf16.msra.mxu0 0
      %1758 = vmatprep.subr.bf16.mxu0 0
      %1759 = vmatpush2.bf16.msra.mxu0 0
      %1760 = vmatprep.subr.bf16.mxu0 0
      %1761 = vmatpush2.bf16.msra.mxu0 0
      %1762 = vmatprep.mubr.bf16.mxu0 0
      %1763 = vmatmul.mubr.bf16.gmra.mxu0 %v1503
      %v1764 = vpop.f32.mrf.mxu0
      %v1765 = vadd.f32 0.0, %v1764
      %v1766 = vpop.f32.mrf.mxu0
      %v1767 = vpop.f32.mrf.mxu0
      %v1768 = vadd.f32 0.0, %v1767
      %v1769 = vpop.f32.mrf.mxu0
      %1770 = vdwg.mxu0
      %v1771 = vadd.f32 %v1521, %v1722
      %v1772 = vadd.f32 %v1522, %v1724
      %v1773 = vadd.f32 %v1524, %v1726
      %v1774 = vadd.f32 %v1525, %v1728
      %v1775 = vmul.f32 %v1771, 0.5
      %v1776 = vmul.f32 %v1772, 0.5
      %v1777 = vmul.f32 %v1773, 0.5
      %v1778 = vmul.f32 %v1774, 0.5
      %v1779 = vtanh.pop %v1775
      %v1780 = vtanh.pop %v1776
      %v1781 = vtanh.pop %v1777
      %v1782 = vtanh.pop %v1778
      %v1783 = vmul.f32 %v1779, 0.5
      %v1784 = vmul.f32 %v1780, 0.5
      %v1785 = vmul.f32 %v1781, 0.5
      %v1786 = vmul.f32 %v1782, 0.5
      %v1787 = vadd.f32 %v1783, 0.5
      %v1788 = vadd.f32 %v1784, 0.5
      %v1789 = vadd.f32 %v1785, 0.5
      %v1790 = vadd.f32 %v1786, 0.5
      %v1791 = vadd.f32 %v1765, %v598
      %v1792 = vadd.f32 %v1768, %v598
      %v1793 = vmul.f32 %v1787, %v1791
      %v1794 = vmul.f32 %v1789, %v1792
      %v1795 = vadd.f32 %v1523, %v1793
      %v1796 = vadd.f32 %v1526, %v1794
      %v1797 = vtanh.pop %v1795
      %v1798 = vtanh.pop %v1796
      %v1799 = vsub.f32 %v1501, %v1797
      %v1800 = vsub.f32 %v1502, %v1798
      %v1801 = vmul.f32 %v1788, %v1799
      %v1802 = vmul.f32 %v1790, %v1800
      %v1803 = vadd.f32 %v1797, %v1801
      %v1804 = vadd.f32 %v1798, %v1802
      %v1805 = vpack.c.bf16 %v1804, %v1803
      %v1807 = vunpack.c.l.b16 %v1805
      %v1808 = vunpack.c.h.b16 %v1805
      %v1809 = vpack.c.b16 %v1807, %v1807
      %v1810 = vpack.c.b16 %v1808, %v1808
      %s1813 = smul.addr %s1516, 4
      %s1814 = scalar_lea.vmem [#allocation2], %s1813
      %1815 = vst [vmem:[%s1814] sm:$0xf] %v1809
      %1816 = vst [vmem:[%s1814 + $0x4] sm:$0xf] %v1810
    $region66: #{rnn_forward.1} parent=1 // loop_footer
      %s605 = sadd.s32 1, %s601
    $region67: #{rnn_forward.1} parent=1 // loop_footer_branch
      %600 = sbr.rel target = $region63
    $region68: #{rnn_forward.1} parent=1 // loop_exit
      _
    %v1817 = vld [vmem:[#allocation2] sm:$0xf]
    %v1818 = vld [vmem:[#allocation2 + $0x4] sm:$0xf]
    %v1819 = vld [vmem:[#allocation2 + $0x8] sm:$0xf]
    %v1820 = vld [vmem:[#allocation2 + $0xc] sm:$0xf]
    %v1821 = vld [vmem:[#allocation2 + $0x10] sm:$0xf]
    %v1822 = vld [vmem:[#allocation2 + $0x14] sm:$0xf]
    %v1823 = vld [vmem:[#allocation2 + $0x18] sm:$0xf]
    %v1824 = vld [vmem:[#allocation2 + $0x1c] sm:$0xf]
    %v1825 = vld [vmem:[#allocation2 + $0x20] sm:$0xf]
    %v1826 = vld [vmem:[#allocation2 + $0x24] sm:$0xf]
    %v1827 = vld [vmem:[#allocation2 + $0x28] sm:$0xf]
    %v1828 = vld [vmem:[#allocation2 + $0x2c] sm:$0xf]
    %v1829 = vld [vmem:[#allocation2 + $0x30] sm:$0xf]
    %v1830 = vld [vmem:[#allocation2 + $0x34] sm:$0xf]
    %v1831 = vld [vmem:[#allocation2 + $0x38] sm:$0xf]
    %v1832 = vld [vmem:[#allocation2 + $0x3c] sm:$0xf]
    %v1833 = vld [vmem:[#allocation8] sm:$0xff]
    %v1834 = vld [vmem:[#allocation8 + $0x8] sm:$0xf]
    %v1835 = vld [vmem:[#allocation8 + $0xc] sm:$0xff]
    %v1836 = vld [vmem:[#allocation8 + $0x14] sm:$0xf]
    %v1837 = vld [vmem:[#allocation8 + $0x18] sm:$0xff]
    %v1838 = vld [vmem:[#allocation8 + $0x20] sm:$0xf]
    %v1839 = vld [vmem:[#allocation8 + $0x24] sm:$0xff]
    %v1840 = vld [vmem:[#allocation8 + $0x2c] sm:$0xf]
    %v1841 = vld [vmem:[#allocation8 + $0x30] sm:$0xff]
    %v1842 = vld [vmem:[#allocation8 + $0x38] sm:$0xf]
    %v1843 = vld [vmem:[#allocation8 + $0x3c] sm:$0xff]
    %v1844 = vld [vmem:[#allocation8 + $0x44] sm:$0xf]
    %v1845 = vld [vmem:[#allocation8 + $0x48] sm:$0xff]
    %v1846 = vld [vmem:[#allocation8 + $0x50] sm:$0xf]
    %v1847 = vld [vmem:[#allocation8 + $0x54] sm:$0xff]
    %v1848 = vld [vmem:[#allocation8 + $0x5c] sm:$0xf]
    %v1849 = vld [vmem:[#allocation8 + $0x60] sm:$0xff]
    %v1850 = vld [vmem:[#allocation8 + $0x68] sm:$0xf]
    %v1851 = vld [vmem:[#allocation8 + $0x6c] sm:$0xff]
    %v1852 = vld [vmem:[#allocation8 + $0x74] sm:$0xf]
    %v1853 = vld [vmem:[#allocation8 + $0x78] sm:$0xff]
    %v1854 = vld [vmem:[#allocation8 + $0x80] sm:$0xf]
    %v1855 = vld [vmem:[#allocation8 + $0x84] sm:$0xff]
    %v1856 = vld [vmem:[#allocation8 + $0x8c] sm:$0xf]
    %v1857 = vld [vmem:[#allocation8 + $0x90] sm:$0xff]
    %v1858 = vld [vmem:[#allocation8 + $0x98] sm:$0xf]
    %v1859 = vld [vmem:[#allocation8 + $0x9c] sm:$0xff]
    %v1860 = vld [vmem:[#allocation8 + $0xa4] sm:$0xf]
    %v1861 = vld [vmem:[#allocation8 + $0xa8] sm:$0xff]
    %v1862 = vld [vmem:[#allocation8 + $0xb0] sm:$0xf]
    %v1863 = vld [vmem:[#allocation8 + $0xb4] sm:$0xff]
    %v1864 = vld [vmem:[#allocation8 + $0xbc] sm:$0xf]
    %v1865 = vld [vmem:[%s7] sm:$0x7]
    %v1867 = vlaneseq
    %v1868 = vshrl.u32 %v1867, 7
    %v1869 = vsub.s32 0, %v1868
    %v1870 = vrot.slane %v1865, %v1869
    %v1871 = vlaneseq
    %v1872 = vshrl.u32 %v1871, 7
    %v1873 = vsub.s32 1, %v1872
    %v1874 = vrot.slane %v1865, %v1873
    %v1875 = vlaneseq
    %v1876 = vshrl.u32 %v1875, 7
    %v1877 = vsub.s32 2, %v1876
    %v1878 = vrot.slane %v1865, %v1877
    %v1898 = vunpack.c.l.b16 %v1817
    %v1899 = vunpack.c.l.b16 %v1818
    %v1900 = vunpack.c.l.b16 %v1819
    %v1901 = vunpack.c.l.b16 %v1820
    %v1902 = vunpack.c.l.b16 %v1821
    %v1903 = vunpack.c.l.b16 %v1822
    %v1904 = vunpack.c.l.b16 %v1823
    %v1905 = vunpack.c.l.b16 %v1824
    %v1906 = vunpack.c.l.b16 %v1825
    %v1907 = vunpack.c.l.b16 %v1826
    %v1908 = vunpack.c.l.b16 %v1827
    %v1909 = vunpack.c.l.b16 %v1828
    %v1910 = vunpack.c.l.b16 %v1829
    %v1911 = vunpack.c.l.b16 %v1830
    %v1912 = vunpack.c.l.b16 %v1831
    %v1913 = vunpack.c.l.b16 %v1832
    %v1914 = vpack.c.b16 %v1899, %v1898
    %v1915 = vpack.c.b16 %v1901, %v1900
    %v1916 = vpack.c.b16 %v1903, %v1902
    %v1917 = vpack.c.b16 %v1905, %v1904
    %v1918 = vpack.c.b16 %v1907, %v1906
    %v1919 = vpack.c.b16 %v1909, %v1908
    %v1920 = vpack.c.b16 %v1911, %v1910
    %v1921 = vpack.c.b16 %v1913, %v1912
    %v1962 = vunpack.c.l.b16 %v1833
    %v1963 = vunpack.c.h.b16 %v1833
    %v1964 = vunpack.c.l.b16 %v1834
    %v1965 = vunpack.c.l.b16 %v1835
    %v1966 = vunpack.c.h.b16 %v1835
    %v1967 = vunpack.c.l.b16 %v1836
    %v1968 = vunpack.c.l.b16 %v1837
    %v1969 = vunpack.c.h.b16 %v1837
    %v1970 = vunpack.c.l.b16 %v1838
    %v1971 = vunpack.c.l.b16 %v1839
    %v1972 = vunpack.c.h.b16 %v1839
    %v1973 = vunpack.c.l.b16 %v1840
    %v1974 = vunpack.c.l.b16 %v1841
    %v1975 = vunpack.c.h.b16 %v1841
    %v1976 = vunpack.c.l.b16 %v1842
    %v1977 = vunpack.c.l.b16 %v1843
    %v1978 = vunpack.c.h.b16 %v1843
    %v1979 = vunpack.c.l.b16 %v1844
    %v1980 = vunpack.c.l.b16 %v1845
    %v1981 = vunpack.c.h.b16 %v1845
    %v1982 = vunpack.c.l.b16 %v1846
    %v1983 = vunpack.c.l.b16 %v1847
    %v1984 = vunpack.c.h.b16 %v1847
    %v1985 = vunpack.c.l.b16 %v1848
    %v1986 = vunpack.c.l.b16 %v1849
    %v1987 = vunpack.c.h.b16 %v1849
    %v1988 = vunpack.c.l.b16 %v1850
    %v1989 = vunpack.c.l.b16 %v1851
    %v1990 = vunpack.c.h.b16 %v1851
    %v1991 = vunpack.c.l.b16 %v1852
    %v1992 = vunpack.c.l.b16 %v1853
    %v1993 = vunpack.c.h.b16 %v1853
    %v1994 = vunpack.c.l.b16 %v1854
    %v1995 = vunpack.c.l.b16 %v1855
    %v1996 = vunpack.c.h.b16 %v1855
    %v1997 = vunpack.c.l.b16 %v1856
    %v1998 = vunpack.c.l.b16 %v1857
    %v1999 = vunpack.c.h.b16 %v1857
    %v2000 = vunpack.c.l.b16 %v1858
    %v2001 = vunpack.c.l.b16 %v1859
    %v2002 = vunpack.c.h.b16 %v1859
    %v2003 = vunpack.c.l.b16 %v1860
    %v2004 = vunpack.c.l.b16 %v1861
    %v2005 = vunpack.c.h.b16 %v1861
    %v2006 = vunpack.c.l.b16 %v1862
    %v2007 = vunpack.c.l.b16 %v1863
    %v2008 = vunpack.c.h.b16 %v1863
    %v2009 = vunpack.c.l.b16 %v1864
    %v2010 = vpack.c.b16 %v1965, %v1962
    %v2011 = vpack.c.b16 %v1966, %v1963
    %v2012 = vpack.c.b16 %v1967, %v1964
    %v2013 = vpack.c.b16 %v1971, %v1968
    %v2014 = vpack.c.b16 %v1972, %v1969
    %v2015 = vpack.c.b16 %v1973, %v1970
    %v2016 = vpack.c.b16 %v1977, %v1974
    %v2017 = vpack.c.b16 %v1978, %v1975
    %v2018 = vpack.c.b16 %v1979, %v1976
    %v2019 = vpack.c.b16 %v1983, %v1980
    %v2020 = vpack.c.b16 %v1984, %v1981
    %v2021 = vpack.c.b16 %v1985, %v1982
    %v2022 = vpack.c.b16 %v1989, %v1986
    %v2023 = vpack.c.b16 %v1990, %v1987
    %v2024 = vpack.c.b16 %v1991, %v1988
    %v2025 = vpack.c.b16 %v1995, %v1992
    %v2026 = vpack.c.b16 %v1996, %v1993
    %v2027 = vpack.c.b16 %v1997, %v1994
    %v2028 = vpack.c.b16 %v2001, %v1998
    %v2029 = vpack.c.b16 %v2002, %v1999
    %v2030 = vpack.c.b16 %v2003, %v2000
    %v2031 = vpack.c.b16 %v2007, %v2004
    %v2032 = vpack.c.b16 %v2008, %v2005
    %v2033 = vpack.c.b16 %v2009, %v2006
    %2058 = vmatprep.subr.bf16.mxu0 %v2032
    %2059 = vmatpush1.bf16.msra.mxu0 %v2031
    %2060 = vmatprep.subr.bf16.mxu0 %v2029
    %2061 = vmatpush1.bf16.msra.mxu0 %v2028
    %2062 = vmatprep.subr.bf16.mxu0 %v2026
    %2063 = vmatpush1.bf16.msra.mxu0 %v2025
    %2064 = vmatprep.subr.bf16.mxu0 %v2023
    %2065 = vmatpush1.bf16.msra.mxu0 %v2022
    %2066 = vmatprep.subr.bf16.mxu0 %v2020
    %2067 = vmatpush1.bf16.msra.mxu0 %v2019
    %2068 = vmatprep.subr.bf16.mxu0 %v2017
    %2069 = vmatpush1.bf16.msra.mxu0 %v2016
    %2070 = vmatprep.subr.bf16.mxu0 %v2014
    %2071 = vmatpush1.bf16.msra.mxu0 %v2013
    %2072 = vmatprep.subr.bf16.mxu0 %v2011
    %2073 = vmatpush1.bf16.msra.mxu0 %v2010
    %2074 = vmatprep.subr.bf16.mxu0 0
    %2075 = vmatpush2.bf16.msra.mxu0 0
    %2076 = vmatprep.subr.bf16.mxu0 0
    %2077 = vmatpush2.bf16.msra.mxu0 0
    %2078 = vmatprep.subr.bf16.mxu0 0
    %2079 = vmatpush2.bf16.msra.mxu0 0
    %2080 = vmatprep.subr.bf16.mxu0 0
    %2081 = vmatpush2.bf16.msra.mxu0 0
    %2082 = vmatprep.subr.bf16.mxu0 0
    %2083 = vmatpush2.bf16.msra.mxu0 0
    %2084 = vmatprep.subr.bf16.mxu0 0
    %2085 = vmatpush2.bf16.msra.mxu0 0
    %2086 = vmatprep.subr.bf16.mxu0 0
    %2087 = vmatpush2.bf16.msra.mxu0 0
    %2088 = vmatprep.subr.bf16.mxu0 0
    %2089 = vmatpush2.bf16.msra.mxu0 0
    %2090 = vmatprep.mubr.bf16.mxu0 0
    %2091 = vmatmul.mubr.bf16.gmra.mxu0 %v1914
    %v2092 = vpop.f32.mrf.mxu0
    %v2093 = vadd.f32 %v1870, %v2092
    %v2094 = vpop.f32.mrf.mxu0
    %v2095 = vadd.f32 %v1874, %v2094
    %v2096 = vpop.f32.mrf.mxu0
    %v2097 = vadd.f32 %v1870, %v2096
    %v2098 = vpop.f32.mrf.mxu0
    %v2099 = vadd.f32 %v1874, %v2098
    %2100 = vmatprep.mubr.bf16.mxu0 0
    %2101 = vmatmul.mubr.bf16.gmra.mxu0 %v1915
    %v2102 = vpop.f32.mrf.mxu0
    %v2103 = vadd.f32 %v1870, %v2102
    %v2104 = vpop.f32.mrf.mxu0
    %v2105 = vadd.f32 %v1874, %v2104
    %v2106 = vpop.f32.mrf.mxu0
    %v2107 = vadd.f32 %v1870, %v2106
    %v2108 = vpop.f32.mrf.mxu0
    %v2109 = vadd.f32 %v1874, %v2108
    %2110 = vmatprep.mubr.bf16.mxu0 0
    %2111 = vmatmul.mubr.bf16.gmra.mxu0 %v1916
    %v2112 = vpop.f32.mrf.mxu0
    %v2113 = vadd.f32 %v1870, %v2112
    %v2114 = vpop.f32.mrf.mxu0
    %v2115 = vadd.f32 %v1874, %v2114
    %v2116 = vpop.f32.mrf.mxu0
    %v2117 = vadd.f32 %v1870, %v2116
    %v2118 = vpop.f32.mrf.mxu0
    %v2119 = vadd.f32 %v1874, %v2118
    %2120 = vmatprep.mubr.bf16.mxu0 0
    %2121 = vmatmul.mubr.bf16.gmra.mxu0 %v1917
    %v2122 = vpop.f32.mrf.mxu0
    %v2123 = vadd.f32 %v1870, %v2122
    %v2124 = vpop.f32.mrf.mxu0
    %v2125 = vadd.f32 %v1874, %v2124
    %v2126 = vpop.f32.mrf.mxu0
    %v2127 = vadd.f32 %v1870, %v2126
    %v2128 = vpop.f32.mrf.mxu0
    %v2129 = vadd.f32 %v1874, %v2128
    %2130 = vmatprep.mubr.bf16.mxu0 0
    %2131 = vmatmul.mubr.bf16.gmra.mxu0 %v1918
    %v2132 = vpop.f32.mrf.mxu0
    %v2133 = vadd.f32 %v1870, %v2132
    %v2134 = vpop.f32.mrf.mxu0
    %v2135 = vadd.f32 %v1874, %v2134
    %v2136 = vpop.f32.mrf.mxu0
    %v2137 = vadd.f32 %v1870, %v2136
    %v2138 = vpop.f32.mrf.mxu0
    %v2139 = vadd.f32 %v1874, %v2138
    %2140 = vmatprep.mubr.bf16.mxu0 0
    %2141 = vmatmul.mubr.bf16.gmra.mxu0 %v1919
    %v2142 = vpop.f32.mrf.mxu0
    %v2143 = vadd.f32 %v1870, %v2142
    %v2144 = vpop.f32.mrf.mxu0
    %v2145 = vadd.f32 %v1874, %v2144
    %v2146 = vpop.f32.mrf.mxu0
    %v2147 = vadd.f32 %v1870, %v2146
    %v2148 = vpop.f32.mrf.mxu0
    %v2149 = vadd.f32 %v1874, %v2148
    %2150 = vmatprep.mubr.bf16.mxu0 0
    %2151 = vmatmul.mubr.bf16.gmra.mxu0 %v1920
    %v2152 = vpop.f32.mrf.mxu0
    %v2153 = vadd.f32 %v1870, %v2152
    %v2154 = vpop.f32.mrf.mxu0
    %v2155 = vadd.f32 %v1874, %v2154
    %v2156 = vpop.f32.mrf.mxu0
    %v2157 = vadd.f32 %v1870, %v2156
    %v2158 = vpop.f32.mrf.mxu0
    %v2159 = vadd.f32 %v1874, %v2158
    %2160 = vmatprep.mubr.bf16.mxu0 0
    %2161 = vmatmul.mubr.bf16.gmra.mxu0 %v1921
    %v2162 = vpop.f32.mrf.mxu0
    %v2163 = vadd.f32 %v1870, %v2162
    %v2164 = vpop.f32.mrf.mxu0
    %v2165 = vadd.f32 %v1874, %v2164
    %v2166 = vpop.f32.mrf.mxu0
    %v2167 = vadd.f32 %v1870, %v2166
    %v2168 = vpop.f32.mrf.mxu0
    %v2169 = vadd.f32 %v1874, %v2168
    %2170 = vdwg.mxu0
    %2171 = vmatprep.subr.bf16.mxu0 0
    %2172 = vmatpush1.bf16.msra.mxu0 %v2033
    %2173 = vmatprep.subr.bf16.mxu0 0
    %2174 = vmatpush1.bf16.msra.mxu0 %v2030
    %2175 = vmatprep.subr.bf16.mxu0 0
    %2176 = vmatpush1.bf16.msra.mxu0 %v2027
    %2177 = vmatprep.subr.bf16.mxu0 0
    %2178 = vmatpush1.bf16.msra.mxu0 %v2024
    %2179 = vmatprep.subr.bf16.mxu0 0
    %2180 = vmatpush1.bf16.msra.mxu0 %v2021
    %2181 = vmatprep.subr.bf16.mxu0 0
    %2182 = vmatpush1.bf16.msra.mxu0 %v2018
    %2183 = vmatprep.subr.bf16.mxu0 0
    %2184 = vmatpush1.bf16.msra.mxu0 %v2015
    %2185 = vmatprep.subr.bf16.mxu0 0
    %2186 = vmatpush1.bf16.msra.mxu0 %v2012
    %2187 = vmatprep.subr.bf16.mxu0 0
    %2188 = vmatpush2.bf16.msra.mxu0 0
    %2189 = vmatprep.subr.bf16.mxu0 0
    %2190 = vmatpush2.bf16.msra.mxu0 0
    %2191 = vmatprep.subr.bf16.mxu0 0
    %2192 = vmatpush2.bf16.msra.mxu0 0
    %2193 = vmatprep.subr.bf16.mxu0 0
    %2194 = vmatpush2.bf16.msra.mxu0 0
    %2195 = vmatprep.subr.bf16.mxu0 0
    %2196 = vmatpush2.bf16.msra.mxu0 0
    %2197 = vmatprep.subr.bf16.mxu0 0
    %2198 = vmatpush2.bf16.msra.mxu0 0
    %2199 = vmatprep.subr.bf16.mxu0 0
    %2200 = vmatpush2.bf16.msra.mxu0 0
    %2201 = vmatprep.subr.bf16.mxu0 0
    %2202 = vmatpush2.bf16.msra.mxu0 0
    %2203 = vmatprep.mubr.bf16.mxu0 0
    %2204 = vmatmul.mubr.bf16.gmra.mxu0 %v1914
    %v2205 = vpop.f32.mrf.mxu0
    %v2206 = vadd.f32 %v1878, %v2205
    %v2207 = vpop.f32.mrf.mxu0
    %v2208 = vpop.f32.mrf.mxu0
    %v2209 = vadd.f32 %v1878, %v2208
    %v2210 = vpop.f32.mrf.mxu0
    %2211 = vmatprep.mubr.bf16.mxu0 0
    %2212 = vmatmul.mubr.bf16.gmra.mxu0 %v1915
    %v2213 = vpop.f32.mrf.mxu0
    %v2214 = vadd.f32 %v1878, %v2213
    %v2215 = vpop.f32.mrf.mxu0
    %v2216 = vpop.f32.mrf.mxu0
    %v2217 = vadd.f32 %v1878, %v2216
    %v2218 = vpop.f32.mrf.mxu0
    %2219 = vmatprep.mubr.bf16.mxu0 0
    %2220 = vmatmul.mubr.bf16.gmra.mxu0 %v1916
    %v2221 = vpop.f32.mrf.mxu0
    %v2222 = vadd.f32 %v1878, %v2221
    %v2223 = vpop.f32.mrf.mxu0
    %v2224 = vpop.f32.mrf.mxu0
    %v2225 = vadd.f32 %v1878, %v2224
    %v2226 = vpop.f32.mrf.mxu0
    %2227 = vmatprep.mubr.bf16.mxu0 0
    %2228 = vmatmul.mubr.bf16.gmra.mxu0 %v1917
    %v2229 = vpop.f32.mrf.mxu0
    %v2230 = vadd.f32 %v1878, %v2229
    %v2231 = vpop.f32.mrf.mxu0
    %v2232 = vpop.f32.mrf.mxu0
    %v2233 = vadd.f32 %v1878, %v2232
    %v2234 = vpop.f32.mrf.mxu0
    %2235 = vmatprep.mubr.bf16.mxu0 0
    %2236 = vmatmul.mubr.bf16.gmra.mxu0 %v1918
    %v2237 = vpop.f32.mrf.mxu0
    %v2238 = vadd.f32 %v1878, %v2237
    %v2239 = vpop.f32.mrf.mxu0
    %v2240 = vpop.f32.mrf.mxu0
    %v2241 = vadd.f32 %v1878, %v2240
    %v2242 = vpop.f32.mrf.mxu0
    %2243 = vmatprep.mubr.bf16.mxu0 0
    %2244 = vmatmul.mubr.bf16.gmra.mxu0 %v1919
    %v2245 = vpop.f32.mrf.mxu0
    %v2246 = vadd.f32 %v1878, %v2245
    %v2247 = vpop.f32.mrf.mxu0
    %v2248 = vpop.f32.mrf.mxu0
    %v2249 = vadd.f32 %v1878, %v2248
    %v2250 = vpop.f32.mrf.mxu0
    %2251 = vmatprep.mubr.bf16.mxu0 0
    %2252 = vmatmul.mubr.bf16.gmra.mxu0 %v1920
    %v2253 = vpop.f32.mrf.mxu0
    %v2254 = vadd.f32 %v1878, %v2253
    %v2255 = vpop.f32.mrf.mxu0
    %v2256 = vpop.f32.mrf.mxu0
    %v2257 = vadd.f32 %v1878, %v2256
    %v2258 = vpop.f32.mrf.mxu0
    %2259 = vmatprep.mubr.bf16.mxu0 0
    %2260 = vmatmul.mubr.bf16.gmra.mxu0 %v1921
    %v2261 = vpop.f32.mrf.mxu0
    %v2262 = vadd.f32 %v1878, %v2261
    %v2263 = vpop.f32.mrf.mxu0
    %v2264 = vpop.f32.mrf.mxu0
    %v2265 = vadd.f32 %v1878, %v2264
    %v2266 = vpop.f32.mrf.mxu0
    %2267 = vdwg.mxu0
    %2268 = vst [vmem:[#allocation3] sm:$0xff] %v2093
    %2269 = vst [vmem:[#allocation3 + $0x8] sm:$0xff] %v2095
    %2270 = vst [vmem:[#allocation3 + $0x10] sm:$0xff] %v2206
    %2271 = vst [vmem:[#allocation3 + $0x18] sm:$0xff] %v2097
    %2272 = vst [vmem:[#allocation3 + $0x20] sm:$0xff] %v2099
    %2273 = vst [vmem:[#allocation3 + $0x28] sm:$0xff] %v2209
    %2274 = vst [vmem:[#allocation3 + $0x30] sm:$0xff] %v2103
    %2275 = vst [vmem:[#allocation3 + $0x38] sm:$0xff] %v2105
    %2276 = vst [vmem:[#allocation3 + $0x40] sm:$0xff] %v2214
    %2277 = vst [vmem:[#allocation3 + $0x48] sm:$0xff] %v2107
    %2278 = vst [vmem:[#allocation3 + $0x50] sm:$0xff] %v2109
    %2279 = vst [vmem:[#allocation3 + $0x58] sm:$0xff] %v2217
    %2280 = vst [vmem:[#allocation3 + $0x60] sm:$0xff] %v2113
    %2281 = vst [vmem:[#allocation3 + $0x68] sm:$0xff] %v2115
    %2282 = vst [vmem:[#allocation3 + $0x70] sm:$0xff] %v2222
    %2283 = vst [vmem:[#allocation3 + $0x78] sm:$0xff] %v2117
    %2284 = vst [vmem:[#allocation3 + $0x80] sm:$0xff] %v2119
    %2285 = vst [vmem:[#allocation3 + $0x88] sm:$0xff] %v2225
    %2286 = vst [vmem:[#allocation3 + $0x90] sm:$0xff] %v2123
    %2287 = vst [vmem:[#allocation3 + $0x98] sm:$0xff] %v2125
    %2288 = vst [vmem:[#allocation3 + $0xa0] sm:$0xff] %v2230
    %2289 = vst [vmem:[#allocation3 + $0xa8] sm:$0xff] %v2127
    %2290 = vst [vmem:[#allocation3 + $0xb0] sm:$0xff] %v2129
    %2291 = vst [vmem:[#allocation3 + $0xb8] sm:$0xff] %v2233
    %2292 = vst [vmem:[#allocation3 + $0xc0] sm:$0xff] %v2133
    %2293 = vst [vmem:[#allocation3 + $0xc8] sm:$0xff] %v2135
    %2294 = vst [vmem:[#allocation3 + $0xd0] sm:$0xff] %v2238
    %2295 = vst [vmem:[#allocation3 + $0xd8] sm:$0xff] %v2137
    %2296 = vst [vmem:[#allocation3 + $0xe0] sm:$0xff] %v2139
    %2297 = vst [vmem:[#allocation3 + $0xe8] sm:$0xff] %v2241
    %2298 = vst [vmem:[#allocation3 + $0xf0] sm:$0xff] %v2143
    %2299 = vst [vmem:[#allocation3 + $0xf8] sm:$0xff] %v2145
    %2300 = vst [vmem:[#allocation3 + $0x100] sm:$0xff] %v2246
    %2301 = vst [vmem:[#allocation3 + $0x108] sm:$0xff] %v2147
    %2302 = vst [vmem:[#allocation3 + $0x110] sm:$0xff] %v2149
    %2303 = vst [vmem:[#allocation3 + $0x118] sm:$0xff] %v2249
    %2304 = vst [vmem:[#allocation3 + $0x120] sm:$0xff] %v2153
    %2305 = vst [vmem:[#allocation3 + $0x128] sm:$0xff] %v2155
    %2306 = vst [vmem:[#allocation3 + $0x130] sm:$0xff] %v2254
    %2307 = vst [vmem:[#allocation3 + $0x138] sm:$0xff] %v2157
    %2308 = vst [vmem:[#allocation3 + $0x140] sm:$0xff] %v2159
    %2309 = vst [vmem:[#allocation3 + $0x148] sm:$0xff] %v2257
    %2310 = vst [vmem:[#allocation3 + $0x150] sm:$0xff] %v2163
    %2311 = vst [vmem:[#allocation3 + $0x158] sm:$0xff] %v2165
    %2312 = vst [vmem:[#allocation3 + $0x160] sm:$0xff] %v2262
    %2313 = vst [vmem:[#allocation3 + $0x168] sm:$0xff] %v2167
    %2314 = vst [vmem:[#allocation3 + $0x170] sm:$0xff] %v2169
    %2315 = vst [vmem:[#allocation3 + $0x178] sm:$0xff] %v2265
    %v2316 = vld [vmem:[%s8] sm:$0x1]
    %v2318 = vlaneseq
    %v2319 = vshrl.u32 %v2318, 7
    %v2320 = vsub.s32 0, %v2319
    %v2321 = vrot.slane %v2316, %v2320
    loop: start=0, step=1, limit=2
    $region69: #{rnn_forward.1} parent=1 // loop_pre_header
      _
    $region70: #{rnn_forward.1} parent=1 // loop_header
      %s2324 = sphi 0, %s2328
      %p2325 = scmp.ge.s32.totalorder %s2324, 2
      %v2329 = vphi 0.0, %v3013
      %v2330 = vphi 0.0, %v3014
    $region71: #{rnn_forward.1} parent=1 // loop_header_branch
      %2327 = sbr.rel (%p2325) target = $region75
    $region72: #{rnn_forward.1} parent=1 // loop_body
      %s2331 = smul.u32 %s2324, 64
      %s2332 = sshra.s32 %s2331, 3
      %s2333 = sand.u32 %s2331, 7
      %s2334 = smul.u32 %s2332, 3
      %s2335 = smul.addr %s2334, 8
      %s2336 = scalar_lea.vmem [#allocation3], %s2335
      %v2337 = vld [vmem:[%s2336] sm:$0xff]
      %v2338 = vld [vmem:[%s2336 + $0x8] sm:$0xff]
      %v2339 = vld [vmem:[%s2336 + $0x10] sm:$0xff]
      %v2340 = vld [vmem:[%s2336 + $0x18] sm:$0xff]
      %v2341 = vld [vmem:[%s2336 + $0x20] sm:$0xff]
      %v2342 = vld [vmem:[%s2336 + $0x28] sm:$0xff]
      %v2343 = vpack.c.bf16 %v2330, %v2329
      %v2344 = vld [vmem:[#allocation9] sm:$0xff]
      %v2345 = vld [vmem:[#allocation9 + $0x8] sm:$0xf]
      %v2346 = vld [vmem:[#allocation9 + $0xc] sm:$0xff]
      %v2347 = vld [vmem:[#allocation9 + $0x14] sm:$0xf]
      %v2348 = vld [vmem:[#allocation9 + $0x18] sm:$0xff]
      %v2349 = vld [vmem:[#allocation9 + $0x20] sm:$0xf]
      %v2350 = vld [vmem:[#allocation9 + $0x24] sm:$0xff]
      %v2351 = vld [vmem:[#allocation9 + $0x2c] sm:$0xf]
      %v2352 = vld [vmem:[#allocation9 + $0x30] sm:$0xff]
      %v2353 = vld [vmem:[#allocation9 + $0x38] sm:$0xf]
      %v2354 = vld [vmem:[#allocation9 + $0x3c] sm:$0xff]
      %v2355 = vld [vmem:[#allocation9 + $0x44] sm:$0xf]
      %v2356 = vld [vmem:[#allocation9 + $0x48] sm:$0xff]
      %v2357 = vld [vmem:[#allocation9 + $0x50] sm:$0xf]
      %v2358 = vld [vmem:[#allocation9 + $0x54] sm:$0xff]
      %v2359 = vld [vmem:[#allocation9 + $0x5c] sm:$0xf]
      %v2360 = vld [vmem:[#allocation9 + $0x60] sm:$0xff]
      %v2361 = vld [vmem:[#allocation9 + $0x68] sm:$0xf]
      %v2362 = vld [vmem:[#allocation9 + $0x6c] sm:$0xff]
      %v2363 = vld [vmem:[#allocation9 + $0x74] sm:$0xf]
      %v2364 = vld [vmem:[#allocation9 + $0x78] sm:$0xff]
      %v2365 = vld [vmem:[#allocation9 + $0x80] sm:$0xf]
      %v2366 = vld [vmem:[#allocation9 + $0x84] sm:$0xff]
      %v2367 = vld [vmem:[#allocation9 + $0x8c] sm:$0xf]
      %v2368 = vld [vmem:[#allocation9 + $0x90] sm:$0xff]
      %v2369 = vld [vmem:[#allocation9 + $0x98] sm:$0xf]
      %v2370 = vld [vmem:[#allocation9 + $0x9c] sm:$0xff]
      %v2371 = vld [vmem:[#allocation9 + $0xa4] sm:$0xf]
      %v2372 = vld [vmem:[#allocation9 + $0xa8] sm:$0xff]
      %v2373 = vld [vmem:[#allocation9 + $0xb0] sm:$0xf]
      %v2374 = vld [vmem:[#allocation9 + $0xb4] sm:$0xff]
      %v2375 = vld [vmem:[#allocation9 + $0xbc] sm:$0xf]
      %v2408 = vunpack.c.l.b16 %v2344
      %v2409 = vunpack.c.h.b16 %v2344
      %v2410 = vunpack.c.l.b16 %v2345
      %v2411 = vunpack.c.l.b16 %v2346
      %v2412 = vunpack.c.h.b16 %v2346
      %v2413 = vunpack.c.l.b16 %v2347
      %v2414 = vunpack.c.l.b16 %v2348
      %v2415 = vunpack.c.h.b16 %v2348
      %v2416 = vunpack.c.l.b16 %v2349
      %v2417 = vunpack.c.l.b16 %v2350
      %v2418 = vunpack.c.h.b16 %v2350
      %v2419 = vunpack.c.l.b16 %v2351
      %v2420 = vunpack.c.l.b16 %v2352
      %v2421 = vunpack.c.h.b16 %v2352
      %v2422 = vunpack.c.l.b16 %v2353
      %v2423 = vunpack.c.l.b16 %v2354
      %v2424 = vunpack.c.h.b16 %v2354
      %v2425 = vunpack.c.l.b16 %v2355
      %v2426 = vunpack.c.l.b16 %v2356
      %v2427 = vunpack.c.h.b16 %v2356
      %v2428 = vunpack.c.l.b16 %v2357
      %v2429 = vunpack.c.l.b16 %v2358
      %v2430 = vunpack.c.h.b16 %v2358
      %v2431 = vunpack.c.l.b16 %v2359
      %v2432 = vunpack.c.l.b16 %v2360
      %v2433 = vunpack.c.h.b16 %v2360
      %v2434 = vunpack.c.l.b16 %v2361
      %v2435 = vunpack.c.l.b16 %v2362
      %v2436 = vunpack.c.h.b16 %v2362
      %v2437 = vunpack.c.l.b16 %v2363
      %v2438 = vunpack.c.l.b16 %v2364
      %v2439 = vunpack.c.h.b16 %v2364
      %v2440 = vunpack.c.l.b16 %v2365
      %v2441 = vunpack.c.l.b16 %v2366
      %v2442 = vunpack.c.h.b16 %v2366
      %v2443 = vunpack.c.l.b16 %v2367
      %v2444 = vunpack.c.l.b16 %v2368
      %v2445 = vunpack.c.h.b16 %v2368
      %v2446 = vunpack.c.l.b16 %v2369
      %v2447 = vunpack.c.l.b16 %v2370
      %v2448 = vunpack.c.h.b16 %v2370
      %v2449 = vunpack.c.l.b16 %v2371
      %v2450 = vunpack.c.l.b16 %v2372
      %v2451 = vunpack.c.h.b16 %v2372
      %v2452 = vunpack.c.l.b16 %v2373
      %v2453 = vunpack.c.l.b16 %v2374
      %v2454 = vunpack.c.h.b16 %v2374
      %v2455 = vunpack.c.l.b16 %v2375
      %v2456 = vpack.c.b16 %v2411, %v2408
      %v2457 = vpack.c.b16 %v2412, %v2409
      %v2458 = vpack.c.b16 %v2413, %v2410
      %v2459 = vpack.c.b16 %v2417, %v2414
      %v2460 = vpack.c.b16 %v2418, %v2415
      %v2461 = vpack.c.b16 %v2419, %v2416
      %v2462 = vpack.c.b16 %v2423, %v2420
      %v2463 = vpack.c.b16 %v2424, %v2421
      %v2464 = vpack.c.b16 %v2425, %v2422
      %v2465 = vpack.c.b16 %v2429, %v2426
      %v2466 = vpack.c.b16 %v2430, %v2427
      %v2467 = vpack.c.b16 %v2431, %v2428
      %v2468 = vpack.c.b16 %v2435, %v2432
      %v2469 = vpack.c.b16 %v2436, %v2433
      %v2470 = vpack.c.b16 %v2437, %v2434
      %v2471 = vpack.c.b16 %v2441, %v2438
      %v2472 = vpack.c.b16 %v2442, %v2439
      %v2473 = vpack.c.b16 %v2443, %v2440
      %v2474 = vpack.c.b16 %v2447, %v2444
      %v2475 = vpack.c.b16 %v2448, %v2445
      %v2476 = vpack.c.b16 %v2449, %v2446
      %v2477 = vpack.c.b16 %v2453, %v2450
      %v2478 = vpack.c.b16 %v2454, %v2451
      %v2479 = vpack.c.b16 %v2455, %v2452
      %2504 = vmatprep.subr.bf16.mxu0 %v2478
      %2505 = vmatpush1.bf16.msra.mxu0 %v2477
      %2506 = vmatprep.subr.bf16.mxu0 %v2475
      %2507 = vmatpush1.bf16.msra.mxu0 %v2474
      %2508 = vmatprep.subr.bf16.mxu0 %v2472
      %2509 = vmatpush1.bf16.msra.mxu0 %v2471
      %2510 = vmatprep.subr.bf16.mxu0 %v2469
      %2511 = vmatpush1.bf16.msra.mxu0 %v2468
      %2512 = vmatprep.subr.bf16.mxu0 %v2466
      %2513 = vmatpush1.bf16.msra.mxu0 %v2465
      %2514 = vmatprep.subr.bf16.mxu0 %v2463
      %2515 = vmatpush1.bf16.msra.mxu0 %v2462
      %2516 = vmatprep.subr.bf16.mxu0 %v2460
      %2517 = vmatpush1.bf16.msra.mxu0 %v2459
      %2518 = vmatprep.subr.bf16.mxu0 %v2457
      %2519 = vmatpush1.bf16.msra.mxu0 %v2456
      %2520 = vmatprep.subr.bf16.mxu0 0
      %2521 = vmatpush2.bf16.msra.mxu0 0
      %2522 = vmatprep.subr.bf16.mxu0 0
      %2523 = vmatpush2.bf16.msra.mxu0 0
      %2524 = vmatprep.subr.bf16.mxu0 0
      %2525 = vmatpush2.bf16.msra.mxu0 0
      %2526 = vmatprep.subr.bf16.mxu0 0
      %2527 = vmatpush2.bf16.msra.mxu0 0
      %2528 = vmatprep.subr.bf16.mxu0 0
      %2529 = vmatpush2.bf16.msra.mxu0 0
      %2530 = vmatprep.subr.bf16.mxu0 0
      %2531 = vmatpush2.bf16.msra.mxu0 0
      %2532 = vmatprep.subr.bf16.mxu0 0
      %2533 = vmatpush2.bf16.msra.mxu0 0
      %2534 = vmatprep.subr.bf16.mxu0 0
      %2535 = vmatpush2.bf16.msra.mxu0 0
      %2536 = vmatprep.mubr.bf16.mxu0 0
      %2537 = vmatmul.mubr.bf16.gmra.mxu0 %v2343
      %v2538 = vpop.f32.mrf.mxu0
      %v2539 = vadd.f32 0.0, %v2538
      %v2540 = vpop.f32.mrf.mxu0
      %v2541 = vadd.f32 0.0, %v2540
      %v2542 = vpop.f32.mrf.mxu0
      %v2543 = vadd.f32 0.0, %v2542
      %v2544 = vpop.f32.mrf.mxu0
      %v2545 = vadd.f32 0.0, %v2544
      %2546 = vdwg.mxu0
      %2547 = vmatprep.subr.bf16.mxu0 0
      %2548 = vmatpush1.bf16.msra.mxu0 %v2479
      %2549 = vmatprep.subr.bf16.mxu0 0
      %2550 = vmatpush1.bf16.msra.mxu0 %v2476
      %2551 = vmatprep.subr.bf16.mxu0 0
      %2552 = vmatpush1.bf16.msra.mxu0 %v2473
      %2553 = vmatprep.subr.bf16.mxu0 0
      %2554 = vmatpush1.bf16.msra.mxu0 %v2470
      %2555 = vmatprep.subr.bf16.mxu0 0
      %2556 = vmatpush1.bf16.msra.mxu0 %v2467
      %2557 = vmatprep.subr.bf16.mxu0 0
      %2558 = vmatpush1.bf16.msra.mxu0 %v2464
      %2559 = vmatprep.subr.bf16.mxu0 0
      %2560 = vmatpush1.bf16.msra.mxu0 %v2461
      %2561 = vmatprep.subr.bf16.mxu0 0
      %2562 = vmatpush1.bf16.msra.mxu0 %v2458
      %2563 = vmatprep.subr.bf16.mxu0 0
      %2564 = vmatpush2.bf16.msra.mxu0 0
      %2565 = vmatprep.subr.bf16.mxu0 0
      %2566 = vmatpush2.bf16.msra.mxu0 0
      %2567 = vmatprep.subr.bf16.mxu0 0
      %2568 = vmatpush2.bf16.msra.mxu0 0
      %2569 = vmatprep.subr.bf16.mxu0 0
      %2570 = vmatpush2.bf16.msra.mxu0 0
      %2571 = vmatprep.subr.bf16.mxu0 0
      %2572 = vmatpush2.bf16.msra.mxu0 0
      %2573 = vmatprep.subr.bf16.mxu0 0
      %2574 = vmatpush2.bf16.msra.mxu0 0
      %2575 = vmatprep.subr.bf16.mxu0 0
      %2576 = vmatpush2.bf16.msra.mxu0 0
      %2577 = vmatprep.subr.bf16.mxu0 0
      %2578 = vmatpush2.bf16.msra.mxu0 0
      %2579 = vmatprep.mubr.bf16.mxu0 0
      %2580 = vmatmul.mubr.bf16.gmra.mxu0 %v2343
      %v2581 = vpop.f32.mrf.mxu0
      %v2582 = vadd.f32 0.0, %v2581
      %v2583 = vpop.f32.mrf.mxu0
      %v2584 = vpop.f32.mrf.mxu0
      %v2585 = vadd.f32 0.0, %v2584
      %v2586 = vpop.f32.mrf.mxu0
      %2587 = vdwg.mxu0
      %v2588 = vadd.f32 %v2337, %v2539
      %v2589 = vadd.f32 %v2338, %v2541
      %v2590 = vadd.f32 %v2340, %v2543
      %v2591 = vadd.f32 %v2341, %v2545
      %v2592 = vmul.f32 %v2588, 0.5
      %v2593 = vmul.f32 %v2589, 0.5
      %v2594 = vmul.f32 %v2590, 0.5
      %v2595 = vmul.f32 %v2591, 0.5
      %v2596 = vtanh.pop %v2592
      %v2597 = vtanh.pop %v2593
      %v2598 = vtanh.pop %v2594
      %v2599 = vtanh.pop %v2595
      %v2600 = vmul.f32 %v2596, 0.5
      %v2601 = vmul.f32 %v2597, 0.5
      %v2602 = vmul.f32 %v2598, 0.5
      %v2603 = vmul.f32 %v2599, 0.5
      %v2604 = vadd.f32 %v2600, 0.5
      %v2605 = vadd.f32 %v2601, 0.5
      %v2606 = vadd.f32 %v2602, 0.5
      %v2607 = vadd.f32 %v2603, 0.5
      %v2608 = vadd.f32 %v2582, %v2321
      %v2609 = vadd.f32 %v2585, %v2321
      %v2610 = vmul.f32 %v2604, %v2608
      %v2611 = vmul.f32 %v2606, %v2609
      %v2612 = vadd.f32 %v2339, %v2610
      %v2613 = vadd.f32 %v2342, %v2611
      %v2614 = vtanh.pop %v2612
      %v2615 = vtanh.pop %v2613
      %v2616 = vsub.f32 %v2329, %v2614
      %v2617 = vsub.f32 %v2330, %v2615
      %v2618 = vmul.f32 %v2605, %v2616
      %v2619 = vmul.f32 %v2607, %v2617
      %v2620 = vadd.f32 %v2614, %v2618
      %v2621 = vadd.f32 %v2615, %v2619
      %s2622 = sadd.s32 %s2331, 16
      %s2623 = sshra.s32 %s2622, 3
      %s2624 = sand.u32 %s2622, 7
      %s2625 = smul.u32 %s2623, 3
      %s2626 = smul.addr %s2625, 8
      %s2627 = scalar_lea.vmem [#allocation3], %s2626
      %v2628 = vld [vmem:[%s2627] sm:$0xff]
      %v2629 = vld [vmem:[%s2627 + $0x8] sm:$0xff]
      %v2630 = vld [vmem:[%s2627 + $0x10] sm:$0xff]
      %v2631 = vld [vmem:[%s2627 + $0x18] sm:$0xff]
      %v2632 = vld [vmem:[%s2627 + $0x20] sm:$0xff]
      %v2633 = vld [vmem:[%s2627 + $0x28] sm:$0xff]
      %v2634 = vpack.c.bf16 %v2621, %v2620
      %2635 = vmatprep.subr.bf16.mxu0 %v2478
      %2636 = vmatpush1.bf16.msra.mxu0 %v2477
      %2637 = vmatprep.subr.bf16.mxu0 %v2475
      %2638 = vmatpush1.bf16.msra.mxu0 %v2474
      %2639 = vmatprep.subr.bf16.mxu0 %v2472
      %2640 = vmatpush1.bf16.msra.mxu0 %v2471
      %2641 = vmatprep.subr.bf16.mxu0 %v2469
      %2642 = vmatpush1.bf16.msra.mxu0 %v2468
      %2643 = vmatprep.subr.bf16.mxu0 %v2466
      %2644 = vmatpush1.bf16.msra.mxu0 %v2465
      %2645 = vmatprep.subr.bf16.mxu0 %v2463
      %2646 = vmatpush1.bf16.msra.mxu0 %v2462
      %2647 = vmatprep.subr.bf16.mxu0 %v2460
      %2648 = vmatpush1.bf16.msra.mxu0 %v2459
      %2649 = vmatprep.subr.bf16.mxu0 %v2457
      %2650 = vmatpush1.bf16.msra.mxu0 %v2456
      %2651 = vmatprep.subr.bf16.mxu0 0
      %2652 = vmatpush2.bf16.msra.mxu0 0
      %2653 = vmatprep.subr.bf16.mxu0 0
      %2654 = vmatpush2.bf16.msra.mxu0 0
      %2655 = vmatprep.subr.bf16.mxu0 0
      %2656 = vmatpush2.bf16.msra.mxu0 0
      %2657 = vmatprep.subr.bf16.mxu0 0
      %2658 = vmatpush2.bf16.msra.mxu0 0
      %2659 = vmatprep.subr.bf16.mxu0 0
      %2660 = vmatpush2.bf16.msra.mxu0 0
      %2661 = vmatprep.subr.bf16.mxu0 0
      %2662 = vmatpush2.bf16.msra.mxu0 0
      %2663 = vmatprep.subr.bf16.mxu0 0
      %2664 = vmatpush2.bf16.msra.mxu0 0
      %2665 = vmatprep.subr.bf16.mxu0 0
      %2666 = vmatpush2.bf16.msra.mxu0 0
      %2667 = vmatprep.mubr.bf16.mxu0 0
      %2668 = vmatmul.mubr.bf16.gmra.mxu0 %v2634
      %v2669 = vpop.f32.mrf.mxu0
      %v2670 = vadd.f32 0.0, %v2669
      %v2671 = vpop.f32.mrf.mxu0
      %v2672 = vadd.f32 0.0, %v2671
      %v2673 = vpop.f32.mrf.mxu0
      %v2674 = vadd.f32 0.0, %v2673
      %v2675 = vpop.f32.mrf.mxu0
      %v2676 = vadd.f32 0.0, %v2675
      %2677 = vdwg.mxu0
      %2678 = vmatprep.subr.bf16.mxu0 0
      %2679 = vmatpush1.bf16.msra.mxu0 %v2479
      %2680 = vmatprep.subr.bf16.mxu0 0
      %2681 = vmatpush1.bf16.msra.mxu0 %v2476
      %2682 = vmatprep.subr.bf16.mxu0 0
      %2683 = vmatpush1.bf16.msra.mxu0 %v2473
      %2684 = vmatprep.subr.bf16.mxu0 0
      %2685 = vmatpush1.bf16.msra.mxu0 %v2470
      %2686 = vmatprep.subr.bf16.mxu0 0
      %2687 = vmatpush1.bf16.msra.mxu0 %v2467
      %2688 = vmatprep.subr.bf16.mxu0 0
      %2689 = vmatpush1.bf16.msra.mxu0 %v2464
      %2690 = vmatprep.subr.bf16.mxu0 0
      %2691 = vmatpush1.bf16.msra.mxu0 %v2461
      %2692 = vmatprep.subr.bf16.mxu0 0
      %2693 = vmatpush1.bf16.msra.mxu0 %v2458
      %2694 = vmatprep.subr.bf16.mxu0 0
      %2695 = vmatpush2.bf16.msra.mxu0 0
      %2696 = vmatprep.subr.bf16.mxu0 0
      %2697 = vmatpush2.bf16.msra.mxu0 0
      %2698 = vmatprep.subr.bf16.mxu0 0
      %2699 = vmatpush2.bf16.msra.mxu0 0
      %2700 = vmatprep.subr.bf16.mxu0 0
      %2701 = vmatpush2.bf16.msra.mxu0 0
      %2702 = vmatprep.subr.bf16.mxu0 0
      %2703 = vmatpush2.bf16.msra.mxu0 0
      %2704 = vmatprep.subr.bf16.mxu0 0
      %2705 = vmatpush2.bf16.msra.mxu0 0
      %2706 = vmatprep.subr.bf16.mxu0 0
      %2707 = vmatpush2.bf16.msra.mxu0 0
      %2708 = vmatprep.subr.bf16.mxu0 0
      %2709 = vmatpush2.bf16.msra.mxu0 0
      %2710 = vmatprep.mubr.bf16.mxu0 0
      %2711 = vmatmul.mubr.bf16.gmra.mxu0 %v2634
      %v2712 = vpop.f32.mrf.mxu0
      %v2713 = vadd.f32 0.0, %v2712
      %v2714 = vpop.f32.mrf.mxu0
      %v2715 = vpop.f32.mrf.mxu0
      %v2716 = vadd.f32 0.0, %v2715
      %v2717 = vpop.f32.mrf.mxu0
      %2718 = vdwg.mxu0
      %v2719 = vadd.f32 %v2628, %v2670
      %v2720 = vadd.f32 %v2629, %v2672
      %v2721 = vadd.f32 %v2631, %v2674
      %v2722 = vadd.f32 %v2632, %v2676
      %v2723 = vmul.f32 %v2719, 0.5
      %v2724 = vmul.f32 %v2720, 0.5
      %v2725 = vmul.f32 %v2721, 0.5
      %v2726 = vmul.f32 %v2722, 0.5
      %v2727 = vtanh.pop %v2723
      %v2728 = vtanh.pop %v2724
      %v2729 = vtanh.pop %v2725
      %v2730 = vtanh.pop %v2726
      %v2731 = vmul.f32 %v2727, 0.5
      %v2732 = vmul.f32 %v2728, 0.5
      %v2733 = vmul.f32 %v2729, 0.5
      %v2734 = vmul.f32 %v2730, 0.5
      %v2735 = vadd.f32 %v2731, 0.5
      %v2736 = vadd.f32 %v2732, 0.5
      %v2737 = vadd.f32 %v2733, 0.5
      %v2738 = vadd.f32 %v2734, 0.5
      %v2739 = vadd.f32 %v2713, %v2321
      %v2740 = vadd.f32 %v2716, %v2321
      %v2741 = vmul.f32 %v2735, %v2739
      %v2742 = vmul.f32 %v2737, %v2740
      %v2743 = vadd.f32 %v2630, %v2741
      %v2744 = vadd.f32 %v2633, %v2742
      %v2745 = vtanh.pop %v2743
      %v2746 = vtanh.pop %v2744
      %v2747 = vsub.f32 %v2620, %v2745
      %v2748 = vsub.f32 %v2621, %v2746
      %v2749 = vmul.f32 %v2736, %v2747
      %v2750 = vmul.f32 %v2738, %v2748
      %v2751 = vadd.f32 %v2745, %v2749
      %v2752 = vadd.f32 %v2746, %v2750
      %s2753 = sadd.s32 %s2331, 32
      %s2754 = sshra.s32 %s2753, 3
      %s2755 = sand.u32 %s2753, 7
      %s2756 = smul.u32 %s2754, 3
      %s2757 = smul.addr %s2756, 8
      %s2758 = scalar_lea.vmem [#allocation3], %s2757
      %v2759 = vld [vmem:[%s2758] sm:$0xff]
      %v2760 = vld [vmem:[%s2758 + $0x8] sm:$0xff]
      %v2761 = vld [vmem:[%s2758 + $0x10] sm:$0xff]
      %v2762 = vld [vmem:[%s2758 + $0x18] sm:$0xff]
      %v2763 = vld [vmem:[%s2758 + $0x20] sm:$0xff]
      %v2764 = vld [vmem:[%s2758 + $0x28] sm:$0xff]
      %v2765 = vpack.c.bf16 %v2752, %v2751
      %2766 = vmatprep.subr.bf16.mxu0 %v2478
      %2767 = vmatpush1.bf16.msra.mxu0 %v2477
      %2768 = vmatprep.subr.bf16.mxu0 %v2475
      %2769 = vmatpush1.bf16.msra.mxu0 %v2474
      %2770 = vmatprep.subr.bf16.mxu0 %v2472
      %2771 = vmatpush1.bf16.msra.mxu0 %v2471
      %2772 = vmatprep.subr.bf16.mxu0 %v2469
      %2773 = vmatpush1.bf16.msra.mxu0 %v2468
      %2774 = vmatprep.subr.bf16.mxu0 %v2466
      %2775 = vmatpush1.bf16.msra.mxu0 %v2465
      %2776 = vmatprep.subr.bf16.mxu0 %v2463
      %2777 = vmatpush1.bf16.msra.mxu0 %v2462
      %2778 = vmatprep.subr.bf16.mxu0 %v2460
      %2779 = vmatpush1.bf16.msra.mxu0 %v2459
      %2780 = vmatprep.subr.bf16.mxu0 %v2457
      %2781 = vmatpush1.bf16.msra.mxu0 %v2456
      %2782 = vmatprep.subr.bf16.mxu0 0
      %2783 = vmatpush2.bf16.msra.mxu0 0
      %2784 = vmatprep.subr.bf16.mxu0 0
      %2785 = vmatpush2.bf16.msra.mxu0 0
      %2786 = vmatprep.subr.bf16.mxu0 0
      %2787 = vmatpush2.bf16.msra.mxu0 0
      %2788 = vmatprep.subr.bf16.mxu0 0
      %2789 = vmatpush2.bf16.msra.mxu0 0
      %2790 = vmatprep.subr.bf16.mxu0 0
      %2791 = vmatpush2.bf16.msra.mxu0 0
      %2792 = vmatprep.subr.bf16.mxu0 0
      %2793 = vmatpush2.bf16.msra.mxu0 0
      %2794 = vmatprep.subr.bf16.mxu0 0
      %2795 = vmatpush2.bf16.msra.mxu0 0
      %2796 = vmatprep.subr.bf16.mxu0 0
      %2797 = vmatpush2.bf16.msra.mxu0 0
      %2798 = vmatprep.mubr.bf16.mxu0 0
      %2799 = vmatmul.mubr.bf16.gmra.mxu0 %v2765
      %v2800 = vpop.f32.mrf.mxu0
      %v2801 = vadd.f32 0.0, %v2800
      %v2802 = vpop.f32.mrf.mxu0
      %v2803 = vadd.f32 0.0, %v2802
      %v2804 = vpop.f32.mrf.mxu0
      %v2805 = vadd.f32 0.0, %v2804
      %v2806 = vpop.f32.mrf.mxu0
      %v2807 = vadd.f32 0.0, %v2806
      %2808 = vdwg.mxu0
      %2809 = vmatprep.subr.bf16.mxu0 0
      %2810 = vmatpush1.bf16.msra.mxu0 %v2479
      %2811 = vmatprep.subr.bf16.mxu0 0
      %2812 = vmatpush1.bf16.msra.mxu0 %v2476
      %2813 = vmatprep.subr.bf16.mxu0 0
      %2814 = vmatpush1.bf16.msra.mxu0 %v2473
      %2815 = vmatprep.subr.bf16.mxu0 0
      %2816 = vmatpush1.bf16.msra.mxu0 %v2470
      %2817 = vmatprep.subr.bf16.mxu0 0
      %2818 = vmatpush1.bf16.msra.mxu0 %v2467
      %2819 = vmatprep.subr.bf16.mxu0 0
      %2820 = vmatpush1.bf16.msra.mxu0 %v2464
      %2821 = vmatprep.subr.bf16.mxu0 0
      %2822 = vmatpush1.bf16.msra.mxu0 %v2461
      %2823 = vmatprep.subr.bf16.mxu0 0
      %2824 = vmatpush1.bf16.msra.mxu0 %v2458
      %2825 = vmatprep.subr.bf16.mxu0 0
      %2826 = vmatpush2.bf16.msra.mxu0 0
      %2827 = vmatprep.subr.bf16.mxu0 0
      %2828 = vmatpush2.bf16.msra.mxu0 0
      %2829 = vmatprep.subr.bf16.mxu0 0
      %2830 = vmatpush2.bf16.msra.mxu0 0
      %2831 = vmatprep.subr.bf16.mxu0 0
      %2832 = vmatpush2.bf16.msra.mxu0 0
      %2833 = vmatprep.subr.bf16.mxu0 0
      %2834 = vmatpush2.bf16.msra.mxu0 0
      %2835 = vmatprep.subr.bf16.mxu0 0
      %2836 = vmatpush2.bf16.msra.mxu0 0
      %2837 = vmatprep.subr.bf16.mxu0 0
      %2838 = vmatpush2.bf16.msra.mxu0 0
      %2839 = vmatprep.subr.bf16.mxu0 0
      %2840 = vmatpush2.bf16.msra.mxu0 0
      %2841 = vmatprep.mubr.bf16.mxu0 0
      %2842 = vmatmul.mubr.bf16.gmra.mxu0 %v2765
      %v2843 = vpop.f32.mrf.mxu0
      %v2844 = vadd.f32 0.0, %v2843
      %v2845 = vpop.f32.mrf.mxu0
      %v2846 = vpop.f32.mrf.mxu0
      %v2847 = vadd.f32 0.0, %v2846
      %v2848 = vpop.f32.mrf.mxu0
      %2849 = vdwg.mxu0
      %v2850 = vadd.f32 %v2759, %v2801
      %v2851 = vadd.f32 %v2760, %v2803
      %v2852 = vadd.f32 %v2762, %v2805
      %v2853 = vadd.f32 %v2763, %v2807
      %v2854 = vmul.f32 %v2850, 0.5
      %v2855 = vmul.f32 %v2851, 0.5
      %v2856 = vmul.f32 %v2852, 0.5
      %v2857 = vmul.f32 %v2853, 0.5
      %v2858 = vtanh.pop %v2854
      %v2859 = vtanh.pop %v2855
      %v2860 = vtanh.pop %v2856
      %v2861 = vtanh.pop %v2857
      %v2862 = vmul.f32 %v2858, 0.5
      %v2863 = vmul.f32 %v2859, 0.5
      %v2864 = vmul.f32 %v2860, 0.5
      %v2865 = vmul.f32 %v2861, 0.5
      %v2866 = vadd.f32 %v2862, 0.5
      %v2867 = vadd.f32 %v2863, 0.5
      %v2868 = vadd.f32 %v2864, 0.5
      %v2869 = vadd.f32 %v2865, 0.5
      %v2870 = vadd.f32 %v2844, %v2321
      %v2871 = vadd.f32 %v2847, %v2321
      %v2872 = vmul.f32 %v2866, %v2870
      %v2873 = vmul.f32 %v2868, %v2871
      %v2874 = vadd.f32 %v2761, %v2872
      %v2875 = vadd.f32 %v2764, %v2873
      %v2876 = vtanh.pop %v2874
      %v2877 = vtanh.pop %v2875
      %v2878 = vsub.f32 %v2751, %v2876
      %v2879 = vsub.f32 %v2752, %v2877
      %v2880 = vmul.f32 %v2867, %v2878
      %v2881 = vmul.f32 %v2869, %v2879
      %v2882 = vadd.f32 %v2876, %v2880
      %v2883 = vadd.f32 %v2877, %v2881
      %s2884 = sadd.s32 %s2331, 48
      %s2885 = sshra.s32 %s2884, 3
      %s2886 = sand.u32 %s2884, 7
      %s2887 = smul.u32 %s2885, 3
      %s2888 = smul.addr %s2887, 8
      %s2889 = scalar_lea.vmem [#allocation3], %s2888
      %v2890 = vld [vmem:[%s2889] sm:$0xff]
      %v2891 = vld [vmem:[%s2889 + $0x8] sm:$0xff]
      %v2892 = vld [vmem:[%s2889 + $0x10] sm:$0xff]
      %v2893 = vld [vmem:[%s2889 + $0x18] sm:$0xff]
      %v2894 = vld [vmem:[%s2889 + $0x20] sm:$0xff]
      %v2895 = vld [vmem:[%s2889 + $0x28] sm:$0xff]
      %v2896 = vpack.c.bf16 %v2883, %v2882
      %2897 = vmatprep.subr.bf16.mxu0 %v2478
      %2898 = vmatpush1.bf16.msra.mxu0 %v2477
      %2899 = vmatprep.subr.bf16.mxu0 %v2475
      %2900 = vmatpush1.bf16.msra.mxu0 %v2474
      %2901 = vmatprep.subr.bf16.mxu0 %v2472
      %2902 = vmatpush1.bf16.msra.mxu0 %v2471
      %2903 = vmatprep.subr.bf16.mxu0 %v2469
      %2904 = vmatpush1.bf16.msra.mxu0 %v2468
      %2905 = vmatprep.subr.bf16.mxu0 %v2466
      %2906 = vmatpush1.bf16.msra.mxu0 %v2465
      %2907 = vmatprep.subr.bf16.mxu0 %v2463
      %2908 = vmatpush1.bf16.msra.mxu0 %v2462
      %2909 = vmatprep.subr.bf16.mxu0 %v2460
      %2910 = vmatpush1.bf16.msra.mxu0 %v2459
      %2911 = vmatprep.subr.bf16.mxu0 %v2457
      %2912 = vmatpush1.bf16.msra.mxu0 %v2456
      %2913 = vmatprep.subr.bf16.mxu0 0
      %2914 = vmatpush2.bf16.msra.mxu0 0
      %2915 = vmatprep.subr.bf16.mxu0 0
      %2916 = vmatpush2.bf16.msra.mxu0 0
      %2917 = vmatprep.subr.bf16.mxu0 0
      %2918 = vmatpush2.bf16.msra.mxu0 0
      %2919 = vmatprep.subr.bf16.mxu0 0
      %2920 = vmatpush2.bf16.msra.mxu0 0
      %2921 = vmatprep.subr.bf16.mxu0 0
      %2922 = vmatpush2.bf16.msra.mxu0 0
      %2923 = vmatprep.subr.bf16.mxu0 0
      %2924 = vmatpush2.bf16.msra.mxu0 0
      %2925 = vmatprep.subr.bf16.mxu0 0
      %2926 = vmatpush2.bf16.msra.mxu0 0
      %2927 = vmatprep.subr.bf16.mxu0 0
      %2928 = vmatpush2.bf16.msra.mxu0 0
      %2929 = vmatprep.mubr.bf16.mxu0 0
      %2930 = vmatmul.mubr.bf16.gmra.mxu0 %v2896
      %v2931 = vpop.f32.mrf.mxu0
      %v2932 = vadd.f32 0.0, %v2931
      %v2933 = vpop.f32.mrf.mxu0
      %v2934 = vadd.f32 0.0, %v2933
      %v2935 = vpop.f32.mrf.mxu0
      %v2936 = vadd.f32 0.0, %v2935
      %v2937 = vpop.f32.mrf.mxu0
      %v2938 = vadd.f32 0.0, %v2937
      %2939 = vdwg.mxu0
      %2940 = vmatprep.subr.bf16.mxu0 0
      %2941 = vmatpush1.bf16.msra.mxu0 %v2479
      %2942 = vmatprep.subr.bf16.mxu0 0
      %2943 = vmatpush1.bf16.msra.mxu0 %v2476
      %2944 = vmatprep.subr.bf16.mxu0 0
      %2945 = vmatpush1.bf16.msra.mxu0 %v2473
      %2946 = vmatprep.subr.bf16.mxu0 0
      %2947 = vmatpush1.bf16.msra.mxu0 %v2470
      %2948 = vmatprep.subr.bf16.mxu0 0
      %2949 = vmatpush1.bf16.msra.mxu0 %v2467
      %2950 = vmatprep.subr.bf16.mxu0 0
      %2951 = vmatpush1.bf16.msra.mxu0 %v2464
      %2952 = vmatprep.subr.bf16.mxu0 0
      %2953 = vmatpush1.bf16.msra.mxu0 %v2461
      %2954 = vmatprep.subr.bf16.mxu0 0
      %2955 = vmatpush1.bf16.msra.mxu0 %v2458
      %2956 = vmatprep.subr.bf16.mxu0 0
      %2957 = vmatpush2.bf16.msra.mxu0 0
      %2958 = vmatprep.subr.bf16.mxu0 0
      %2959 = vmatpush2.bf16.msra.mxu0 0
      %2960 = vmatprep.subr.bf16.mxu0 0
      %2961 = vmatpush2.bf16.msra.mxu0 0
      %2962 = vmatprep.subr.bf16.mxu0 0
      %2963 = vmatpush2.bf16.msra.mxu0 0
      %2964 = vmatprep.subr.bf16.mxu0 0
      %2965 = vmatpush2.bf16.msra.mxu0 0
      %2966 = vmatprep.subr.bf16.mxu0 0
      %2967 = vmatpush2.bf16.msra.mxu0 0
      %2968 = vmatprep.subr.bf16.mxu0 0
      %2969 = vmatpush2.bf16.msra.mxu0 0
      %2970 = vmatprep.subr.bf16.mxu0 0
      %2971 = vmatpush2.bf16.msra.mxu0 0
      %2972 = vmatprep.mubr.bf16.mxu0 0
      %2973 = vmatmul.mubr.bf16.gmra.mxu0 %v2896
      %v2974 = vpop.f32.mrf.mxu0
      %v2975 = vadd.f32 0.0, %v2974
      %v2976 = vpop.f32.mrf.mxu0
      %v2977 = vpop.f32.mrf.mxu0
      %v2978 = vadd.f32 0.0, %v2977
      %v2979 = vpop.f32.mrf.mxu0
      %2980 = vdwg.mxu0
      %v2981 = vadd.f32 %v2890, %v2932
      %v2982 = vadd.f32 %v2891, %v2934
      %v2983 = vadd.f32 %v2893, %v2936
      %v2984 = vadd.f32 %v2894, %v2938
      %v2985 = vmul.f32 %v2981, 0.5
      %v2986 = vmul.f32 %v2982, 0.5
      %v2987 = vmul.f32 %v2983, 0.5
      %v2988 = vmul.f32 %v2984, 0.5
      %v2989 = vtanh.pop %v2985
      %v2990 = vtanh.pop %v2986
      %v2991 = vtanh.pop %v2987
      %v2992 = vtanh.pop %v2988
      %v2993 = vmul.f32 %v2989, 0.5
      %v2994 = vmul.f32 %v2990, 0.5
      %v2995 = vmul.f32 %v2991, 0.5
      %v2996 = vmul.f32 %v2992, 0.5
      %v2997 = vadd.f32 %v2993, 0.5
      %v2998 = vadd.f32 %v2994, 0.5
      %v2999 = vadd.f32 %v2995, 0.5
      %v3000 = vadd.f32 %v2996, 0.5
      %v3001 = vadd.f32 %v2975, %v2321
      %v3002 = vadd.f32 %v2978, %v2321
      %v3003 = vmul.f32 %v2997, %v3001
      %v3004 = vmul.f32 %v2999, %v3002
      %v3005 = vadd.f32 %v2892, %v3003
      %v3006 = vadd.f32 %v2895, %v3004
      %v3007 = vtanh.pop %v3005
      %v3008 = vtanh.pop %v3006
      %v3009 = vsub.f32 %v2882, %v3007
      %v3010 = vsub.f32 %v2883, %v3008
      %v3011 = vmul.f32 %v2998, %v3009
      %v3012 = vmul.f32 %v3000, %v3010
      %v3013 = vadd.f32 %v3007, %v3011
      %v3014 = vadd.f32 %v3008, %v3012
    $region73: #{rnn_forward.1} parent=1 // loop_footer
      %s2328 = sadd.s32 1, %s2324
    $region74: #{rnn_forward.1} parent=1 // loop_footer_branch
      %2323 = sbr.rel target = $region70
    $region75: #{rnn_forward.1} parent=1 // loop_exit
      _
    %v3015 = vpack.c.bf16 %v2330, %v2329
    %v3016 = vld [vmem:[%s9] sm:$0xf]
    %v3017 = vld [vmem:[%s9 + $0x4] sm:$0xf]
    %v3018 = vld [vmem:[%s9 + $0x8] sm:$0xf]
    %v3019 = vld [vmem:[%s9 + $0xc] sm:$0xf]
    %v3020 = vld [vmem:[%s9 + $0x10] sm:$0xf]
    %v3021 = vld [vmem:[%s9 + $0x14] sm:$0xf]
    %v3022 = vld [vmem:[%s9 + $0x18] sm:$0xf]
    %v3023 = vld [vmem:[%s9 + $0x1c] sm:$0xf]
    %v3024 = vld [vmem:[%s9 + $0x20] sm:$0xf]
    %v3025 = vld [vmem:[%s9 + $0x24] sm:$0xf]
    %v3026 = vld [vmem:[%s9 + $0x28] sm:$0xf]
    %v3027 = vld [vmem:[%s9 + $0x2c] sm:$0xf]
    %v3028 = vld [vmem:[%s9 + $0x30] sm:$0xf]
    %v3029 = vld [vmem:[%s9 + $0x34] sm:$0xf]
    %v3030 = vld [vmem:[%s9 + $0x38] sm:$0xf]
    %v3031 = vld [vmem:[%s9 + $0x3c] sm:$0xf]
    %v3032 = vld [vmem:[%s10] sm:$0x1]
    %v3034 = vlaneseq
    %v3035 = vshrl.u32 %v3034, 7
    %v3036 = vsub.s32 0, %v3035
    %v3037 = vrot.slane %v3032, %v3036
    %v3055 = vunpack.c.l.b16 %v3016
    %v3056 = vunpack.c.l.b16 %v3017
    %v3057 = vunpack.c.l.b16 %v3018
    %v3058 = vunpack.c.l.b16 %v3019
    %v3059 = vunpack.c.l.b16 %v3020
    %v3060 = vunpack.c.l.b16 %v3021
    %v3061 = vunpack.c.l.b16 %v3022
    %v3062 = vunpack.c.l.b16 %v3023
    %v3063 = vunpack.c.l.b16 %v3024
    %v3064 = vunpack.c.l.b16 %v3025
    %v3065 = vunpack.c.l.b16 %v3026
    %v3066 = vunpack.c.l.b16 %v3027
    %v3067 = vunpack.c.l.b16 %v3028
    %v3068 = vunpack.c.l.b16 %v3029
    %v3069 = vunpack.c.l.b16 %v3030
    %v3070 = vunpack.c.l.b16 %v3031
    %v3071 = vpack.c.b16 %v3056, %v3055
    %v3072 = vpack.c.b16 %v3058, %v3057
    %v3073 = vpack.c.b16 %v3060, %v3059
    %v3074 = vpack.c.b16 %v3062, %v3061
    %v3075 = vpack.c.b16 %v3064, %v3063
    %v3076 = vpack.c.b16 %v3066, %v3065
    %v3077 = vpack.c.b16 %v3068, %v3067
    %v3078 = vpack.c.b16 %v3070, %v3069
    %3087 = vmatprep.subr.bf16.mxu0 0
    %3088 = vmatpush1.bf16.msra.mxu0 %v3078
    %3089 = vmatprep.subr.bf16.mxu0 0
    %3090 = vmatpush1.bf16.msra.mxu0 %v3077
    %3091 = vmatprep.subr.bf16.mxu0 0
    %3092 = vmatpush1.bf16.msra.mxu0 %v3076
    %3093 = vmatprep.subr.bf16.mxu0 0
    %3094 = vmatpush1.bf16.msra.mxu0 %v3075
    %3095 = vmatprep.subr.bf16.mxu0 0
    %3096 = vmatpush1.bf16.msra.mxu0 %v3074
    %3097 = vmatprep.subr.bf16.mxu0 0
    %3098 = vmatpush1.bf16.msra.mxu0 %v3073
    %3099 = vmatprep.subr.bf16.mxu0 0
    %3100 = vmatpush1.bf16.msra.mxu0 %v3072
    %3101 = vmatprep.subr.bf16.mxu0 0
    %3102 = vmatpush1.bf16.msra.mxu0 %v3071
    %3103 = vmatprep.subr.bf16.mxu0 0
    %3104 = vmatpush2.bf16.msra.mxu0 0
    %3105 = vmatprep.subr.bf16.mxu0 0
    %3106 = vmatpush2.bf16.msra.mxu0 0
    %3107 = vmatprep.subr.bf16.mxu0 0
    %3108 = vmatpush2.bf16.msra.mxu0 0
    %3109 = vmatprep.subr.bf16.mxu0 0
    %3110 = vmatpush2.bf16.msra.mxu0 0
    %3111 = vmatprep.subr.bf16.mxu0 0
    %3112 = vmatpush2.bf16.msra.mxu0 0
    %3113 = vmatprep.subr.bf16.mxu0 0
    %3114 = vmatpush2.bf16.msra.mxu0 0
    %3115 = vmatprep.subr.bf16.mxu0 0
    %3116 = vmatpush2.bf16.msra.mxu0 0
    %3117 = vmatprep.subr.bf16.mxu0 0
    %3118 = vmatpush2.bf16.msra.mxu0 0
    %3119 = vmatprep.mubr.bf16.mxu0 0
    %3120 = vmatmul.mubr.bf16.gmra.mxu0 %v3015
    %v3121 = vpop.f32.mrf.mxu0
    %v3122 = vadd.f32 %v3037, %v3121
    %v3123 = vpop.f32.mrf.mxu0
    %v3124 = vpop.f32.mrf.mxu0
    %v3125 = vadd.f32 %v3037, %v3124
    %v3126 = vpop.f32.mrf.mxu0
    %3127 = vdwg.mxu0
    %3128 = vst [vmem:[%s11] sm:$0xff] %v3122
    %3129 = vst [vmem:[%s11 + $0x8] sm:$0xff] %v3125
    // Predicated region
    $region76: #{rnn_forward.1} parent=1 // pred_check
      _
    $region77: #{rnn_forward.1} parent=1 // pred_check_branch
      %3131 = sbr.rel (0) target = $region79
    $region78: #{rnn_forward.1} parent=1 // pred_region
      _
    $region79: #{rnn_forward.1} parent=1 // pred_fallthru
      _
    // Predicated region
    $region80: #{rnn_forward.1} parent=1 // pred_check
      _
    $region81: #{rnn_forward.1} parent=1 // pred_check_branch
      %3133 = sbr.rel (0) target = $region83
    $region82: #{rnn_forward.1} parent=1 // pred_region
      _
    $region83: #{rnn_forward.1} parent=1 // pred_fallthru
      _
    %3134 = vsyncpa [#allocation5], 1
    %3135 = vsyncpa [#allocation7], 1
    %3136 = vsyncpa [#allocation10], 1

</llo_original>
